<compile_context>
chip_gen: v5e
topology: v5e:2x2
jax: 0.10.0
libtpu: 0.0.40
codegen_flags: <defaults>
</compile_context>

<pallas_src>
import numpy as np

import jax
import jax.numpy as jnp
from jax import lax
from jax.experimental import pallas as pl
from jax.experimental.pallas import tpu as pltpu

# ---------------- configuration (small, synthetic) ----------------
S = 8                 # (context, target) pairs per instance -> encoder seq len
EMB = 16              # per-BERT pooled embedding size (synthetic; real BERT=768)
E = 2 * EMB           # encoder_dimension = fc_in = 32
NHEAD = 4
HEAD_DIM = E // NHEAD
FFN = 64              # dim_feedforward (scaled down from default 2048)
FC_OUT = 16           # fc_out
FC_PAD = 128          # lane-dense (padded) fc output width
LN_EPS = 1e-5
NEG = -1e9            # additive mask for cross-instance score columns

B_TILE = 16           # instances per grid step
M_TILE = B_TILE * S   # 128 activation rows per grid step (fills MXU M)
LANES = 128

# bf16 packed weight buffer: every block starts at a 16-aligned row.
RW_QKV = 0            # rows 0..31 : lanes 0..95 = Wqkv^T, lanes 96..127 = Wo^T
RW_W1 = 32            # rows 32..63: lanes 0..63  = W1^T
RW_W2 = 64            # rows 64..127: lanes 0..31 = W2^T
RW_WFC = 128          # rows 128..159: lanes 0..127 = Wfc^T (zero-padded)
RW_HM = 160           # rows 160..163: head lane masks (NHEAD, E)
WB_ROWS = 176

# f32 packed bias / LayerNorm buffer: every vector at an 8-aligned row.
RV_BQKV = 0
RV_BO = 8
RV_B1 = 16
RV_B2 = 24
RV_G1 = 32
RV_BE1 = 40
RV_G2 = 48
RV_BE2 = 56
RV_BFC = 64           # (1, FC_PAD), zero-padded
VB_ROWS = 72


def _layer_norm(x, g, b):
    mu = jnp.mean(x, axis=-1, keepdims=True)
    var = jnp.mean(jnp.square(x - mu), axis=-1, keepdims=True)
    return (x - mu) * lax.rsqrt(var + LN_EPS) * g + b


def efr_tx_kernel(x_ref, wb_ref, vb_ref, sb_ref, out_ref):
    f32, bf16 = jnp.float32, jnp.bfloat16

    x = x_ref[...]                                   # (M, E) f32 (kept f32 for residual/LN)
    xb = x.astype(bf16)

    # ---- packed weights (bf16, pre-transposed to (in, out)) ----
    w_top = wb_ref[RW_QKV:RW_QKV + E, :]             # (E, 128) = [Wqkv^T | Wo^T]
    wqkv = w_top[:, 0:3 * E]                         # (E, 3E)
    wo = w_top[:, 3 * E:4 * E]                       # (E, E)
    w1 = wb_ref[RW_W1:RW_W1 + E, 0:FFN]              # (E, FFN)
    w2 = wb_ref[RW_W2:RW_W2 + FFN, 0:E]              # (FFN, E)
    wfc = wb_ref[RW_WFC:RW_WFC + E, :]               # (E, FC_PAD) zero-padded cols
    hm = wb_ref[RW_HM:RW_HM + NHEAD, 0:E]            # (NHEAD, E) 0/1 head lane masks

    # ---- bias / LayerNorm vectors (f32, 8-aligned rows) ----
    bqkv = vb_ref[RV_BQKV:RV_BQKV + 1, 0:3 * E]
    bo = vb_ref[RV_BO:RV_BO + 1, 0:E]
    b1 = vb_ref[RV_B1:RV_B1 + 1, 0:FFN]
    b2 = vb_ref[RV_B2:RV_B2 + 1, 0:E]
    g1 = vb_ref[RV_G1:RV_G1 + 1, 0:E]
    be1 = vb_ref[RV_BE1:RV_BE1 + 1, 0:E]
    g2 = vb_ref[RV_G2:RV_G2 + 1, 0:E]
    be2 = vb_ref[RV_BE2:RV_BE2 + 1, 0:E]
    bfc = vb_ref[RV_BFC:RV_BFC + 1, :]               # (1, FC_PAD)

    # ---- fused QKV projection: one MXU pass ----
    qkv = jnp.dot(xb, wqkv, preferred_element_type=f32) + bqkv    # (M, 3E)
    q = qkv[:, 0:E]
    k = qkv[:, E:2 * E]
    v = qkv[:, 2 * E:3 * E]
    qb = q.astype(bf16)
    kb = k.astype(bf16)
    vb16 = v.astype(bf16)

    # ---- multi-head attention, all B_TILE instances & NHEAD heads at once ----
    # expanded row order r = h*M_TILE + m : head h, activation row m.
    # V is augmented with the head lane mask so ONE matmul produces both the
    # PV numerator and the per-(row, head) softmax denominator.
    k_parts, va_parts = [], []
    for h in range(NHEAD):
        hm_h = hm[h:h + 1, :]                                      # (1, E)
        k_parts.append(kb * hm_h)                                  # head-masked keys
        va_parts.append(jnp.concatenate(
            [vb16 * hm_h, jnp.broadcast_to(hm_h, (M_TILE, E))], axis=1))
    k_exp = jnp.concatenate(k_parts, axis=0)                       # (NHEAD*M, E)
    v_aug = jnp.concatenate(va_parts, axis=0)                      # (NHEAD*M, 2E)

    scale = 1.0 / float(np.sqrt(HEAD_DIM))
    s = lax.dot_general(qb, k_exp, (((1,), (1,)), ((), ())),
                        preferred_element_type=f32) * scale        # (M, NHEAD*M)
    # baked additive mask: -1e9 on cross-instance columns, applied BEFORE the
    # row max so the max is taken over this row's own instance only.
    s = s + sb_ref[...]
    s = s - jnp.max(s, axis=-1, keepdims=True)
    e = jnp.exp(s)                                                 # masked cols -> exactly 0
    r = jnp.dot(e.astype(bf16), v_aug, preferred_element_type=f32)  # (M, 2E)
    num = r[:, 0:E]
    den = jnp.maximum(r[:, E:2 * E], 1e-30)                        # guard (review concern)
    attn = num * pl.reciprocal(den, approx=True)                   # per-(instance, head) softmax @ V

    attn_o = jnp.dot(attn.astype(bf16), wo, preferred_element_type=f32) + bo
    x1 = _layer_norm(x + attn_o, g1, be1)

    hdn = jnp.maximum(jnp.dot(x1.astype(bf16), w1,
                              preferred_element_type=f32) + b1, 0.0)
    hdn = jnp.dot(hdn.astype(bf16), w2, preferred_element_type=f32) + b2
    x2 = _layer_norm(x1 + hdn, g2, be2)

    # ---- final fc, lane-dense (padded to 128 lanes -> unmasked stores) ----
    out_ref[...] = (jnp.dot(x2.astype(bf16), wfc, preferred_element_type=f32)
                    + bfc).astype(out_ref.dtype)


@jax.jit
def efr_tx_forward(ctx_emb, tgt_emb, wb, vb, sbias):
    """ctx_emb, tgt_emb: (B, S, EMB) f32 pooled BERT embeddings."""
    B = ctx_emb.shape[0]
    x = jnp.concatenate([ctx_emb, tgt_emb], axis=-1).reshape(B * S, E)
    n_rows = B * S
    nb = -(-n_rows // M_TILE)                      # grid steps (cdiv)
    pad = nb * M_TILE - n_rows                     # pad whole fake instances
    if pad:
        x = jnp.pad(x, ((0, pad), (0, 0)))

    out = pl.pallas_call(
        efr_tx_kernel,
        out_shape=jax.ShapeDtypeStruct((nb * M_TILE, FC_PAD), jnp.float32),
        grid=(nb,),
        in_specs=[
            pl.BlockSpec((M_TILE, E), lambda i: (i, 0)),             # activations
            pl.BlockSpec((WB_ROWS, LANES), lambda i: (0, 0)),        # bf16 weights (resident)
            pl.BlockSpec((VB_ROWS, LANES), lambda i: (0, 0)),        # f32 biases/LN (resident)
            pl.BlockSpec((M_TILE, NHEAD * M_TILE), lambda i: (0, 0)),  # score bias (resident)
        ],
        out_specs=pl.BlockSpec((M_TILE, FC_PAD), lambda i: (i, 0)),
        compiler_params=pltpu.CompilerParams(
            dimension_semantics=("parallel",)),      # v7x: shard batch tiles over both TCs
    )(x, wb, vb, sbias)

    return out[:n_rows, :FC_OUT].reshape(B, S, FC_OUT)


def init_params(key):
    """PyTorch-convention params: weights are (out_features, in_features)."""
    ks = jax.random.split(key, 8)
    sd = 0.02
    wqkv = jax.random.normal(ks[0], (3 * E, E), jnp.float32) * sd
    bqkv = jnp.zeros((1, 3 * E), jnp.float32)
    wo = jax.random.normal(ks[1], (E, E), jnp.float32) * sd
    bo = jnp.zeros((1, E), jnp.float32)
    g1 = jnp.ones((1, E), jnp.float32)
    be1 = jnp.zeros((1, E), jnp.float32)
    w1 = jax.random.normal(ks[2], (FFN, E), jnp.float32) * sd
    bb1 = jnp.zeros((1, FFN), jnp.float32)
    w2 = jax.random.normal(ks[3], (E, FFN), jnp.float32) * sd
    bb2 = jnp.zeros((1, E), jnp.float32)
    g2 = jnp.ones((1, E), jnp.float32)
    be2 = jnp.zeros((1, E), jnp.float32)
    wfc = jax.random.normal(ks[4], (FC_OUT, E), jnp.float32) * sd
    bfc = jax.random.normal(ks[5], (1, FC_OUT), jnp.float32) * sd
    return (wqkv, bqkv, wo, bo, g1, be1, w1, bb1, w2, bb2, g2, be2, wfc, bfc)


def pack_params(params):
    """One-time host-side packing:
       * bf16 buffer: pre-transposed weights + head lane masks (16-aligned rows)
       * f32 buffer:  biases / LayerNorm vectors (8-aligned rows)
       * f32 score bias: 0 on own-instance columns, -1e9 elsewhere."""
    (wqkv, bqkv, wo, bo, g1, be1, w1, bb1, w2, bb2, g2, be2, wfc, bfc) = params

    wb = np.zeros((WB_ROWS, LANES), np.float32)
    wb[RW_QKV:RW_QKV + E, 0:3 * E] = np.asarray(wqkv).T            # (E, 3E)
    wb[RW_QKV:RW_QKV + E, 3 * E:4 * E] = np.asarray(wo).T          # (E, E)
    wb[RW_W1:RW_W1 + E, 0:FFN] = np.asarray(w1).T
    wb[RW_W2:RW_W2 + FFN, 0:E] = np.asarray(w2).T
    wb[RW_WFC:RW_WFC + E, 0:FC_OUT] = np.asarray(wfc).T            # lanes 16..127 stay 0
    for h in range(NHEAD):
        wb[RW_HM + h, h * HEAD_DIM:(h + 1) * HEAD_DIM] = 1.0

    vb = np.zeros((VB_ROWS, LANES), np.float32)
    vb[RV_BQKV, 0:3 * E] = np.asarray(bqkv).reshape(-1)
    vb[RV_BO, 0:E] = np.asarray(bo).reshape(-1)
    vb[RV_B1, 0:FFN] = np.asarray(bb1).reshape(-1)
    vb[RV_B2, 0:E] = np.asarray(bb2).reshape(-1)
    vb[RV_G1, 0:E] = np.asarray(g1).reshape(-1)
    vb[RV_BE1, 0:E] = np.asarray(be1).reshape(-1)
    vb[RV_G2, 0:E] = np.asarray(g2).reshape(-1)
    vb[RV_BE2, 0:E] = np.asarray(be2).reshape(-1)
    vb[RV_BFC, 0:FC_OUT] = np.asarray(bfc).reshape(-1)             # lanes 16..127 stay 0

    m_inst = (np.arange(M_TILE)[:, None] // S)
    c_inst = (np.arange(NHEAD * M_TILE)[None, :] % M_TILE) // S
    sbias = np.where(c_inst == m_inst, 0.0, NEG).astype(np.float32)

    return (jnp.asarray(wb, jnp.bfloat16), jnp.asarray(vb),
            jnp.asarray(sbias))


def reference_forward(x_all, params):
    """Pure-JAX f32 reference with PyTorch semantics (per-head loop),
    vmapped over independent problem instances. x_all: (B, S, E)."""
    (wqkv, bqkv, wo, bo, g1, be1, w1, bb1, w2, bb2, g2, be2, wfc, bfc) = params

    def one(x):                                     # x: (S, E)
        qkv = x @ wqkv.T + bqkv
        q, k, v = qkv[:, :E], qkv[:, E:2 * E], qkv[:, 2 * E:]
        scale = 1.0 / float(np.sqrt(HEAD_DIM))
        heads = []
        for h in range(NHEAD):
            lo, hi = h * HEAD_DIM, (h + 1) * HEAD_DIM
            s = (q[:, lo:hi] @ k[:, lo:hi].T) * scale
            p = jax.nn.softmax(s, axis=-1)
            heads.append(p @ v[:, lo:hi])
        attn = jnp.concatenate(heads, axis=1) @ wo.T + bo
        x1 = _layer_norm(x + attn, g1, be1)
        h2 = jnp.maximum(x1 @ w1.T + bb1, 0.0) @ w2.T + bb2
        x2 = _layer_norm(x1 + h2, g2, be2)
        return x2 @ wfc.T + bfc

    return jax.vmap(one)(x_all)


if __name__ == "__main__":
    key = jax.random.PRNGKey(0)
    k_ctx, k_tgt, k_par = jax.random.split(key, 3)

    B = 32                                   # instances -> 256 rows -> grid=(2,)
    ctx_emb = jax.random.normal(k_ctx, (B, S, EMB), jnp.float32)
    tgt_emb = jax.random.normal(k_tgt, (B, S, EMB), jnp.float32)
    params = init_params(k_par)
    wb, vb, sbias = pack_params(params)      # one-time transpose + pack

    out = efr_tx_forward(ctx_emb, tgt_emb, wb, vb, sbias)
    out = jax.block_until_ready(out)

    x_all = jnp.concatenate([ctx_emb, tgt_emb], axis=-1)      # (B, S, E)
    ref = reference_forward(x_all, params)

    assert out.shape == (B, S, FC_OUT)
    assert bool(jnp.isfinite(out).all()), "non-finite output"
    err = float(jnp.max(jnp.abs(out - ref)))
    # bf16 MXU operands (per perf guidance) bound per-matmul error to ~0.2%;
    # observed max |err| vs the f32 reference is ~1e-3, tolerance set to 5e-3.
    assert err < 5e-3, err
    print("KERNEL_OK")
</pallas_src>

<mosaic_0001>
module attributes {stable_mosaic.version = 11 : i64} {
  func.func @efr_tx_kernel(%arg0: i32, %arg1: memref<128x32xf32, #tpu.memory_space<vmem>>, %arg2: memref<176x128xbf16, #tpu.memory_space<vmem>>, %arg3: memref<72x128xf32, #tpu.memory_space<vmem>>, %arg4: memref<128x512xf32, #tpu.memory_space<vmem>>, %arg5: memref<128x128xf32, #tpu.memory_space<vmem>>) attributes {dimension_semantics = [#tpu.dimension_semantics<parallel>], iteration_bounds = array<i64: 2>, scalar_prefetch = 0 : i64, scratch_operands = 0 : i64, tpu.core_type = #tpu.core_type<tc>, window_params = [{transform_indices = @transform_0, window_bounds = array<i64: 128, 32>}, {pipeline_mode = #tpu.pipeline_mode<synchronous>, transform_indices = @transform_1, window_bounds = array<i64: 176, 128>}, {pipeline_mode = #tpu.pipeline_mode<synchronous>, transform_indices = @transform_2, window_bounds = array<i64: 72, 128>}, {pipeline_mode = #tpu.pipeline_mode<synchronous>, transform_indices = @transform_3, window_bounds = array<i64: 128, 512>}, {transform_indices = @transform_4, window_bounds = array<i64: 128, 128>}]} {
    %c0 = arith.constant 0 : index
    %c0_0 = arith.constant 0 : index
    %0 = vector.load %arg1[%c0, %c0_0] : memref<128x32xf32, #tpu.memory_space<vmem>>, vector<128x32xf32>
    %1 = arith.truncf %0 : vector<128x32xf32> to vector<128x32xbf16>
    %c0_1 = arith.constant 0 : index
    %c0_2 = arith.constant 0 : index
    %2 = vector.load %arg2[%c0_1, %c0_2] : memref<176x128xbf16, #tpu.memory_space<vmem>>, vector<32x128xbf16>
    %3 = vector.extract_strided_slice %2 {offsets = [0, 0], sizes = [32, 96], strides = [1, 1]} : vector<32x128xbf16> to vector<32x96xbf16>
    %4 = vector.extract_strided_slice %2 {offsets = [0, 96], sizes = [32, 32], strides = [1, 1]} : vector<32x128xbf16> to vector<32x32xbf16>
    %c32 = arith.constant 32 : index
    %c0_3 = arith.constant 0 : index
    %5 = vector.load %arg2[%c32, %c0_3] : memref<176x128xbf16, #tpu.memory_space<vmem>>, vector<32x64xbf16>
    %c64 = arith.constant 64 : index
    %c0_4 = arith.constant 0 : index
    %6 = vector.load %arg2[%c64, %c0_4] : memref<176x128xbf16, #tpu.memory_space<vmem>>, vector<64x32xbf16>
    %c128 = arith.constant 128 : index
    %c0_5 = arith.constant 0 : index
    %7 = vector.load %arg2[%c128, %c0_5] : memref<176x128xbf16, #tpu.memory_space<vmem>>, vector<32x128xbf16>
    %c160 = arith.constant 160 : index
    %c0_6 = arith.constant 0 : index
    %8 = vector.load %arg2[%c160, %c0_6] : memref<176x128xbf16, #tpu.memory_space<vmem>>, vector<4x32xbf16>
    %c0_7 = arith.constant 0 : index
    %c0_8 = arith.constant 0 : index
    %9 = vector.load %arg3[%c0_7, %c0_8] : memref<72x128xf32, #tpu.memory_space<vmem>>, vector<1x96xf32>
    %c8 = arith.constant 8 : index
    %c0_9 = arith.constant 0 : index
    %10 = vector.load %arg3[%c8, %c0_9] : memref<72x128xf32, #tpu.memory_space<vmem>>, vector<1x32xf32>
    %c16 = arith.constant 16 : index
    %c0_10 = arith.constant 0 : index
    %11 = vector.load %arg3[%c16, %c0_10] : memref<72x128xf32, #tpu.memory_space<vmem>>, vector<1x64xf32>
    %c24 = arith.constant 24 : index
    %c0_11 = arith.constant 0 : index
    %12 = vector.load %arg3[%c24, %c0_11] : memref<72x128xf32, #tpu.memory_space<vmem>>, vector<1x32xf32>
    %c32_12 = arith.constant 32 : index
    %c0_13 = arith.constant 0 : index
    %13 = vector.load %arg3[%c32_12, %c0_13] : memref<72x128xf32, #tpu.memory_space<vmem>>, vector<1x32xf32>
    %c40 = arith.constant 40 : index
    %c0_14 = arith.constant 0 : index
    %14 = vector.load %arg3[%c40, %c0_14] : memref<72x128xf32, #tpu.memory_space<vmem>>, vector<1x32xf32>
    %c48 = arith.constant 48 : index
    %c0_15 = arith.constant 0 : index
    %15 = vector.load %arg3[%c48, %c0_15] : memref<72x128xf32, #tpu.memory_space<vmem>>, vector<1x32xf32>
    %c56 = arith.constant 56 : index
    %c0_16 = arith.constant 0 : index
    %16 = vector.load %arg3[%c56, %c0_16] : memref<72x128xf32, #tpu.memory_space<vmem>>, vector<1x32xf32>
    %c64_17 = arith.constant 64 : index
    %c0_18 = arith.constant 0 : index
    %17 = vector.load %arg3[%c64_17, %c0_18] : memref<72x128xf32, #tpu.memory_space<vmem>>, vector<1x128xf32>
    %cst = arith.constant dense<0.000000e+00> : vector<128x96xf32>
    %18 = tpu.matmul %1, %3, %cst {dimension_numbers = #tpu.dot_dimension_numbers<[1], [0], [0], [1], [0, 0, 1, 1], [], []>} : vector<128x32xbf16>, vector<32x96xbf16>, vector<128x96xf32> -> vector<128x96xf32>
    %19 = vector.broadcast %9 : vector<1x96xf32> to vector<128x96xf32>
    %20 = arith.addf %18, %19 : vector<128x96xf32>
    %21 = vector.extract_strided_slice %20 {offsets = [0, 0], sizes = [128, 32], strides = [1, 1]} : vector<128x96xf32> to vector<128x32xf32>
    %22 = vector.extract_strided_slice %20 {offsets = [0, 32], sizes = [128, 32], strides = [1, 1]} : vector<128x96xf32> to vector<128x32xf32>
    %23 = vector.extract_strided_slice %20 {offsets = [0, 64], sizes = [128, 32], strides = [1, 1]} : vector<128x96xf32> to vector<128x32xf32>
    %24 = arith.truncf %21 : vector<128x32xf32> to vector<128x32xbf16>
    %25 = arith.truncf %22 : vector<128x32xf32> to vector<128x32xbf16>
    %26 = arith.truncf %23 : vector<128x32xf32> to vector<128x32xbf16>
    %27 = vector.extract_strided_slice %8 {offsets = [0, 0], sizes = [1, 32], strides = [1, 1]} : vector<4x32xbf16> to vector<1x32xbf16>
    %28 = vector.broadcast %27 : vector<1x32xbf16> to vector<128x32xbf16>
    %29 = arith.mulf %25, %28 : vector<128x32xbf16>
    %30 = vector.broadcast %27 : vector<1x32xbf16> to vector<128x32xbf16>
    %31 = arith.mulf %26, %30 : vector<128x32xbf16>
    %32 = vector.shape_cast %27 : vector<1x32xbf16> to vector<1x32xbf16>
    %33 = vector.broadcast %32 : vector<1x32xbf16> to vector<128x32xbf16>
    %34 = tpu.concatenate %31, %33 in 1 : vector<128x32xbf16>, vector<128x32xbf16> -> vector<128x64xbf16>
    %35 = vector.extract_strided_slice %8 {offsets = [1, 0], sizes = [1, 32], strides = [1, 1]} : vector<4x32xbf16> to vector<1x32xbf16>
    %36 = vector.broadcast %35 : vector<1x32xbf16> to vector<128x32xbf16>
    %37 = arith.mulf %25, %36 : vector<128x32xbf16>
    %38 = vector.broadcast %35 : vector<1x32xbf16> to vector<128x32xbf16>
    %39 = arith.mulf %26, %38 : vector<128x32xbf16>
    %40 = vector.shape_cast %35 : vector<1x32xbf16> to vector<1x32xbf16>
    %41 = vector.broadcast %40 : vector<1x32xbf16> to vector<128x32xbf16>
    %42 = tpu.concatenate %39, %41 in 1 : vector<128x32xbf16>, vector<128x32xbf16> -> vector<128x64xbf16>
    %43 = vector.extract_strided_slice %8 {offsets = [2, 0], sizes = [1, 32], strides = [1, 1]} : vector<4x32xbf16> to vector<1x32xbf16>
    %44 = vector.broadcast %43 : vector<1x32xbf16> to vector<128x32xbf16>
    %45 = arith.mulf %25, %44 : vector<128x32xbf16>
    %46 = vector.broadcast %43 : vector<1x32xbf16> to vector<128x32xbf16>
    %47 = arith.mulf %26, %46 : vector<128x32xbf16>
    %48 = vector.shape_cast %43 : vector<1x32xbf16> to vector<1x32xbf16>
    %49 = vector.broadcast %48 : vector<1x32xbf16> to vector<128x32xbf16>
    %50 = tpu.concatenate %47, %49 in 1 : vector<128x32xbf16>, vector<128x32xbf16> -> vector<128x64xbf16>
    %51 = vector.extract_strided_slice %8 {offsets = [3, 0], sizes = [1, 32], strides = [1, 1]} : vector<4x32xbf16> to vector<1x32xbf16>
    %52 = vector.broadcast %51 : vector<1x32xbf16> to vector<128x32xbf16>
    %53 = arith.mulf %25, %52 : vector<128x32xbf16>
    %54 = vector.broadcast %51 : vector<1x32xbf16> to vector<128x32xbf16>
    %55 = arith.mulf %26, %54 : vector<128x32xbf16>
    %56 = vector.shape_cast %51 : vector<1x32xbf16> to vector<1x32xbf16>
    %57 = vector.broadcast %56 : vector<1x32xbf16> to vector<128x32xbf16>
    %58 = tpu.concatenate %55, %57 in 1 : vector<128x32xbf16>, vector<128x32xbf16> -> vector<128x64xbf16>
    %59 = tpu.concatenate %29, %37, %45, %53 in 0 : vector<128x32xbf16>, vector<128x32xbf16>, vector<128x32xbf16>, vector<128x32xbf16> -> vector<512x32xbf16>
    %60 = tpu.concatenate %34, %42, %50, %58 in 0 : vector<128x64xbf16>, vector<128x64xbf16>, vector<128x64xbf16>, vector<128x64xbf16> -> vector<512x64xbf16>
    %cst_19 = arith.constant dense<0.000000e+00> : vector<128x512xf32>
    %61 = tpu.matmul %24, %59, %cst_19 {dimension_numbers = #tpu.dot_dimension_numbers<[1], [1], [0], [0], [0, 0, 1, 0], [], []>} : vector<128x32xbf16>, vector<512x32xbf16>, vector<128x512xf32> -> vector<128x512xf32>
    %cst_20 = arith.constant 0.353553385 : f32
    %62 = vector.broadcast %cst_20 : f32 to vector<128x512xf32>
    %63 = arith.mulf %61, %62 : vector<128x512xf32>
    %c0_21 = arith.constant 0 : index
    %c0_22 = arith.constant 0 : index
    %64 = vector.load %arg4[%c0_21, %c0_22] : memref<128x512xf32, #tpu.memory_space<vmem>>, vector<128x512xf32>
    %65 = arith.addf %63, %64 : vector<128x512xf32>
    %cst_23 = arith.constant dense<0xFF800000> : vector<128xf32>
    %66 = vector.multi_reduction <maximumf>, %65, %cst_23 [1] : vector<128x512xf32> to vector<128xf32>
    %67 = vector.shape_cast %66 : vector<128xf32> to vector<128x1xf32>
    %68 = vector.broadcast %67 : vector<128x1xf32> to vector<128x512xf32>
    %69 = arith.subf %65, %68 : vector<128x512xf32>
    %70 = math.exp %69 : vector<128x512xf32>
    %71 = arith.truncf %70 : vector<128x512xf32> to vector<128x512xbf16>
    %cst_24 = arith.constant dense<0.000000e+00> : vector<128x64xf32>
    %72 = tpu.matmul %71, %60, %cst_24 {dimension_numbers = #tpu.dot_dimension_numbers<[1], [0], [0], [1], [0, 0, 1, 1], [], []>} : vector<128x512xbf16>, vector<512x64xbf16>, vector<128x64xf32> -> vector<128x64xf32>
    %73 = vector.extract_strided_slice %72 {offsets = [0, 0], sizes = [128, 32], strides = [1, 1]} : vector<128x64xf32> to vector<128x32xf32>
    %74 = vector.extract_strided_slice %72 {offsets = [0, 32], sizes = [128, 32], strides = [1, 1]} : vector<128x64xf32> to vector<128x32xf32>
    %cst_25 = arith.constant 1.000000e-30 : f32
    %75 = vector.broadcast %cst_25 : f32 to vector<128x32xf32>
    %76 = arith.maximumf %74, %75 : vector<128x32xf32>
    %77 = tpu.reciprocal %76 {approx = true} : vector<128x32xf32> -> vector<128x32xf32>
    %78 = arith.mulf %73, %77 : vector<128x32xf32>
    %79 = arith.truncf %78 : vector<128x32xf32> to vector<128x32xbf16>
    %cst_26 = arith.constant dense<0.000000e+00> : vector<128x32xf32>
    %80 = tpu.matmul %79, %4, %cst_26 {dimension_numbers = #tpu.dot_dimension_numbers<[1], [0], [0], [1], [0, 0, 1, 1], [], []>} : vector<128x32xbf16>, vector<32x32xbf16>, vector<128x32xf32> -> vector<128x32xf32>
    %81 = vector.broadcast %10 : vector<1x32xf32> to vector<128x32xf32>
    %82 = arith.addf %80, %81 : vector<128x32xf32>
    %83 = arith.addf %0, %82 : vector<128x32xf32>
    %cst_27 = arith.constant dense<0.000000e+00> : vector<128xf32>
    %84 = vector.multi_reduction <add>, %83, %cst_27 [1] : vector<128x32xf32> to vector<128xf32>
    %85 = vector.shape_cast %84 : vector<128xf32> to vector<128x1xf32>
    %cst_28 = arith.constant 3.200000e+01 : f32
    %86 = vector.broadcast %cst_28 : f32 to vector<128x1xf32>
    %87 = arith.divf %85, %86 : vector<128x1xf32>
    %88 = vector.broadcast %87 : vector<128x1xf32> to vector<128x32xf32>
    %89 = arith.subf %83, %88 : vector<128x32xf32>
    %90 = arith.mulf %89, %89 : vector<128x32xf32>
    %cst_29 = arith.constant dense<0.000000e+00> : vector<128xf32>
    %91 = vector.multi_reduction <add>, %90, %cst_29 [1] : vector<128x32xf32> to vector<128xf32>
    %92 = vector.shape_cast %91 : vector<128xf32> to vector<128x1xf32>
    %cst_30 = arith.constant 3.200000e+01 : f32
    %93 = vector.broadcast %cst_30 : f32 to vector<128x1xf32>
    %94 = arith.divf %92, %93 : vector<128x1xf32>
    %95 = vector.broadcast %87 : vector<128x1xf32> to vector<128x32xf32>
    %96 = arith.subf %83, %95 : vector<128x32xf32>
    %cst_31 = arith.constant 9.99999974E-6 : f32
    %97 = vector.broadcast %cst_31 : f32 to vector<128x1xf32>
    %98 = arith.addf %94, %97 : vector<128x1xf32>
    %99 = math.rsqrt %98 : vector<128x1xf32>
    %100 = vector.broadcast %99 : vector<128x1xf32> to vector<128x32xf32>
    %101 = arith.mulf %96, %100 : vector<128x32xf32>
    %102 = vector.broadcast %13 : vector<1x32xf32> to vector<128x32xf32>
    %103 = arith.mulf %101, %102 : vector<128x32xf32>
    %104 = vector.broadcast %14 : vector<1x32xf32> to vector<128x32xf32>
    %105 = arith.addf %103, %104 : vector<128x32xf32>
    %106 = arith.truncf %105 : vector<128x32xf32> to vector<128x32xbf16>
    %cst_32 = arith.constant dense<0.000000e+00> : vector<128x64xf32>
    %107 = tpu.matmul %106, %5, %cst_32 {dimension_numbers = #tpu.dot_dimension_numbers<[1], [0], [0], [1], [0, 0, 1, 1], [], []>} : vector<128x32xbf16>, vector<32x64xbf16>, vector<128x64xf32> -> vector<128x64xf32>
    %108 = vector.broadcast %11 : vector<1x64xf32> to vector<128x64xf32>
    %109 = arith.addf %107, %108 : vector<128x64xf32>
    %cst_33 = arith.constant 0.000000e+00 : f32
    %110 = vector.broadcast %cst_33 : f32 to vector<128x64xf32>
    %111 = arith.maximumf %109, %110 : vector<128x64xf32>
    %112 = arith.truncf %111 : vector<128x64xf32> to vector<128x64xbf16>
    %cst_34 = arith.constant dense<0.000000e+00> : vector<128x32xf32>
    %113 = tpu.matmul %112, %6, %cst_34 {dimension_numbers = #tpu.dot_dimension_numbers<[1], [0], [0], [1], [0, 0, 1, 1], [], []>} : vector<128x64xbf16>, vector<64x32xbf16>, vector<128x32xf32> -> vector<128x32xf32>
    %114 = vector.broadcast %12 : vector<1x32xf32> to vector<128x32xf32>
    %115 = arith.addf %113, %114 : vector<128x32xf32>
    %116 = arith.addf %105, %115 : vector<128x32xf32>
    %cst_35 = arith.constant dense<0.000000e+00> : vector<128xf32>
    %117 = vector.multi_reduction <add>, %116, %cst_35 [1] : vector<128x32xf32> to vector<128xf32>
    %118 = vector.shape_cast %117 : vector<128xf32> to vector<128x1xf32>
    %cst_36 = arith.constant 3.200000e+01 : f32
    %119 = vector.broadcast %cst_36 : f32 to vector<128x1xf32>
    %120 = arith.divf %118, %119 : vector<128x1xf32>
    %121 = vector.broadcast %120 : vector<128x1xf32> to vector<128x32xf32>
    %122 = arith.subf %116, %121 : vector<128x32xf32>
    %123 = arith.mulf %122, %122 : vector<128x32xf32>
    %cst_37 = arith.constant dense<0.000000e+00> : vector<128xf32>
    %124 = vector.multi_reduction <add>, %123, %cst_37 [1] : vector<128x32xf32> to vector<128xf32>
    %125 = vector.shape_cast %124 : vector<128xf32> to vector<128x1xf32>
    %cst_38 = arith.constant 3.200000e+01 : f32
    %126 = vector.broadcast %cst_38 : f32 to vector<128x1xf32>
    %127 = arith.divf %125, %126 : vector<128x1xf32>
    %128 = vector.broadcast %120 : vector<128x1xf32> to vector<128x32xf32>
    %129 = arith.subf %116, %128 : vector<128x32xf32>
    %cst_39 = arith.constant 9.99999974E-6 : f32
    %130 = vector.broadcast %cst_39 : f32 to vector<128x1xf32>
    %131 = arith.addf %127, %130 : vector<128x1xf32>
    %132 = math.rsqrt %131 : vector<128x1xf32>
    %133 = vector.broadcast %132 : vector<128x1xf32> to vector<128x32xf32>
    %134 = arith.mulf %129, %133 : vector<128x32xf32>
    %135 = vector.broadcast %15 : vector<1x32xf32> to vector<128x32xf32>
    %136 = arith.mulf %134, %135 : vector<128x32xf32>
    %137 = vector.broadcast %16 : vector<1x32xf32> to vector<128x32xf32>
    %138 = arith.addf %136, %137 : vector<128x32xf32>
    %139 = arith.truncf %138 : vector<128x32xf32> to vector<128x32xbf16>
    %cst_40 = arith.constant dense<0.000000e+00> : vector<128x128xf32>
    %140 = tpu.matmul %139, %7, %cst_40 {dimension_numbers = #tpu.dot_dimension_numbers<[1], [0], [0], [1], [0, 0, 1, 1], [], []>} : vector<128x32xbf16>, vector<32x128xbf16>, vector<128x128xf32> -> vector<128x128xf32>
    %141 = vector.broadcast %17 : vector<1x128xf32> to vector<128x128xf32>
    %142 = arith.addf %140, %141 : vector<128x128xf32>
    %c0_41 = arith.constant 0 : index
    %c0_42 = arith.constant 0 : index
    %143 = vector.load %arg5[%c0_41, %c0_42] : memref<128x128xf32, #tpu.memory_space<vmem>>, vector<128x128xf32>
    tpu.vector_store %arg5[%c0_41, %c0_42], %142 {strides = array<i32>} : memref<128x128xf32, #tpu.memory_space<vmem>>, vector<128x128xf32>,
    return
  }
  func.func @transform_0(%arg0: i32) -> (i32, i32) {
    %c0_i32 = arith.constant 0 : i32
    %c0_i32_0 = arith.constant 0 : i32
    return %arg0, %c0_i32 : i32, i32
  }
  func.func @transform_1(%arg0: i32) -> (i32, i32) {
    %c0_i32 = arith.constant 0 : i32
    %c0_i32_0 = arith.constant 0 : i32
    %c0_i32_1 = arith.constant 0 : i32
    return %c0_i32, %c0_i32_0 : i32, i32
  }
  func.func @transform_2(%arg0: i32) -> (i32, i32) {
    %c0_i32 = arith.constant 0 : i32
    %c0_i32_0 = arith.constant 0 : i32
    %c0_i32_1 = arith.constant 0 : i32
    return %c0_i32, %c0_i32_0 : i32, i32
  }
  func.func @transform_3(%arg0: i32) -> (i32, i32) {
    %c0_i32 = arith.constant 0 : i32
    %c0_i32_0 = arith.constant 0 : i32
    %c0_i32_1 = arith.constant 0 : i32
    return %c0_i32, %c0_i32_0 : i32, i32
  }
  func.func @transform_4(%arg0: i32) -> (i32, i32) {
    %c0_i32 = arith.constant 0 : i32
    %c0_i32_0 = arith.constant 0 : i32
    return %arg0, %c0_i32 : i32, i32
  }
}

</mosaic_0001>

<llo_original>
// kernel: efr_tx_forward.1
$region0: #{efr_tx_forward.1}
  #allocation0 [shape = 'u32[]', space=smem, size = 0x4, offset = 0x4, fixed_abs, tag = 'smem constant byte address 0x4 - core index']
  #allocation1 [shape = 'u32[72,128]{1,0:T(1,128)}', space=vmem, size = 0x9000, scoped, tag = 'internal scratch']
  %s0 = inlined_call_operand.vmem [shape: f32[256,32], index: 0, kind: input, shape index: {}]
  %s1 = inlined_call_operand.vmem [shape: bf16[176,128], index: 1, kind: input, shape index: {}]
  %s2 = inlined_call_operand.vmem [shape: f32[72,128], index: 2, kind: input, shape index: {}]
  %s3 = inlined_call_operand.vmem [shape: f32[128,512], index: 3, kind: input, shape index: {}]
  %s4 = inlined_call_operand.vmem [shape: f32[256,128], index: 4, kind: output, shape index: {}]
  %s5 = sld [smem:[#allocation0]]
  $region49: #{efr_tx_forward.1} parent=0
    _
  %s7 = ssub.s32 1, %s5
  %s8 = scalar_select 0, %s7, %s5
  loop: start=0, step=1, limit=4
  $region2: #{efr_tx_forward.1} parent=0 // loop_pre_header
    _
  $region3: #{efr_tx_forward.1} parent=0 // loop_header
    %s10 = sphi 0, %s14
    %p11 = scmp.ge.s32.totalorder %s10, 4
    %s20 = sphi 0, %s22
    %s23 = sphi 0, %s20
    %s24 = sphi 0, %s23
    %s40 = sphi 0, %s24
    %s44 = sphi 0, %s44
    %s46 = sphi 0, %s44
    %s47 = sphi 0, %s46
    %s61 = sphi 0, %s47
    %s65 = sphi 0, %s65
    %s67 = sphi 0, %s65
    %s68 = sphi 0, %s67
    %s82 = sphi 0, %s68
    %s86 = sphi 0, %s86
    %s88 = sphi 0, %s86
    %s89 = sphi 0, %s88
    %s103 = sphi 0, %s89
    %s109 = sphi 0, %s111
    %s112 = sphi 0, %s109
    %s113 = sphi 0, %s112
    %s129 = sphi 0, %s113
  $region4: #{efr_tx_forward.1} parent=0 // loop_header_branch
    %13 = sbr.rel (%p11) target = $region8
  $region5: #{efr_tx_forward.1} parent=0 // loop_body
    %s15 = ssub.s32 %s10, 1
    %s16 = ssub.s32 %s10, 2
    %s17 = sadd.s32 %s10, 1
    %s18 = ssub.s32 %s10, %s17
    %p19 = scmp.eq.s32.totalorder %s18, 0
    %s21 = sadd.s32 %s20, 1
    %s22 = scalar_select %p19, %s20, %s21
    %p25 = pneg %p19
    %p26 = scmp.eq.s32.totalorder %s10, 1
    %p27 = por %p25, %p26
    %p28 = scmp.ne.s32.totalorder %s20, %s23
    %p29 = scmp.eq.s32.totalorder %s10, 0
    %p30 = por %p28, %p29
    %p31 = scmp.ne.s32.totalorder %s20, %s23
    %p32 = scmp.eq.s32.totalorder %s15, 1
    %p33 = por %p31, %p32
    %p34 = scmp.ne.s32.totalorder %s23, %s24
    %p35 = scmp.eq.s32.totalorder %s15, 0
    %p36 = por %p34, %p35
    %p37 = scmp.ne.s32.totalorder %s23, %s24
    %p38 = scmp.eq.s32.totalorder %s16, 1
    %p39 = por %p37, %p38
    %p41 = scmp.ne.s32.totalorder %s24, %s40
    %p42 = scmp.eq.s32.totalorder %s16, 0
    %p43 = por %p41, %p42
    %s45 = sadd.s32 %s44, 1
    %p48 = scmp.eq.s32.totalorder %s10, 1
    %p49 = scmp.ne.s32.totalorder %s44, %s46
    %p50 = scmp.eq.s32.totalorder %s10, 0
    %p51 = por %p49, %p50
    %p52 = scmp.ne.s32.totalorder %s44, %s46
    %p53 = scmp.eq.s32.totalorder %s15, 1
    %p54 = por %p52, %p53
    %p55 = scmp.ne.s32.totalorder %s46, %s47
    %p56 = scmp.eq.s32.totalorder %s15, 0
    %p57 = por %p55, %p56
    %p58 = scmp.ne.s32.totalorder %s46, %s47
    %p59 = scmp.eq.s32.totalorder %s16, 1
    %p60 = por %p58, %p59
    %p62 = scmp.ne.s32.totalorder %s47, %s61
    %p63 = scmp.eq.s32.totalorder %s16, 0
    %p64 = por %p62, %p63
    %s66 = sadd.s32 %s65, 1
    %p69 = scmp.eq.s32.totalorder %s10, 1
    %p70 = scmp.ne.s32.totalorder %s65, %s67
    %p71 = scmp.eq.s32.totalorder %s10, 0
    %p72 = por %p70, %p71
    %p73 = scmp.ne.s32.totalorder %s65, %s67
    %p74 = scmp.eq.s32.totalorder %s15, 1
    %p75 = por %p73, %p74
    %p76 = scmp.ne.s32.totalorder %s67, %s68
    %p77 = scmp.eq.s32.totalorder %s15, 0
    %p78 = por %p76, %p77
    %p79 = scmp.ne.s32.totalorder %s67, %s68
    %p80 = scmp.eq.s32.totalorder %s16, 1
    %p81 = por %p79, %p80
    %p83 = scmp.ne.s32.totalorder %s68, %s82
    %p84 = scmp.eq.s32.totalorder %s16, 0
    %p85 = por %p83, %p84
    %s87 = sadd.s32 %s86, 1
    %p90 = scmp.eq.s32.totalorder %s10, 1
    %p91 = scmp.ne.s32.totalorder %s86, %s88
    %p92 = scmp.eq.s32.totalorder %s10, 0
    %p93 = por %p91, %p92
    %p94 = scmp.ne.s32.totalorder %s86, %s88
    %p95 = scmp.eq.s32.totalorder %s15, 1
    %p96 = por %p94, %p95
    %p97 = scmp.ne.s32.totalorder %s88, %s89
    %p98 = scmp.eq.s32.totalorder %s15, 0
    %p99 = por %p97, %p98
    %p100 = scmp.ne.s32.totalorder %s88, %s89
    %p101 = scmp.eq.s32.totalorder %s16, 1
    %p102 = por %p100, %p101
    %p104 = scmp.ne.s32.totalorder %s89, %s103
    %p105 = scmp.eq.s32.totalorder %s16, 0
    %p106 = por %p104, %p105
    %s107 = ssub.s32 %s10, %s17
    %p108 = scmp.eq.s32.totalorder %s107, 0
    %s110 = sadd.s32 %s109, 1
    %s111 = scalar_select %p108, %s109, %s110
    %p114 = pneg %p108
    %p115 = scmp.eq.s32.totalorder %s10, 1
    %p116 = por %p114, %p115
    %p117 = scmp.ne.s32.totalorder %s109, %s112
    %p118 = scmp.eq.s32.totalorder %s10, 0
    %p119 = por %p117, %p118
    %p120 = scmp.ne.s32.totalorder %s109, %s112
    %p121 = scmp.eq.s32.totalorder %s15, 1
    %p122 = por %p120, %p121
    %p123 = scmp.ne.s32.totalorder %s112, %s113
    %p124 = scmp.eq.s32.totalorder %s15, 0
    %p125 = por %p123, %p124
    %p126 = scmp.ne.s32.totalorder %s112, %s113
    %p127 = scmp.eq.s32.totalorder %s16, 1
    %p128 = por %p126, %p127
    %p130 = scmp.ne.s32.totalorder %s113, %s129
    %p131 = scmp.eq.s32.totalorder %s16, 0
    %p132 = por %p130, %p131
    %p133 = scmp.le.s32.totalorder 1, %s10
    %p134 = scmp.lt.s32.totalorder %s10, 3
    %p135 = pnand %p133, %p134
    %p136 = pneg %p135
    // Predicated region
    $region9: #{efr_tx_forward.1} parent=5 // pred_check
      _
    $region10: #{efr_tx_forward.1} parent=5 // pred_check_branch
      %138 = sbr.rel (%p135) target = $region12
    $region11: #{efr_tx_forward.1} parent=5 // pred_region
      %s139 = ssub.s32 %s10, 1
      // Predicated region
      $region13: #{efr_tx_forward.1} parent=11 // pred_check
        %p140 = pneg %p57
      $region14: #{efr_tx_forward.1} parent=11 // pred_check_branch
        %142 = sbr.rel (%p140) target = $region16
      $region15: #{efr_tx_forward.1} parent=11 // pred_region
        _
      $region16: #{efr_tx_forward.1} parent=11 // pred_fallthru
        _
      // Predicated region
      $region17: #{efr_tx_forward.1} parent=11 // pred_check
        %p143 = pneg %p78
      $region18: #{efr_tx_forward.1} parent=11 // pred_check_branch
        %145 = sbr.rel (%p143) target = $region20
      $region19: #{efr_tx_forward.1} parent=11 // pred_region
        _
      $region20: #{efr_tx_forward.1} parent=11 // pred_fallthru
        _
      // Predicated region
      $region21: #{efr_tx_forward.1} parent=11 // pred_check
        %p146 = pneg %p99
      $region22: #{efr_tx_forward.1} parent=11 // pred_check_branch
        %148 = sbr.rel (%p146) target = $region24
      $region23: #{efr_tx_forward.1} parent=11 // pred_region
        _
      $region24: #{efr_tx_forward.1} parent=11 // pred_fallthru
        _
    $region12: #{efr_tx_forward.1} parent=5 // pred_fallthru
      _
    %p149 = scmp.lt.s32.totalorder %s10, 2
    // Predicated region
    $region25: #{efr_tx_forward.1} parent=5 // pred_check
      %p150 = pneg %p149
    $region26: #{efr_tx_forward.1} parent=5 // pred_check_branch
      %152 = sbr.rel (%p150) target = $region28
    $region27: #{efr_tx_forward.1} parent=5 // pred_region
      // Predicated region
      $region29: #{efr_tx_forward.1} parent=27 // pred_check
        %p153 = pneg %p30
      $region30: #{efr_tx_forward.1} parent=27 // pred_check_branch
        %155 = sbr.rel (%p153) target = $region32
      $region31: #{efr_tx_forward.1} parent=27 // pred_region
        %s156 = smul.u32 16, %s10
        %p157 = scmp.lt.s32.totalorder %s156, 31
        %s158 = scalar_select %p157, %s156, 31
        %s159 = smul.addr %s158, 8
        %s160 = scalar_lea.vmem %s0, %s159
        %s161 = smul.u32 16, %s10
      $region32: #{efr_tx_forward.1} parent=27 // pred_fallthru
        _
    $region28: #{efr_tx_forward.1} parent=5 // pred_fallthru
      _
    %p162 = scmp.le.s32.totalorder 1, %s10
    %p163 = scmp.lt.s32.totalorder %s10, 3
    %p164 = pnand %p162, %p163
    %p165 = pneg %p164
    // Predicated region
    $region33: #{efr_tx_forward.1} parent=5 // pred_check
      _
    $region34: #{efr_tx_forward.1} parent=5 // pred_check_branch
      %167 = sbr.rel (%p164) target = $region36
    $region35: #{efr_tx_forward.1} parent=5 // pred_region
      %s168 = ssub.s32 %s10, 1
      %s169 = smul.u32 16, %s15
      %p170 = scmp.lt.s32.totalorder %s169, 31
      %s171 = scalar_select %p170, %s169, 31
      %s172 = smul.addr %s171, 8
      %s173 = scalar_lea.vmem %s0, %s172
      %p174 = pneg %p36
      %p175 = pneg %p33
      %p176 = pneg %p57
      %p177 = pneg %p54
      %p178 = pneg %p78
      %p179 = pneg %p75
      %p180 = pneg %p99
      %p181 = pneg %p96
      %p182 = pneg %p125
      %p183 = pneg %p122
      %s184 = smul.u32 16, %s15
      %p185 = scmp.lt.s32.totalorder %s184, 31
      %s186 = scalar_select %p185, %s184, 31
      %s187 = smul.addr %s186, 8
      %s188 = scalar_lea.vmem %s4, %s187
      %s189 = smul.u32 16, %s15
      %p190 = scmp.lt.s32.totalorder %s189, 31
      %s191 = scalar_select %p190, %s189, 31
      %s192 = smul.addr %s191, 8
      %s193 = scalar_lea.vmem %s0, %s192
      %s194 = smul.u32 16, %s15
      %s195 = smul.u32 16, %s15
      %p196 = scmp.lt.s32.totalorder %s195, 31
      %s197 = scalar_select %p196, %s195, 31
      %s198 = smul.addr %s197, 8
      %s199 = scalar_lea.vmem %s4, %s198
      %s200 = smul.u32 16, %s15
      %v202 = vld [vmem:[%s193] sm:$0xff]
      %v203 = vld [vmem:[%s193 + $0x8] sm:$0xff]
      %v204 = vld [vmem:[%s193 + $0x10] sm:$0xff]
      %v205 = vld [vmem:[%s193 + $0x18] sm:$0xff]
      %v206 = vld [vmem:[%s193 + $0x20] sm:$0xff]
      %v207 = vld [vmem:[%s193 + $0x28] sm:$0xff]
      %v208 = vld [vmem:[%s193 + $0x30] sm:$0xff]
      %v209 = vld [vmem:[%s193 + $0x38] sm:$0xff]
      %v210 = vld [vmem:[%s193 + $0x40] sm:$0xff]
      %v211 = vld [vmem:[%s193 + $0x48] sm:$0xff]
      %v212 = vld [vmem:[%s193 + $0x50] sm:$0xff]
      %v213 = vld [vmem:[%s193 + $0x58] sm:$0xff]
      %v214 = vld [vmem:[%s193 + $0x60] sm:$0xff]
      %v215 = vld [vmem:[%s193 + $0x68] sm:$0xff]
      %v216 = vld [vmem:[%s193 + $0x70] sm:$0xff]
      %v217 = vld [vmem:[%s193 + $0x78] sm:$0xff]
      %v218 = vpack.c.bf16 %v203, %v202
      %v219 = vpack.c.bf16 %v205, %v204
      %v220 = vpack.c.bf16 %v207, %v206
      %v221 = vpack.c.bf16 %v209, %v208
      %v222 = vpack.c.bf16 %v211, %v210
      %v223 = vpack.c.bf16 %v213, %v212
      %v224 = vpack.c.bf16 %v215, %v214
      %v225 = vpack.c.bf16 %v217, %v216
      %v226 = vld [vmem:[%s1] sm:$0xf]
      %v227 = vld [vmem:[%s1 + $0x4] sm:$0xf]
      %v228 = vld [vmem:[%s1 + $0x8] sm:$0xf]
      %v229 = vld [vmem:[%s1 + $0xc] sm:$0xf]
      %v230 = vld [vmem:[%s1 + $0x10] sm:$0xf]
      %v231 = vld [vmem:[%s1 + $0x14] sm:$0xf]
      %v232 = vld [vmem:[%s1 + $0x18] sm:$0xf]
      %v233 = vld [vmem:[%s1 + $0x1c] sm:$0xf]
      %v234 = vld [vmem:[%s1 + $0x20] sm:$0xf]
      %v235 = vld [vmem:[%s1 + $0x24] sm:$0xf]
      %v236 = vld [vmem:[%s1 + $0x28] sm:$0xf]
      %v237 = vld [vmem:[%s1 + $0x2c] sm:$0xf]
      %v238 = vld [vmem:[%s1 + $0x30] sm:$0xf]
      %v239 = vld [vmem:[%s1 + $0x34] sm:$0xf]
      %v240 = vld [vmem:[%s1 + $0x38] sm:$0xf]
      %v241 = vld [vmem:[%s1 + $0x3c] sm:$0xf]
      %v242 = vld [vmem:[%s1 + $0x40] sm:$0xf]
      %v243 = vld [vmem:[%s1 + $0x44] sm:$0xf]
      %v244 = vld [vmem:[%s1 + $0x48] sm:$0xf]
      %v245 = vld [vmem:[%s1 + $0x4c] sm:$0xf]
      %v246 = vld [vmem:[%s1 + $0x50] sm:$0x3]
      %v247 = vld [vmem:[%s2] sm:$0x1]
      %v248 = vld [vmem:[%s2 + $0x8] sm:$0x1]
      %v249 = vld [vmem:[%s2 + $0x10] sm:$0x1]
      %v250 = vld [vmem:[%s2 + $0x18] sm:$0x1]
      %v251 = vld [vmem:[%s2 + $0x20] sm:$0x1]
      %v252 = vld [vmem:[%s2 + $0x28] sm:$0x1]
      %v253 = vld [vmem:[%s2 + $0x30] sm:$0x1]
      %v254 = vld [vmem:[%s2 + $0x38] sm:$0x1]
      %v255 = vld [vmem:[%s2 + $0x40] sm:$0x1]
      %v256 = vperm.slane %v247, 0
      %v261 = vunpack.c.l.b16 %v226
      %v262 = vunpack.c.l.b16 %v227
      %v263 = vunpack.c.l.b16 %v228
      %v264 = vunpack.c.l.b16 %v229
      %v265 = vpack.c.b16 %v262, %v261
      %v266 = vpack.c.b16 %v264, %v263
      %vm269 = vcmask 261120
      %v271 = vsel %vm269, %v218, 0
      %v274 = vsel %vm269, %v219, 0
      %v277 = vsel %vm269, %v220, 0
      %v280 = vsel %vm269, %v221, 0
      %v283 = vsel %vm269, %v222, 0
      %v286 = vsel %vm269, %v223, 0
      %v289 = vsel %vm269, %v224, 0
      %v292 = vsel %vm269, %v225, 0
      %294 = vmatpush.bf16.msra.mxu0 0
      %295 = vmatpush.bf16.msra.mxu0 0
      %296 = vmatpush.bf16.msra.mxu0 0
      %297 = vmatpush.bf16.msra.mxu0 0
      %298 = vmatpush.bf16.msra.mxu0 0
      %299 = vmatpush.bf16.msra.mxu0 0
      %300 = vmatpush.bf16.msra.mxu0 %v266
      %301 = vmatpush.bf16.msra.mxu0 %v265
      %302 = vmatmul.bf16.gmra.mxu0 %v271
      %v303 = vpop.f32.mrf.mxu0
      %v304 = vadd.f32 %v256, %v303
      %v305 = vpop.f32.mrf.mxu0
      %v306 = vadd.f32 %v256, %v305
      %307 = vmatmul.bf16.gmra.mxu0 %v274
      %v308 = vpop.f32.mrf.mxu0
      %v309 = vadd.f32 %v256, %v308
      %v310 = vpop.f32.mrf.mxu0
      %v311 = vadd.f32 %v256, %v310
      %312 = vmatmul.bf16.gmra.mxu0 %v277
      %v313 = vpop.f32.mrf.mxu0
      %v314 = vadd.f32 %v256, %v313
      %v315 = vpop.f32.mrf.mxu0
      %v316 = vadd.f32 %v256, %v315
      %317 = vmatmul.bf16.gmra.mxu0 %v280
      %v318 = vpop.f32.mrf.mxu0
      %v319 = vadd.f32 %v256, %v318
      %v320 = vpop.f32.mrf.mxu0
      %v321 = vadd.f32 %v256, %v320
      %322 = vmatmul.bf16.gmra.mxu0 %v283
      %v323 = vpop.f32.mrf.mxu0
      %v324 = vadd.f32 %v256, %v323
      %v325 = vpop.f32.mrf.mxu0
      %v326 = vadd.f32 %v256, %v325
      %327 = vmatmul.bf16.gmra.mxu0 %v286
      %v328 = vpop.f32.mrf.mxu0
      %v329 = vadd.f32 %v256, %v328
      %v330 = vpop.f32.mrf.mxu0
      %v331 = vadd.f32 %v256, %v330
      %332 = vmatmul.bf16.gmra.mxu0 %v289
      %v333 = vpop.f32.mrf.mxu0
      %v334 = vadd.f32 %v256, %v333
      %v335 = vpop.f32.mrf.mxu0
      %v336 = vadd.f32 %v256, %v335
      %337 = vmatmul.bf16.gmra.mxu0 %v292
      %v338 = vpop.f32.mrf.mxu0
      %v339 = vadd.f32 %v256, %v338
      %v340 = vpop.f32.mrf.mxu0
      %v341 = vadd.f32 %v256, %v340
      %342 = vdwg.mxu0
      %v343 = vpack.c.bf16 %v306, %v304
      %v344 = vpack.c.bf16 %v311, %v309
      %v345 = vpack.c.bf16 %v316, %v314
      %v346 = vpack.c.bf16 %v321, %v319
      %v347 = vpack.c.bf16 %v326, %v324
      %v348 = vpack.c.bf16 %v331, %v329
      %v349 = vpack.c.bf16 %v336, %v334
      %v350 = vpack.c.bf16 %v341, %v339
      %v351 = vpack.c.bf16 %v304, %v304
      %v352 = vpack.c.bf16 %v306, %v306
      %v353 = vpack.c.bf16 %v309, %v309
      %v354 = vpack.c.bf16 %v311, %v311
      %v355 = vpack.c.bf16 %v314, %v314
      %v356 = vpack.c.bf16 %v316, %v316
      %v357 = vpack.c.bf16 %v319, %v319
      %v358 = vpack.c.bf16 %v321, %v321
      %v359 = vpack.c.bf16 %v324, %v324
      %v360 = vpack.c.bf16 %v326, %v326
      %v361 = vpack.c.bf16 %v329, %v329
      %v362 = vpack.c.bf16 %v331, %v331
      %v363 = vpack.c.bf16 %v334, %v334
      %v364 = vpack.c.bf16 %v336, %v336
      %v365 = vpack.c.bf16 %v339, %v339
      %v366 = vpack.c.bf16 %v341, %v341
      %v368 = vpack.i.b16 %v246, %v246
      %v370 = vperm.slane %v368, 0
      %v371 = vunpack.c.l.bf16 %v351
      %v372 = vunpack.c.l.bf16 %v352
      %v373 = vunpack.c.l.bf16 %v353
      %v374 = vunpack.c.l.bf16 %v354
      %v375 = vunpack.c.l.bf16 %v355
      %v376 = vunpack.c.l.bf16 %v356
      %v377 = vunpack.c.l.bf16 %v357
      %v378 = vunpack.c.l.bf16 %v358
      %v379 = vunpack.c.l.bf16 %v359
      %v380 = vunpack.c.l.bf16 %v360
      %v381 = vunpack.c.l.bf16 %v361
      %v382 = vunpack.c.l.bf16 %v362
      %v383 = vunpack.c.l.bf16 %v363
      %v384 = vunpack.c.l.bf16 %v364
      %v385 = vunpack.c.l.bf16 %v365
      %v386 = vunpack.c.l.bf16 %v366
      %v387 = vunpack.c.l.bf16 %v370
      %389 = vrot.lane.b32.xlu0 %v387, 32
      %v390 = vpop.permute.xlu0 %389
      %v392 = vmul.f32 %v371, %v390
      %v393 = vmul.f32 %v372, %v390
      %v394 = vmul.f32 %v373, %v390
      %v395 = vmul.f32 %v374, %v390
      %v396 = vmul.f32 %v375, %v390
      %v397 = vmul.f32 %v376, %v390
      %v398 = vmul.f32 %v377, %v390
      %v399 = vmul.f32 %v378, %v390
      %v400 = vmul.f32 %v379, %v390
      %v401 = vmul.f32 %v380, %v390
      %v402 = vmul.f32 %v381, %v390
      %v403 = vmul.f32 %v382, %v390
      %v404 = vmul.f32 %v383, %v390
      %v405 = vmul.f32 %v384, %v390
      %v406 = vmul.f32 %v385, %v390
      %v407 = vmul.f32 %v386, %v390
      %v408 = vpack.c.bf16 %v392, %v392
      %v409 = vpack.c.bf16 %v393, %v393
      %v410 = vpack.c.bf16 %v394, %v394
      %v411 = vpack.c.bf16 %v395, %v395
      %v412 = vpack.c.bf16 %v396, %v396
      %v413 = vpack.c.bf16 %v397, %v397
      %v414 = vpack.c.bf16 %v398, %v398
      %v415 = vpack.c.bf16 %v399, %v399
      %v416 = vpack.c.bf16 %v400, %v400
      %v417 = vpack.c.bf16 %v401, %v401
      %v418 = vpack.c.bf16 %v402, %v402
      %v419 = vpack.c.bf16 %v403, %v403
      %v420 = vpack.c.bf16 %v404, %v404
      %v421 = vpack.c.bf16 %v405, %v405
      %v422 = vpack.c.bf16 %v406, %v406
      %v423 = vpack.c.bf16 %v407, %v407
      %424 = vrot.lane.b32.xlu0 %v387, 64
      %v425 = vpop.permute.xlu0 %424
      %v427 = vmul.f32 %v371, %v425
      %v428 = vmul.f32 %v372, %v425
      %v429 = vmul.f32 %v373, %v425
      %v430 = vmul.f32 %v374, %v425
      %v431 = vmul.f32 %v375, %v425
      %v432 = vmul.f32 %v376, %v425
      %v433 = vmul.f32 %v377, %v425
      %v434 = vmul.f32 %v378, %v425
      %v435 = vmul.f32 %v379, %v425
      %v436 = vmul.f32 %v380, %v425
      %v437 = vmul.f32 %v381, %v425
      %v438 = vmul.f32 %v382, %v425
      %v439 = vmul.f32 %v383, %v425
      %v440 = vmul.f32 %v384, %v425
      %v441 = vmul.f32 %v385, %v425
      %v442 = vmul.f32 %v386, %v425
      %v443 = vpack.c.bf16 %v427, %v427
      %v444 = vpack.c.bf16 %v428, %v428
      %v445 = vpack.c.bf16 %v429, %v429
      %v446 = vpack.c.bf16 %v430, %v430
      %v447 = vpack.c.bf16 %v431, %v431
      %v448 = vpack.c.bf16 %v432, %v432
      %v449 = vpack.c.bf16 %v433, %v433
      %v450 = vpack.c.bf16 %v434, %v434
      %v451 = vpack.c.bf16 %v435, %v435
      %v452 = vpack.c.bf16 %v436, %v436
      %v453 = vpack.c.bf16 %v437, %v437
      %v454 = vpack.c.bf16 %v438, %v438
      %v455 = vpack.c.bf16 %v439, %v439
      %v456 = vpack.c.bf16 %v440, %v440
      %v457 = vpack.c.bf16 %v441, %v441
      %v458 = vpack.c.bf16 %v442, %v442
      %v475 = vunpack.c.l.b16 %v443
      %v476 = vunpack.c.l.b16 %v444
      %v477 = vunpack.c.l.b16 %v445
      %v478 = vunpack.c.l.b16 %v446
      %v479 = vunpack.c.l.b16 %v447
      %v480 = vunpack.c.l.b16 %v448
      %v481 = vunpack.c.l.b16 %v449
      %v482 = vunpack.c.l.b16 %v450
      %v483 = vunpack.c.l.b16 %v451
      %v484 = vunpack.c.l.b16 %v452
      %v485 = vunpack.c.l.b16 %v453
      %v486 = vunpack.c.l.b16 %v454
      %v487 = vunpack.c.l.b16 %v455
      %v488 = vunpack.c.l.b16 %v456
      %v489 = vunpack.c.l.b16 %v457
      %v490 = vunpack.c.l.b16 %v458
      %v491 = vpack.c.b16 %v476, %v475
      %v492 = vpack.c.b16 %v478, %v477
      %v493 = vpack.c.b16 %v480, %v479
      %v494 = vpack.c.b16 %v482, %v481
      %v495 = vpack.c.b16 %v484, %v483
      %v496 = vpack.c.b16 %v486, %v485
      %v497 = vpack.c.b16 %v488, %v487
      %v498 = vpack.c.b16 %v490, %v489
      %499 = vrot.lane.b32.xlu0 %v491, 64
      %v500 = vpop.permute.xlu0 %499
      %501 = vrot.lane.b32.xlu0 %v492, 64
      %v502 = vpop.permute.xlu0 %501
      %503 = vrot.lane.b32.xlu0 %v493, 64
      %v504 = vpop.permute.xlu0 %503
      %505 = vrot.lane.b32.xlu0 %v494, 64
      %v506 = vpop.permute.xlu0 %505
      %507 = vrot.lane.b32.xlu0 %v495, 64
      %v508 = vpop.permute.xlu0 %507
      %509 = vrot.lane.b32.xlu0 %v496, 64
      %v510 = vpop.permute.xlu0 %509
      %511 = vrot.lane.b32.xlu0 %v497, 64
      %v512 = vpop.permute.xlu0 %511
      %513 = vrot.lane.b32.xlu0 %v498, 64
      %v514 = vpop.permute.xlu0 %513
      %516 = vrot.lane.b32.xlu0 %v370, 32
      %v517 = vpop.permute.xlu0 %516
      %v520 = vsel %vm269, %v500, %v517
      %v523 = vsel %vm269, %v502, %v517
      %v526 = vsel %vm269, %v504, %v517
      %v529 = vsel %vm269, %v506, %v517
      %v532 = vsel %vm269, %v508, %v517
      %v535 = vsel %vm269, %v510, %v517
      %v538 = vsel %vm269, %v512, %v517
      %v541 = vsel %vm269, %v514, %v517
      %v543 = vshrl.u32 %v246, 16
      %v544 = vpack.i.b16 %v543, %v543
      %v546 = vperm.slane %v544, 0
      %v547 = vunpack.c.l.bf16 %v546
      %549 = vrot.lane.b32.xlu0 %v547, 32
      %v550 = vpop.permute.xlu0 %549
      %v552 = vmul.f32 %v371, %v550
      %v553 = vmul.f32 %v372, %v550
      %v554 = vmul.f32 %v373, %v550
      %v555 = vmul.f32 %v374, %v550
      %v556 = vmul.f32 %v375, %v550
      %v557 = vmul.f32 %v376, %v550
      %v558 = vmul.f32 %v377, %v550
      %v559 = vmul.f32 %v378, %v550
      %v560 = vmul.f32 %v379, %v550
      %v561 = vmul.f32 %v380, %v550
      %v562 = vmul.f32 %v381, %v550
      %v563 = vmul.f32 %v382, %v550
      %v564 = vmul.f32 %v383, %v550
      %v565 = vmul.f32 %v384, %v550
      %v566 = vmul.f32 %v385, %v550
      %v567 = vmul.f32 %v386, %v550
      %v568 = vpack.c.bf16 %v552, %v552
      %v569 = vpack.c.bf16 %v553, %v553
      %v570 = vpack.c.bf16 %v554, %v554
      %v571 = vpack.c.bf16 %v555, %v555
      %v572 = vpack.c.bf16 %v556, %v556
      %v573 = vpack.c.bf16 %v557, %v557
      %v574 = vpack.c.bf16 %v558, %v558
      %v575 = vpack.c.bf16 %v559, %v559
      %v576 = vpack.c.bf16 %v560, %v560
      %v577 = vpack.c.bf16 %v561, %v561
      %v578 = vpack.c.bf16 %v562, %v562
      %v579 = vpack.c.bf16 %v563, %v563
      %v580 = vpack.c.bf16 %v564, %v564
      %v581 = vpack.c.bf16 %v565, %v565
      %v582 = vpack.c.bf16 %v566, %v566
      %v583 = vpack.c.bf16 %v567, %v567
      %584 = vrot.lane.b32.xlu0 %v547, 64
      %v585 = vpop.permute.xlu0 %584
      %v587 = vmul.f32 %v371, %v585
      %v588 = vmul.f32 %v372, %v585
      %v589 = vmul.f32 %v373, %v585
      %v590 = vmul.f32 %v374, %v585
      %v591 = vmul.f32 %v375, %v585
      %v592 = vmul.f32 %v376, %v585
      %v593 = vmul.f32 %v377, %v585
      %v594 = vmul.f32 %v378, %v585
      %v595 = vmul.f32 %v379, %v585
      %v596 = vmul.f32 %v380, %v585
      %v597 = vmul.f32 %v381, %v585
      %v598 = vmul.f32 %v382, %v585
      %v599 = vmul.f32 %v383, %v585
      %v600 = vmul.f32 %v384, %v585
      %v601 = vmul.f32 %v385, %v585
      %v602 = vmul.f32 %v386, %v585
      %v603 = vpack.c.bf16 %v587, %v587
      %v604 = vpack.c.bf16 %v588, %v588
      %v605 = vpack.c.bf16 %v589, %v589
      %v606 = vpack.c.bf16 %v590, %v590
      %v607 = vpack.c.bf16 %v591, %v591
      %v608 = vpack.c.bf16 %v592, %v592
      %v609 = vpack.c.bf16 %v593, %v593
      %v610 = vpack.c.bf16 %v594, %v594
      %v611 = vpack.c.bf16 %v595, %v595
      %v612 = vpack.c.bf16 %v596, %v596
      %v613 = vpack.c.bf16 %v597, %v597
      %v614 = vpack.c.bf16 %v598, %v598
      %v615 = vpack.c.bf16 %v599, %v599
      %v616 = vpack.c.bf16 %v600, %v600
      %v617 = vpack.c.bf16 %v601, %v601
      %v618 = vpack.c.bf16 %v602, %v602
      %v635 = vunpack.c.l.b16 %v603
      %v636 = vunpack.c.l.b16 %v604
      %v637 = vunpack.c.l.b16 %v605
      %v638 = vunpack.c.l.b16 %v606
      %v639 = vunpack.c.l.b16 %v607
      %v640 = vunpack.c.l.b16 %v608
      %v641 = vunpack.c.l.b16 %v609
      %v642 = vunpack.c.l.b16 %v610
      %v643 = vunpack.c.l.b16 %v611
      %v644 = vunpack.c.l.b16 %v612
      %v645 = vunpack.c.l.b16 %v613
      %v646 = vunpack.c.l.b16 %v614
      %v647 = vunpack.c.l.b16 %v615
      %v648 = vunpack.c.l.b16 %v616
      %v649 = vunpack.c.l.b16 %v617
      %v650 = vunpack.c.l.b16 %v618
      %v651 = vpack.c.b16 %v636, %v635
      %v652 = vpack.c.b16 %v638, %v637
      %v653 = vpack.c.b16 %v640, %v639
      %v654 = vpack.c.b16 %v642, %v641
      %v655 = vpack.c.b16 %v644, %v643
      %v656 = vpack.c.b16 %v646, %v645
      %v657 = vpack.c.b16 %v648, %v647
      %v658 = vpack.c.b16 %v650, %v649
      %659 = vrot.lane.b32.xlu0 %v651, 64
      %v660 = vpop.permute.xlu0 %659
      %661 = vrot.lane.b32.xlu0 %v652, 64
      %v662 = vpop.permute.xlu0 %661
      %663 = vrot.lane.b32.xlu0 %v653, 64
      %v664 = vpop.permute.xlu0 %663
      %665 = vrot.lane.b32.xlu0 %v654, 64
      %v666 = vpop.permute.xlu0 %665
      %667 = vrot.lane.b32.xlu0 %v655, 64
      %v668 = vpop.permute.xlu0 %667
      %669 = vrot.lane.b32.xlu0 %v656, 64
      %v670 = vpop.permute.xlu0 %669
      %671 = vrot.lane.b32.xlu0 %v657, 64
      %v672 = vpop.permute.xlu0 %671
      %673 = vrot.lane.b32.xlu0 %v658, 64
      %v674 = vpop.permute.xlu0 %673
      %676 = vrot.lane.b32.xlu0 %v546, 32
      %v677 = vpop.permute.xlu0 %676
      %v680 = vsel %vm269, %v660, %v677
      %v683 = vsel %vm269, %v662, %v677
      %v686 = vsel %vm269, %v664, %v677
      %v689 = vsel %vm269, %v666, %v677
      %v692 = vsel %vm269, %v668, %v677
      %v695 = vsel %vm269, %v670, %v677
      %v698 = vsel %vm269, %v672, %v677
      %v701 = vsel %vm269, %v674, %v677
      %v703 = vperm.slane %v368, 1
      %v704 = vunpack.c.l.bf16 %v703
      %706 = vrot.lane.b32.xlu0 %v704, 32
      %v707 = vpop.permute.xlu0 %706
      %v709 = vmul.f32 %v371, %v707
      %v710 = vmul.f32 %v372, %v707
      %v711 = vmul.f32 %v373, %v707
      %v712 = vmul.f32 %v374, %v707
      %v713 = vmul.f32 %v375, %v707
      %v714 = vmul.f32 %v376, %v707
      %v715 = vmul.f32 %v377, %v707
      %v716 = vmul.f32 %v378, %v707
      %v717 = vmul.f32 %v379, %v707
      %v718 = vmul.f32 %v380, %v707
      %v719 = vmul.f32 %v381, %v707
      %v720 = vmul.f32 %v382, %v707
      %v721 = vmul.f32 %v383, %v707
      %v722 = vmul.f32 %v384, %v707
      %v723 = vmul.f32 %v385, %v707
      %v724 = vmul.f32 %v386, %v707
      %v725 = vpack.c.bf16 %v709, %v709
      %v726 = vpack.c.bf16 %v710, %v710
      %v727 = vpack.c.bf16 %v711, %v711
      %v728 = vpack.c.bf16 %v712, %v712
      %v729 = vpack.c.bf16 %v713, %v713
      %v730 = vpack.c.bf16 %v714, %v714
      %v731 = vpack.c.bf16 %v715, %v715
      %v732 = vpack.c.bf16 %v716, %v716
      %v733 = vpack.c.bf16 %v717, %v717
      %v734 = vpack.c.bf16 %v718, %v718
      %v735 = vpack.c.bf16 %v719, %v719
      %v736 = vpack.c.bf16 %v720, %v720
      %v737 = vpack.c.bf16 %v721, %v721
      %v738 = vpack.c.bf16 %v722, %v722
      %v739 = vpack.c.bf16 %v723, %v723
      %v740 = vpack.c.bf16 %v724, %v724
      %741 = vrot.lane.b32.xlu0 %v704, 64
      %v742 = vpop.permute.xlu0 %741
      %v744 = vmul.f32 %v371, %v742
      %v745 = vmul.f32 %v372, %v742
      %v746 = vmul.f32 %v373, %v742
      %v747 = vmul.f32 %v374, %v742
      %v748 = vmul.f32 %v375, %v742
      %v749 = vmul.f32 %v376, %v742
      %v750 = vmul.f32 %v377, %v742
      %v751 = vmul.f32 %v378, %v742
      %v752 = vmul.f32 %v379, %v742
      %v753 = vmul.f32 %v380, %v742
      %v754 = vmul.f32 %v381, %v742
      %v755 = vmul.f32 %v382, %v742
      %v756 = vmul.f32 %v383, %v742
      %v757 = vmul.f32 %v384, %v742
      %v758 = vmul.f32 %v385, %v742
      %v759 = vmul.f32 %v386, %v742
      %v760 = vpack.c.bf16 %v744, %v744
      %v761 = vpack.c.bf16 %v745, %v745
      %v762 = vpack.c.bf16 %v746, %v746
      %v763 = vpack.c.bf16 %v747, %v747
      %v764 = vpack.c.bf16 %v748, %v748
      %v765 = vpack.c.bf16 %v749, %v749
      %v766 = vpack.c.bf16 %v750, %v750
      %v767 = vpack.c.bf16 %v751, %v751
      %v768 = vpack.c.bf16 %v752, %v752
      %v769 = vpack.c.bf16 %v753, %v753
      %v770 = vpack.c.bf16 %v754, %v754
      %v771 = vpack.c.bf16 %v755, %v755
      %v772 = vpack.c.bf16 %v756, %v756
      %v773 = vpack.c.bf16 %v757, %v757
      %v774 = vpack.c.bf16 %v758, %v758
      %v775 = vpack.c.bf16 %v759, %v759
      %v792 = vunpack.c.l.b16 %v760
      %v793 = vunpack.c.l.b16 %v761
      %v794 = vunpack.c.l.b16 %v762
      %v795 = vunpack.c.l.b16 %v763
      %v796 = vunpack.c.l.b16 %v764
      %v797 = vunpack.c.l.b16 %v765
      %v798 = vunpack.c.l.b16 %v766
      %v799 = vunpack.c.l.b16 %v767
      %v800 = vunpack.c.l.b16 %v768
      %v801 = vunpack.c.l.b16 %v769
      %v802 = vunpack.c.l.b16 %v770
      %v803 = vunpack.c.l.b16 %v771
      %v804 = vunpack.c.l.b16 %v772
      %v805 = vunpack.c.l.b16 %v773
      %v806 = vunpack.c.l.b16 %v774
      %v807 = vunpack.c.l.b16 %v775
      %v808 = vpack.c.b16 %v793, %v792
      %v809 = vpack.c.b16 %v795, %v794
      %v810 = vpack.c.b16 %v797, %v796
      %v811 = vpack.c.b16 %v799, %v798
      %v812 = vpack.c.b16 %v801, %v800
      %v813 = vpack.c.b16 %v803, %v802
      %v814 = vpack.c.b16 %v805, %v804
      %v815 = vpack.c.b16 %v807, %v806
      %816 = vrot.lane.b32.xlu0 %v808, 64
      %v817 = vpop.permute.xlu0 %816
      %818 = vrot.lane.b32.xlu0 %v809, 64
      %v819 = vpop.permute.xlu0 %818
      %820 = vrot.lane.b32.xlu0 %v810, 64
      %v821 = vpop.permute.xlu0 %820
      %822 = vrot.lane.b32.xlu0 %v811, 64
      %v823 = vpop.permute.xlu0 %822
      %824 = vrot.lane.b32.xlu0 %v812, 64
      %v825 = vpop.permute.xlu0 %824
      %826 = vrot.lane.b32.xlu0 %v813, 64
      %v827 = vpop.permute.xlu0 %826
      %828 = vrot.lane.b32.xlu0 %v814, 64
      %v829 = vpop.permute.xlu0 %828
      %830 = vrot.lane.b32.xlu0 %v815, 64
      %v831 = vpop.permute.xlu0 %830
      %833 = vrot.lane.b32.xlu0 %v703, 32
      %v834 = vpop.permute.xlu0 %833
      %v837 = vsel %vm269, %v817, %v834
      %v840 = vsel %vm269, %v819, %v834
      %v843 = vsel %vm269, %v821, %v834
      %v846 = vsel %vm269, %v823, %v834
      %v849 = vsel %vm269, %v825, %v834
      %v852 = vsel %vm269, %v827, %v834
      %v855 = vsel %vm269, %v829, %v834
      %v858 = vsel %vm269, %v831, %v834
      %v860 = vperm.slane %v544, 1
      %v861 = vunpack.c.l.bf16 %v860
      %863 = vrot.lane.b32.xlu0 %v861, 32
      %v864 = vpop.permute.xlu0 %863
      %v866 = vmul.f32 %v371, %v864
      %v867 = vmul.f32 %v372, %v864
      %v868 = vmul.f32 %v373, %v864
      %v869 = vmul.f32 %v374, %v864
      %v870 = vmul.f32 %v375, %v864
      %v871 = vmul.f32 %v376, %v864
      %v872 = vmul.f32 %v377, %v864
      %v873 = vmul.f32 %v378, %v864
      %v874 = vmul.f32 %v379, %v864
      %v875 = vmul.f32 %v380, %v864
      %v876 = vmul.f32 %v381, %v864
      %v877 = vmul.f32 %v382, %v864
      %v878 = vmul.f32 %v383, %v864
      %v879 = vmul.f32 %v384, %v864
      %v880 = vmul.f32 %v385, %v864
      %v881 = vmul.f32 %v386, %v864
      %v882 = vpack.c.bf16 %v866, %v866
      %v883 = vpack.c.bf16 %v867, %v867
      %v884 = vpack.c.bf16 %v868, %v868
      %v885 = vpack.c.bf16 %v869, %v869
      %v886 = vpack.c.bf16 %v870, %v870
      %v887 = vpack.c.bf16 %v871, %v871
      %v888 = vpack.c.bf16 %v872, %v872
      %v889 = vpack.c.bf16 %v873, %v873
      %v890 = vpack.c.bf16 %v874, %v874
      %v891 = vpack.c.bf16 %v875, %v875
      %v892 = vpack.c.bf16 %v876, %v876
      %v893 = vpack.c.bf16 %v877, %v877
      %v894 = vpack.c.bf16 %v878, %v878
      %v895 = vpack.c.bf16 %v879, %v879
      %v896 = vpack.c.bf16 %v880, %v880
      %v897 = vpack.c.bf16 %v881, %v881
      %898 = vrot.lane.b32.xlu0 %v861, 64
      %v899 = vpop.permute.xlu0 %898
      %v901 = vmul.f32 %v371, %v899
      %v902 = vmul.f32 %v372, %v899
      %v903 = vmul.f32 %v373, %v899
      %v904 = vmul.f32 %v374, %v899
      %v905 = vmul.f32 %v375, %v899
      %v906 = vmul.f32 %v376, %v899
      %v907 = vmul.f32 %v377, %v899
      %v908 = vmul.f32 %v378, %v899
      %v909 = vmul.f32 %v379, %v899
      %v910 = vmul.f32 %v380, %v899
      %v911 = vmul.f32 %v381, %v899
      %v912 = vmul.f32 %v382, %v899
      %v913 = vmul.f32 %v383, %v899
      %v914 = vmul.f32 %v384, %v899
      %v915 = vmul.f32 %v385, %v899
      %v916 = vmul.f32 %v386, %v899
      %v917 = vpack.c.bf16 %v901, %v901
      %v918 = vpack.c.bf16 %v902, %v902
      %v919 = vpack.c.bf16 %v903, %v903
      %v920 = vpack.c.bf16 %v904, %v904
      %v921 = vpack.c.bf16 %v905, %v905
      %v922 = vpack.c.bf16 %v906, %v906
      %v923 = vpack.c.bf16 %v907, %v907
      %v924 = vpack.c.bf16 %v908, %v908
      %v925 = vpack.c.bf16 %v909, %v909
      %v926 = vpack.c.bf16 %v910, %v910
      %v927 = vpack.c.bf16 %v911, %v911
      %v928 = vpack.c.bf16 %v912, %v912
      %v929 = vpack.c.bf16 %v913, %v913
      %v930 = vpack.c.bf16 %v914, %v914
      %v931 = vpack.c.bf16 %v915, %v915
      %v932 = vpack.c.bf16 %v916, %v916
      %v949 = vunpack.c.l.b16 %v917
      %v950 = vunpack.c.l.b16 %v918
      %v951 = vunpack.c.l.b16 %v919
      %v952 = vunpack.c.l.b16 %v920
      %v953 = vunpack.c.l.b16 %v921
      %v954 = vunpack.c.l.b16 %v922
      %v955 = vunpack.c.l.b16 %v923
      %v956 = vunpack.c.l.b16 %v924
      %v957 = vunpack.c.l.b16 %v925
      %v958 = vunpack.c.l.b16 %v926
      %v959 = vunpack.c.l.b16 %v927
      %v960 = vunpack.c.l.b16 %v928
      %v961 = vunpack.c.l.b16 %v929
      %v962 = vunpack.c.l.b16 %v930
      %v963 = vunpack.c.l.b16 %v931
      %v964 = vunpack.c.l.b16 %v932
      %v965 = vpack.c.b16 %v950, %v949
      %v966 = vpack.c.b16 %v952, %v951
      %v967 = vpack.c.b16 %v954, %v953
      %v968 = vpack.c.b16 %v956, %v955
      %v969 = vpack.c.b16 %v958, %v957
      %v970 = vpack.c.b16 %v960, %v959
      %v971 = vpack.c.b16 %v962, %v961
      %v972 = vpack.c.b16 %v964, %v963
      %973 = vrot.lane.b32.xlu0 %v965, 64
      %v974 = vpop.permute.xlu0 %973
      %975 = vrot.lane.b32.xlu0 %v966, 64
      %v976 = vpop.permute.xlu0 %975
      %977 = vrot.lane.b32.xlu0 %v967, 64
      %v978 = vpop.permute.xlu0 %977
      %979 = vrot.lane.b32.xlu0 %v968, 64
      %v980 = vpop.permute.xlu0 %979
      %981 = vrot.lane.b32.xlu0 %v969, 64
      %v982 = vpop.permute.xlu0 %981
      %983 = vrot.lane.b32.xlu0 %v970, 64
      %v984 = vpop.permute.xlu0 %983
      %985 = vrot.lane.b32.xlu0 %v971, 64
      %v986 = vpop.permute.xlu0 %985
      %987 = vrot.lane.b32.xlu0 %v972, 64
      %v988 = vpop.permute.xlu0 %987
      %990 = vrot.lane.b32.xlu0 %v860, 32
      %v991 = vpop.permute.xlu0 %990
      %v994 = vsel %vm269, %v974, %v991
      %v997 = vsel %vm269, %v976, %v991
      %v1000 = vsel %vm269, %v978, %v991
      %v1003 = vsel %vm269, %v980, %v991
      %v1006 = vsel %vm269, %v982, %v991
      %v1009 = vsel %vm269, %v984, %v991
      %v1012 = vsel %vm269, %v986, %v991
      %v1015 = vsel %vm269, %v988, %v991
      %v1033 = vunpack.c.l.b16 %v408
      %v1034 = vunpack.c.l.b16 %v409
      %v1035 = vunpack.c.l.b16 %v410
      %v1036 = vunpack.c.l.b16 %v411
      %v1037 = vunpack.c.l.b16 %v412
      %v1038 = vunpack.c.l.b16 %v413
      %v1039 = vunpack.c.l.b16 %v414
      %v1040 = vunpack.c.l.b16 %v415
      %v1041 = vunpack.c.l.b16 %v416
      %v1042 = vunpack.c.l.b16 %v417
      %v1043 = vunpack.c.l.b16 %v418
      %v1044 = vunpack.c.l.b16 %v419
      %v1045 = vunpack.c.l.b16 %v420
      %v1046 = vunpack.c.l.b16 %v421
      %v1047 = vunpack.c.l.b16 %v422
      %v1048 = vunpack.c.l.b16 %v423
      %v1049 = vpack.c.b16 %v1034, %v1033
      %v1050 = vpack.c.b16 %v1036, %v1035
      %v1051 = vpack.c.b16 %v1038, %v1037
      %v1052 = vpack.c.b16 %v1040, %v1039
      %v1053 = vpack.c.b16 %v1042, %v1041
      %v1054 = vpack.c.b16 %v1044, %v1043
      %v1055 = vpack.c.b16 %v1046, %v1045
      %v1056 = vpack.c.b16 %v1048, %v1047
      %v1073 = vunpack.c.l.b16 %v568
      %v1074 = vunpack.c.l.b16 %v569
      %v1075 = vunpack.c.l.b16 %v570
      %v1076 = vunpack.c.l.b16 %v571
      %v1077 = vunpack.c.l.b16 %v572
      %v1078 = vunpack.c.l.b16 %v573
      %v1079 = vunpack.c.l.b16 %v574
      %v1080 = vunpack.c.l.b16 %v575
      %v1081 = vunpack.c.l.b16 %v576
      %v1082 = vunpack.c.l.b16 %v577
      %v1083 = vunpack.c.l.b16 %v578
      %v1084 = vunpack.c.l.b16 %v579
      %v1085 = vunpack.c.l.b16 %v580
      %v1086 = vunpack.c.l.b16 %v581
      %v1087 = vunpack.c.l.b16 %v582
      %v1088 = vunpack.c.l.b16 %v583
      %v1089 = vpack.c.b16 %v1074, %v1073
      %v1090 = vpack.c.b16 %v1076, %v1075
      %v1091 = vpack.c.b16 %v1078, %v1077
      %v1092 = vpack.c.b16 %v1080, %v1079
      %v1093 = vpack.c.b16 %v1082, %v1081
      %v1094 = vpack.c.b16 %v1084, %v1083
      %v1095 = vpack.c.b16 %v1086, %v1085
      %v1096 = vpack.c.b16 %v1088, %v1087
      %v1113 = vunpack.c.l.b16 %v725
      %v1114 = vunpack.c.l.b16 %v726
      %v1115 = vunpack.c.l.b16 %v727
      %v1116 = vunpack.c.l.b16 %v728
      %v1117 = vunpack.c.l.b16 %v729
      %v1118 = vunpack.c.l.b16 %v730
      %v1119 = vunpack.c.l.b16 %v731
      %v1120 = vunpack.c.l.b16 %v732
      %v1121 = vunpack.c.l.b16 %v733
      %v1122 = vunpack.c.l.b16 %v734
      %v1123 = vunpack.c.l.b16 %v735
      %v1124 = vunpack.c.l.b16 %v736
      %v1125 = vunpack.c.l.b16 %v737
      %v1126 = vunpack.c.l.b16 %v738
      %v1127 = vunpack.c.l.b16 %v739
      %v1128 = vunpack.c.l.b16 %v740
      %v1129 = vpack.c.b16 %v1114, %v1113
      %v1130 = vpack.c.b16 %v1116, %v1115
      %v1131 = vpack.c.b16 %v1118, %v1117
      %v1132 = vpack.c.b16 %v1120, %v1119
      %v1133 = vpack.c.b16 %v1122, %v1121
      %v1134 = vpack.c.b16 %v1124, %v1123
      %v1135 = vpack.c.b16 %v1126, %v1125
      %v1136 = vpack.c.b16 %v1128, %v1127
      %v1153 = vunpack.c.l.b16 %v882
      %v1154 = vunpack.c.l.b16 %v883
      %v1155 = vunpack.c.l.b16 %v884
      %v1156 = vunpack.c.l.b16 %v885
      %v1157 = vunpack.c.l.b16 %v886
      %v1158 = vunpack.c.l.b16 %v887
      %v1159 = vunpack.c.l.b16 %v888
      %v1160 = vunpack.c.l.b16 %v889
      %v1161 = vunpack.c.l.b16 %v890
      %v1162 = vunpack.c.l.b16 %v891
      %v1163 = vunpack.c.l.b16 %v892
      %v1164 = vunpack.c.l.b16 %v893
      %v1165 = vunpack.c.l.b16 %v894
      %v1166 = vunpack.c.l.b16 %v895
      %v1167 = vunpack.c.l.b16 %v896
      %v1168 = vunpack.c.l.b16 %v897
      %v1169 = vpack.c.b16 %v1154, %v1153
      %v1170 = vpack.c.b16 %v1156, %v1155
      %v1171 = vpack.c.b16 %v1158, %v1157
      %v1172 = vpack.c.b16 %v1160, %v1159
      %v1173 = vpack.c.b16 %v1162, %v1161
      %v1174 = vpack.c.b16 %v1164, %v1163
      %v1175 = vpack.c.b16 %v1166, %v1165
      %v1176 = vpack.c.b16 %v1168, %v1167
      %1177 = vrot.lane.b32.xlu0 %v1049, 96
      %v1178 = vpop.permute.xlu0 %1177
      %1179 = vrot.lane.b32.xlu0 %v1050, 96
      %v1180 = vpop.permute.xlu0 %1179
      %1181 = vrot.lane.b32.xlu0 %v1051, 96
      %v1182 = vpop.permute.xlu0 %1181
      %1183 = vrot.lane.b32.xlu0 %v1052, 96
      %v1184 = vpop.permute.xlu0 %1183
      %1185 = vrot.lane.b32.xlu0 %v1053, 96
      %v1186 = vpop.permute.xlu0 %1185
      %1187 = vrot.lane.b32.xlu0 %v1054, 96
      %v1188 = vpop.permute.xlu0 %1187
      %1189 = vrot.lane.b32.xlu0 %v1055, 96
      %v1190 = vpop.permute.xlu0 %1189
      %1191 = vrot.lane.b32.xlu0 %v1056, 96
      %v1192 = vpop.permute.xlu0 %1191
      %1193 = vrot.lane.b32.xlu0 %v1089, 96
      %v1194 = vpop.permute.xlu0 %1193
      %1195 = vrot.lane.b32.xlu0 %v1090, 96
      %v1196 = vpop.permute.xlu0 %1195
      %1197 = vrot.lane.b32.xlu0 %v1091, 96
      %v1198 = vpop.permute.xlu0 %1197
      %1199 = vrot.lane.b32.xlu0 %v1092, 96
      %v1200 = vpop.permute.xlu0 %1199
      %1201 = vrot.lane.b32.xlu0 %v1093, 96
      %v1202 = vpop.permute.xlu0 %1201
      %1203 = vrot.lane.b32.xlu0 %v1094, 96
      %v1204 = vpop.permute.xlu0 %1203
      %1205 = vrot.lane.b32.xlu0 %v1095, 96
      %v1206 = vpop.permute.xlu0 %1205
      %1207 = vrot.lane.b32.xlu0 %v1096, 96
      %v1208 = vpop.permute.xlu0 %1207
      %1209 = vrot.lane.b32.xlu0 %v1129, 96
      %v1210 = vpop.permute.xlu0 %1209
      %1211 = vrot.lane.b32.xlu0 %v1130, 96
      %v1212 = vpop.permute.xlu0 %1211
      %1213 = vrot.lane.b32.xlu0 %v1131, 96
      %v1214 = vpop.permute.xlu0 %1213
      %1215 = vrot.lane.b32.xlu0 %v1132, 96
      %v1216 = vpop.permute.xlu0 %1215
      %1217 = vrot.lane.b32.xlu0 %v1133, 96
      %v1218 = vpop.permute.xlu0 %1217
      %1219 = vrot.lane.b32.xlu0 %v1134, 96
      %v1220 = vpop.permute.xlu0 %1219
      %1221 = vrot.lane.b32.xlu0 %v1135, 96
      %v1222 = vpop.permute.xlu0 %1221
      %1223 = vrot.lane.b32.xlu0 %v1136, 96
      %v1224 = vpop.permute.xlu0 %1223
      %1225 = vrot.lane.b32.xlu0 %v1169, 96
      %v1226 = vpop.permute.xlu0 %1225
      %1227 = vrot.lane.b32.xlu0 %v1170, 96
      %v1228 = vpop.permute.xlu0 %1227
      %1229 = vrot.lane.b32.xlu0 %v1171, 96
      %v1230 = vpop.permute.xlu0 %1229
      %1231 = vrot.lane.b32.xlu0 %v1172, 96
      %v1232 = vpop.permute.xlu0 %1231
      %1233 = vrot.lane.b32.xlu0 %v1173, 96
      %v1234 = vpop.permute.xlu0 %1233
      %1235 = vrot.lane.b32.xlu0 %v1174, 96
      %v1236 = vpop.permute.xlu0 %1235
      %1237 = vrot.lane.b32.xlu0 %v1175, 96
      %v1238 = vpop.permute.xlu0 %1237
      %1239 = vrot.lane.b32.xlu0 %v1176, 96
      %v1240 = vpop.permute.xlu0 %1239
      %v1242 = vsel %vm269, %v343, 0
      %v1245 = vsel %vm269, %v344, 0
      %v1248 = vsel %vm269, %v345, 0
      %v1251 = vsel %vm269, %v346, 0
      %v1254 = vsel %vm269, %v347, 0
      %v1257 = vsel %vm269, %v348, 0
      %v1260 = vsel %vm269, %v349, 0
      %v1263 = vsel %vm269, %v350, 0
      %v1266 = vsel %vm269, %v1178, 0
      %v1269 = vsel %vm269, %v1180, 0
      %v1272 = vsel %vm269, %v1182, 0
      %v1275 = vsel %vm269, %v1184, 0
      %v1278 = vsel %vm269, %v1186, 0
      %v1281 = vsel %vm269, %v1188, 0
      %v1284 = vsel %vm269, %v1190, 0
      %v1287 = vsel %vm269, %v1192, 0
      %v1290 = vsel %vm269, %v1194, 0
      %v1293 = vsel %vm269, %v1196, 0
      %v1296 = vsel %vm269, %v1198, 0
      %v1299 = vsel %vm269, %v1200, 0
      %v1302 = vsel %vm269, %v1202, 0
      %v1305 = vsel %vm269, %v1204, 0
      %v1308 = vsel %vm269, %v1206, 0
      %v1311 = vsel %vm269, %v1208, 0
      %v1314 = vsel %vm269, %v1210, 0
      %v1317 = vsel %vm269, %v1212, 0
      %v1320 = vsel %vm269, %v1214, 0
      %v1323 = vsel %vm269, %v1216, 0
      %v1326 = vsel %vm269, %v1218, 0
      %v1329 = vsel %vm269, %v1220, 0
      %v1332 = vsel %vm269, %v1222, 0
      %v1335 = vsel %vm269, %v1224, 0
      %v1338 = vsel %vm269, %v1226, 0
      %v1341 = vsel %vm269, %v1228, 0
      %v1344 = vsel %vm269, %v1230, 0
      %v1347 = vsel %vm269, %v1232, 0
      %v1350 = vsel %vm269, %v1234, 0
      %v1353 = vsel %vm269, %v1236, 0
      %v1356 = vsel %vm269, %v1238, 0
      %v1359 = vsel %vm269, %v1240, 0
      %1361 = vmatpush.bf16.xpose.msra.mxu0 %v1287
      %1362 = vmatpush.bf16.xpose.msra.mxu0 %v1284
      %1363 = vmatpush.bf16.xpose.msra.mxu0 %v1281
      %1364 = vmatpush.bf16.xpose.msra.mxu0 %v1278
      %1365 = vmatpush.bf16.xpose.msra.mxu0 %v1275
      %1366 = vmatpush.bf16.xpose.msra.mxu0 %v1272
      %1367 = vmatpush.bf16.xpose.msra.mxu0 %v1269
      %1368 = vmatpush.bf16.xpose.msra.mxu0 %v1266
      %1369 = vmatmul.bf16.gmra.mxu0 %v1242
      %v1370 = vpop.f32.mrf.mxu0
      %v1371 = vadd.f32 0.0, %v1370
      %v1372 = vpop.f32.mrf.mxu0
      %v1373 = vadd.f32 0.0, %v1372
      %1374 = vmatmul.bf16.gmra.mxu0 %v1245
      %v1375 = vpop.f32.mrf.mxu0
      %v1376 = vadd.f32 0.0, %v1375
      %v1377 = vpop.f32.mrf.mxu0
      %v1378 = vadd.f32 0.0, %v1377
      %1379 = vmatmul.bf16.gmra.mxu0 %v1248
      %v1380 = vpop.f32.mrf.mxu0
      %v1381 = vadd.f32 0.0, %v1380
      %v1382 = vpop.f32.mrf.mxu0
      %v1383 = vadd.f32 0.0, %v1382
      %1384 = vmatmul.bf16.gmra.mxu0 %v1251
      %v1385 = vpop.f32.mrf.mxu0
      %v1386 = vadd.f32 0.0, %v1385
      %v1387 = vpop.f32.mrf.mxu0
      %v1388 = vadd.f32 0.0, %v1387
      %1389 = vmatmul.bf16.gmra.mxu0 %v1254
      %v1390 = vpop.f32.mrf.mxu0
      %v1391 = vadd.f32 0.0, %v1390
      %v1392 = vpop.f32.mrf.mxu0
      %v1393 = vadd.f32 0.0, %v1392
      %1394 = vmatmul.bf16.gmra.mxu0 %v1257
      %v1395 = vpop.f32.mrf.mxu0
      %v1396 = vadd.f32 0.0, %v1395
      %v1397 = vpop.f32.mrf.mxu0
      %v1398 = vadd.f32 0.0, %v1397
      %1399 = vmatmul.bf16.gmra.mxu0 %v1260
      %v1400 = vpop.f32.mrf.mxu0
      %v1401 = vadd.f32 0.0, %v1400
      %v1402 = vpop.f32.mrf.mxu0
      %v1403 = vadd.f32 0.0, %v1402
      %1404 = vmatmul.bf16.gmra.mxu0 %v1263
      %v1405 = vpop.f32.mrf.mxu0
      %v1406 = vadd.f32 0.0, %v1405
      %v1407 = vpop.f32.mrf.mxu0
      %v1408 = vadd.f32 0.0, %v1407
      %1409 = vdwg.mxu0
      %1410 = vmatpush.bf16.xpose.msra.mxu0 %v1311
      %1411 = vmatpush.bf16.xpose.msra.mxu0 %v1308
      %1412 = vmatpush.bf16.xpose.msra.mxu0 %v1305
      %1413 = vmatpush.bf16.xpose.msra.mxu0 %v1302
      %1414 = vmatpush.bf16.xpose.msra.mxu0 %v1299
      %1415 = vmatpush.bf16.xpose.msra.mxu0 %v1296
      %1416 = vmatpush.bf16.xpose.msra.mxu0 %v1293
      %1417 = vmatpush.bf16.xpose.msra.mxu0 %v1290
      %1418 = vmatmul.bf16.gmra.mxu0 %v1242
      %v1419 = vpop.f32.mrf.mxu0
      %v1420 = vadd.f32 0.0, %v1419
      %v1421 = vpop.f32.mrf.mxu0
      %v1422 = vadd.f32 0.0, %v1421
      %1423 = vmatmul.bf16.gmra.mxu0 %v1245
      %v1424 = vpop.f32.mrf.mxu0
      %v1425 = vadd.f32 0.0, %v1424
      %v1426 = vpop.f32.mrf.mxu0
      %v1427 = vadd.f32 0.0, %v1426
      %1428 = vmatmul.bf16.gmra.mxu0 %v1248
      %v1429 = vpop.f32.mrf.mxu0
      %v1430 = vadd.f32 0.0, %v1429
      %v1431 = vpop.f32.mrf.mxu0
      %v1432 = vadd.f32 0.0, %v1431
      %1433 = vmatmul.bf16.gmra.mxu0 %v1251
      %v1434 = vpop.f32.mrf.mxu0
      %v1435 = vadd.f32 0.0, %v1434
      %v1436 = vpop.f32.mrf.mxu0
      %v1437 = vadd.f32 0.0, %v1436
      %1438 = vmatmul.bf16.gmra.mxu0 %v1254
      %v1439 = vpop.f32.mrf.mxu0
      %v1440 = vadd.f32 0.0, %v1439
      %v1441 = vpop.f32.mrf.mxu0
      %v1442 = vadd.f32 0.0, %v1441
      %1443 = vmatmul.bf16.gmra.mxu0 %v1257
      %v1444 = vpop.f32.mrf.mxu0
      %v1445 = vadd.f32 0.0, %v1444
      %v1446 = vpop.f32.mrf.mxu0
      %v1447 = vadd.f32 0.0, %v1446
      %1448 = vmatmul.bf16.gmra.mxu0 %v1260
      %v1449 = vpop.f32.mrf.mxu0
      %v1450 = vadd.f32 0.0, %v1449
      %v1451 = vpop.f32.mrf.mxu0
      %v1452 = vadd.f32 0.0, %v1451
      %1453 = vmatmul.bf16.gmra.mxu0 %v1263
      %v1454 = vpop.f32.mrf.mxu0
      %v1455 = vadd.f32 0.0, %v1454
      %v1456 = vpop.f32.mrf.mxu0
      %v1457 = vadd.f32 0.0, %v1456
      %1458 = vdwg.mxu0
      %1459 = vmatpush.bf16.xpose.msra.mxu0 %v1335
      %1460 = vmatpush.bf16.xpose.msra.mxu0 %v1332
      %1461 = vmatpush.bf16.xpose.msra.mxu0 %v1329
      %1462 = vmatpush.bf16.xpose.msra.mxu0 %v1326
      %1463 = vmatpush.bf16.xpose.msra.mxu0 %v1323
      %1464 = vmatpush.bf16.xpose.msra.mxu0 %v1320
      %1465 = vmatpush.bf16.xpose.msra.mxu0 %v1317
      %1466 = vmatpush.bf16.xpose.msra.mxu0 %v1314
      %1467 = vmatmul.bf16.gmra.mxu0 %v1242
      %v1468 = vpop.f32.mrf.mxu0
      %v1469 = vadd.f32 0.0, %v1468
      %v1470 = vpop.f32.mrf.mxu0
      %v1471 = vadd.f32 0.0, %v1470
      %1472 = vmatmul.bf16.gmra.mxu0 %v1245
      %v1473 = vpop.f32.mrf.mxu0
      %v1474 = vadd.f32 0.0, %v1473
      %v1475 = vpop.f32.mrf.mxu0
      %v1476 = vadd.f32 0.0, %v1475
      %1477 = vmatmul.bf16.gmra.mxu0 %v1248
      %v1478 = vpop.f32.mrf.mxu0
      %v1479 = vadd.f32 0.0, %v1478
      %v1480 = vpop.f32.mrf.mxu0
      %v1481 = vadd.f32 0.0, %v1480
      %1482 = vmatmul.bf16.gmra.mxu0 %v1251
      %v1483 = vpop.f32.mrf.mxu0
      %v1484 = vadd.f32 0.0, %v1483
      %v1485 = vpop.f32.mrf.mxu0
      %v1486 = vadd.f32 0.0, %v1485
      %1487 = vmatmul.bf16.gmra.mxu0 %v1254
      %v1488 = vpop.f32.mrf.mxu0
      %v1489 = vadd.f32 0.0, %v1488
      %v1490 = vpop.f32.mrf.mxu0
      %v1491 = vadd.f32 0.0, %v1490
      %1492 = vmatmul.bf16.gmra.mxu0 %v1257
      %v1493 = vpop.f32.mrf.mxu0
      %v1494 = vadd.f32 0.0, %v1493
      %v1495 = vpop.f32.mrf.mxu0
      %v1496 = vadd.f32 0.0, %v1495
      %1497 = vmatmul.bf16.gmra.mxu0 %v1260
      %v1498 = vpop.f32.mrf.mxu0
      %v1499 = vadd.f32 0.0, %v1498
      %v1500 = vpop.f32.mrf.mxu0
      %v1501 = vadd.f32 0.0, %v1500
      %1502 = vmatmul.bf16.gmra.mxu0 %v1263
      %v1503 = vpop.f32.mrf.mxu0
      %v1504 = vadd.f32 0.0, %v1503
      %v1505 = vpop.f32.mrf.mxu0
      %v1506 = vadd.f32 0.0, %v1505
      %1507 = vdwg.mxu0
      %1508 = vmatpush.bf16.xpose.msra.mxu0 %v1359
      %1509 = vmatpush.bf16.xpose.msra.mxu0 %v1356
      %1510 = vmatpush.bf16.xpose.msra.mxu0 %v1353
      %1511 = vmatpush.bf16.xpose.msra.mxu0 %v1350
      %1512 = vmatpush.bf16.xpose.msra.mxu0 %v1347
      %1513 = vmatpush.bf16.xpose.msra.mxu0 %v1344
      %1514 = vmatpush.bf16.xpose.msra.mxu0 %v1341
      %1515 = vmatpush.bf16.xpose.msra.mxu0 %v1338
      %1516 = vmatmul.bf16.gmra.mxu0 %v1242
      %v1517 = vpop.f32.mrf.mxu0
      %v1518 = vadd.f32 0.0, %v1517
      %v1519 = vpop.f32.mrf.mxu0
      %v1520 = vadd.f32 0.0, %v1519
      %1521 = vmatmul.bf16.gmra.mxu0 %v1245
      %v1522 = vpop.f32.mrf.mxu0
      %v1523 = vadd.f32 0.0, %v1522
      %v1524 = vpop.f32.mrf.mxu0
      %v1525 = vadd.f32 0.0, %v1524
      %1526 = vmatmul.bf16.gmra.mxu0 %v1248
      %v1527 = vpop.f32.mrf.mxu0
      %v1528 = vadd.f32 0.0, %v1527
      %v1529 = vpop.f32.mrf.mxu0
      %v1530 = vadd.f32 0.0, %v1529
      %1531 = vmatmul.bf16.gmra.mxu0 %v1251
      %v1532 = vpop.f32.mrf.mxu0
      %v1533 = vadd.f32 0.0, %v1532
      %v1534 = vpop.f32.mrf.mxu0
      %v1535 = vadd.f32 0.0, %v1534
      %1536 = vmatmul.bf16.gmra.mxu0 %v1254
      %v1537 = vpop.f32.mrf.mxu0
      %v1538 = vadd.f32 0.0, %v1537
      %v1539 = vpop.f32.mrf.mxu0
      %v1540 = vadd.f32 0.0, %v1539
      %1541 = vmatmul.bf16.gmra.mxu0 %v1257
      %v1542 = vpop.f32.mrf.mxu0
      %v1543 = vadd.f32 0.0, %v1542
      %v1544 = vpop.f32.mrf.mxu0
      %v1545 = vadd.f32 0.0, %v1544
      %1546 = vmatmul.bf16.gmra.mxu0 %v1260
      %v1547 = vpop.f32.mrf.mxu0
      %v1548 = vadd.f32 0.0, %v1547
      %v1549 = vpop.f32.mrf.mxu0
      %v1550 = vadd.f32 0.0, %v1549
      %1551 = vmatmul.bf16.gmra.mxu0 %v1263
      %v1552 = vpop.f32.mrf.mxu0
      %v1553 = vadd.f32 0.0, %v1552
      %v1554 = vpop.f32.mrf.mxu0
      %v1555 = vadd.f32 0.0, %v1554
      %1556 = vdwg.mxu0
      %v1557 = vmul.f32 %v1371, 0.35355338
      %v1558 = vmul.f32 %v1420, 0.35355338
      %v1559 = vmul.f32 %v1469, 0.35355338
      %v1560 = vmul.f32 %v1518, 0.35355338
      %v1561 = vmul.f32 %v1373, 0.35355338
      %v1562 = vmul.f32 %v1422, 0.35355338
      %v1563 = vmul.f32 %v1471, 0.35355338
      %v1564 = vmul.f32 %v1520, 0.35355338
      %v1565 = vmul.f32 %v1376, 0.35355338
      %v1566 = vmul.f32 %v1425, 0.35355338
      %v1567 = vmul.f32 %v1474, 0.35355338
      %v1568 = vmul.f32 %v1523, 0.35355338
      %v1569 = vmul.f32 %v1378, 0.35355338
      %v1570 = vmul.f32 %v1427, 0.35355338
      %v1571 = vmul.f32 %v1476, 0.35355338
      %v1572 = vmul.f32 %v1525, 0.35355338
      %v1573 = vmul.f32 %v1381, 0.35355338
      %v1574 = vmul.f32 %v1430, 0.35355338
      %v1575 = vmul.f32 %v1479, 0.35355338
      %v1576 = vmul.f32 %v1528, 0.35355338
      %v1577 = vmul.f32 %v1383, 0.35355338
      %v1578 = vmul.f32 %v1432, 0.35355338
      %v1579 = vmul.f32 %v1481, 0.35355338
      %v1580 = vmul.f32 %v1530, 0.35355338
      %v1581 = vmul.f32 %v1386, 0.35355338
      %v1582 = vmul.f32 %v1435, 0.35355338
      %v1583 = vmul.f32 %v1484, 0.35355338
      %v1584 = vmul.f32 %v1533, 0.35355338
      %v1585 = vmul.f32 %v1388, 0.35355338
      %v1586 = vmul.f32 %v1437, 0.35355338
      %v1587 = vmul.f32 %v1486, 0.35355338
      %v1588 = vmul.f32 %v1535, 0.35355338
      %v1589 = vmul.f32 %v1391, 0.35355338
      %v1590 = vmul.f32 %v1440, 0.35355338
      %v1591 = vmul.f32 %v1489, 0.35355338
      %v1592 = vmul.f32 %v1538, 0.35355338
      %v1593 = vmul.f32 %v1393, 0.35355338
      %v1594 = vmul.f32 %v1442, 0.35355338
      %v1595 = vmul.f32 %v1491, 0.35355338
      %v1596 = vmul.f32 %v1540, 0.35355338
      %v1597 = vmul.f32 %v1396, 0.35355338
      %v1598 = vmul.f32 %v1445, 0.35355338
      %v1599 = vmul.f32 %v1494, 0.35355338
      %v1600 = vmul.f32 %v1543, 0.35355338
      %v1601 = vmul.f32 %v1398, 0.35355338
      %v1602 = vmul.f32 %v1447, 0.35355338
      %v1603 = vmul.f32 %v1496, 0.35355338
      %v1604 = vmul.f32 %v1545, 0.35355338
      %v1605 = vmul.f32 %v1401, 0.35355338
      %v1606 = vmul.f32 %v1450, 0.35355338
      %v1607 = vmul.f32 %v1499, 0.35355338
      %v1608 = vmul.f32 %v1548, 0.35355338
      %v1609 = vmul.f32 %v1403, 0.35355338
      %v1610 = vmul.f32 %v1452, 0.35355338
      %v1611 = vmul.f32 %v1501, 0.35355338
      %v1612 = vmul.f32 %v1550, 0.35355338
      %v1613 = vmul.f32 %v1406, 0.35355338
      %v1614 = vmul.f32 %v1455, 0.35355338
      %v1615 = vmul.f32 %v1504, 0.35355338
      %v1616 = vmul.f32 %v1553, 0.35355338
      %v1617 = vmul.f32 %v1408, 0.35355338
      %v1618 = vmul.f32 %v1457, 0.35355338
      %v1619 = vmul.f32 %v1506, 0.35355338
      %v1620 = vmul.f32 %v1555, 0.35355338
      %v1621 = vld [vmem:[%s3] sm:$0xff]
      %v1622 = vld [vmem:[%s3 + $0x8] sm:$0xff]
      %v1623 = vld [vmem:[%s3 + $0x10] sm:$0xff]
      %v1624 = vld [vmem:[%s3 + $0x18] sm:$0xff]
      %v1625 = vld [vmem:[%s3 + $0x20] sm:$0xff]
      %v1626 = vld [vmem:[%s3 + $0x28] sm:$0xff]
      %v1627 = vld [vmem:[%s3 + $0x30] sm:$0xff]
      %v1628 = vld [vmem:[%s3 + $0x38] sm:$0xff]
      %v1629 = vld [vmem:[%s3 + $0x40] sm:$0xff]
      %v1630 = vld [vmem:[%s3 + $0x48] sm:$0xff]
      %v1631 = vld [vmem:[%s3 + $0x50] sm:$0xff]
      %v1632 = vld [vmem:[%s3 + $0x58] sm:$0xff]
      %v1633 = vld [vmem:[%s3 + $0x60] sm:$0xff]
      %v1634 = vld [vmem:[%s3 + $0x68] sm:$0xff]
      %v1635 = vld [vmem:[%s3 + $0x70] sm:$0xff]
      %v1636 = vld [vmem:[%s3 + $0x78] sm:$0xff]
      %v1637 = vld [vmem:[%s3 + $0x80] sm:$0xff]
      %v1638 = vld [vmem:[%s3 + $0x88] sm:$0xff]
      %v1639 = vld [vmem:[%s3 + $0x90] sm:$0xff]
      %v1640 = vld [vmem:[%s3 + $0x98] sm:$0xff]
      %v1641 = vld [vmem:[%s3 + $0xa0] sm:$0xff]
      %v1642 = vld [vmem:[%s3 + $0xa8] sm:$0xff]
      %v1643 = vld [vmem:[%s3 + $0xb0] sm:$0xff]
      %v1644 = vld [vmem:[%s3 + $0xb8] sm:$0xff]
      %v1645 = vld [vmem:[%s3 + $0xc0] sm:$0xff]
      %v1646 = vld [vmem:[%s3 + $0xc8] sm:$0xff]
      %v1647 = vld [vmem:[%s3 + $0xd0] sm:$0xff]
      %v1648 = vld [vmem:[%s3 + $0xd8] sm:$0xff]
      %v1649 = vld [vmem:[%s3 + $0xe0] sm:$0xff]
      %v1650 = vld [vmem:[%s3 + $0xe8] sm:$0xff]
      %v1651 = vld [vmem:[%s3 + $0xf0] sm:$0xff]
      %v1652 = vld [vmem:[%s3 + $0xf8] sm:$0xff]
      %v1653 = vld [vmem:[%s3 + $0x100] sm:$0xff]
      %v1654 = vld [vmem:[%s3 + $0x108] sm:$0xff]
      %v1655 = vld [vmem:[%s3 + $0x110] sm:$0xff]
      %v1656 = vld [vmem:[%s3 + $0x118] sm:$0xff]
      %v1657 = vld [vmem:[%s3 + $0x120] sm:$0xff]
      %v1658 = vld [vmem:[%s3 + $0x128] sm:$0xff]
      %v1659 = vld [vmem:[%s3 + $0x130] sm:$0xff]
      %v1660 = vld [vmem:[%s3 + $0x138] sm:$0xff]
      %v1661 = vld [vmem:[%s3 + $0x140] sm:$0xff]
      %v1662 = vld [vmem:[%s3 + $0x148] sm:$0xff]
      %v1663 = vld [vmem:[%s3 + $0x150] sm:$0xff]
      %v1664 = vld [vmem:[%s3 + $0x158] sm:$0xff]
      %v1665 = vld [vmem:[%s3 + $0x160] sm:$0xff]
      %v1666 = vld [vmem:[%s3 + $0x168] sm:$0xff]
      %v1667 = vld [vmem:[%s3 + $0x170] sm:$0xff]
      %v1668 = vld [vmem:[%s3 + $0x178] sm:$0xff]
      %v1669 = vld [vmem:[%s3 + $0x180] sm:$0xff]
      %v1670 = vld [vmem:[%s3 + $0x188] sm:$0xff]
      %v1671 = vld [vmem:[%s3 + $0x190] sm:$0xff]
      %v1672 = vld [vmem:[%s3 + $0x198] sm:$0xff]
      %v1673 = vld [vmem:[%s3 + $0x1a0] sm:$0xff]
      %v1674 = vld [vmem:[%s3 + $0x1a8] sm:$0xff]
      %v1675 = vld [vmem:[%s3 + $0x1b0] sm:$0xff]
      %v1676 = vld [vmem:[%s3 + $0x1b8] sm:$0xff]
      %v1677 = vld [vmem:[%s3 + $0x1c0] sm:$0xff]
      %v1678 = vld [vmem:[%s3 + $0x1c8] sm:$0xff]
      %v1679 = vld [vmem:[%s3 + $0x1d0] sm:$0xff]
      %v1680 = vld [vmem:[%s3 + $0x1d8] sm:$0xff]
      %v1681 = vld [vmem:[%s3 + $0x1e0] sm:$0xff]
      %v1682 = vld [vmem:[%s3 + $0x1e8] sm:$0xff]
      %v1683 = vld [vmem:[%s3 + $0x1f0] sm:$0xff]
      %v1684 = vld [vmem:[%s3 + $0x1f8] sm:$0xff]
      %v1685 = vadd.f32 %v1557, %v1621
      %v1686 = vadd.f32 %v1558, %v1622
      %v1687 = vadd.f32 %v1559, %v1623
      %v1688 = vadd.f32 %v1560, %v1624
      %v1689 = vadd.f32 %v1561, %v1625
      %v1690 = vadd.f32 %v1562, %v1626
      %v1691 = vadd.f32 %v1563, %v1627
      %v1692 = vadd.f32 %v1564, %v1628
      %v1693 = vadd.f32 %v1565, %v1629
      %v1694 = vadd.f32 %v1566, %v1630
      %v1695 = vadd.f32 %v1567, %v1631
      %v1696 = vadd.f32 %v1568, %v1632
      %v1697 = vadd.f32 %v1569, %v1633
      %v1698 = vadd.f32 %v1570, %v1634
      %v1699 = vadd.f32 %v1571, %v1635
      %v1700 = vadd.f32 %v1572, %v1636
      %v1701 = vadd.f32 %v1573, %v1637
      %v1702 = vadd.f32 %v1574, %v1638
      %v1703 = vadd.f32 %v1575, %v1639
      %v1704 = vadd.f32 %v1576, %v1640
      %v1705 = vadd.f32 %v1577, %v1641
      %v1706 = vadd.f32 %v1578, %v1642
      %v1707 = vadd.f32 %v1579, %v1643
      %v1708 = vadd.f32 %v1580, %v1644
      %v1709 = vadd.f32 %v1581, %v1645
      %v1710 = vadd.f32 %v1582, %v1646
      %v1711 = vadd.f32 %v1583, %v1647
      %v1712 = vadd.f32 %v1584, %v1648
      %v1713 = vadd.f32 %v1585, %v1649
      %v1714 = vadd.f32 %v1586, %v1650
      %v1715 = vadd.f32 %v1587, %v1651
      %v1716 = vadd.f32 %v1588, %v1652
      %v1717 = vadd.f32 %v1589, %v1653
      %v1718 = vadd.f32 %v1590, %v1654
      %v1719 = vadd.f32 %v1591, %v1655
      %v1720 = vadd.f32 %v1592, %v1656
      %v1721 = vadd.f32 %v1593, %v1657
      %v1722 = vadd.f32 %v1594, %v1658
      %v1723 = vadd.f32 %v1595, %v1659
      %v1724 = vadd.f32 %v1596, %v1660
      %v1725 = vadd.f32 %v1597, %v1661
      %v1726 = vadd.f32 %v1598, %v1662
      %v1727 = vadd.f32 %v1599, %v1663
      %v1728 = vadd.f32 %v1600, %v1664
      %v1729 = vadd.f32 %v1601, %v1665
      %v1730 = vadd.f32 %v1602, %v1666
      %v1731 = vadd.f32 %v1603, %v1667
      %v1732 = vadd.f32 %v1604, %v1668
      %v1733 = vadd.f32 %v1605, %v1669
      %v1734 = vadd.f32 %v1606, %v1670
      %v1735 = vadd.f32 %v1607, %v1671
      %v1736 = vadd.f32 %v1608, %v1672
      %v1737 = vadd.f32 %v1609, %v1673
      %v1738 = vadd.f32 %v1610, %v1674
      %v1739 = vadd.f32 %v1611, %v1675
      %v1740 = vadd.f32 %v1612, %v1676
      %v1741 = vadd.f32 %v1613, %v1677
      %v1742 = vadd.f32 %v1614, %v1678
      %v1743 = vadd.f32 %v1615, %v1679
      %v1744 = vadd.f32 %v1616, %v1680
      %v1745 = vadd.f32 %v1617, %v1681
      %v1746 = vadd.f32 %v1618, %v1682
      %v1747 = vadd.f32 %v1619, %v1683
      %v1748 = vadd.f32 %v1620, %v1684
      %v1749 = vmax.f32 %v1685, %v1686
      %v1750 = vmax.f32 %v1749, %v1687
      %v1751 = vmax.f32 %v1750, %v1688
      %1752 = vmax.xlane.f32.xlu0 %v1751
      %v1753 = vpop.xlane.xlu0 %1752
      %v1754 = vmax.f32 %v1689, %v1690
      %v1755 = vmax.f32 %v1754, %v1691
      %v1756 = vmax.f32 %v1755, %v1692
      %1757 = vmax.xlane.f32.xlu0 %v1756
      %v1758 = vpop.xlane.xlu0 %1757
      %v1759 = vmax.f32 %v1693, %v1694
      %v1760 = vmax.f32 %v1759, %v1695
      %v1761 = vmax.f32 %v1760, %v1696
      %1762 = vmax.xlane.f32.xlu0 %v1761
      %v1763 = vpop.xlane.xlu0 %1762
      %v1764 = vmax.f32 %v1697, %v1698
      %v1765 = vmax.f32 %v1764, %v1699
      %v1766 = vmax.f32 %v1765, %v1700
      %1767 = vmax.xlane.f32.xlu0 %v1766
      %v1768 = vpop.xlane.xlu0 %1767
      %v1769 = vmax.f32 %v1701, %v1702
      %v1770 = vmax.f32 %v1769, %v1703
      %v1771 = vmax.f32 %v1770, %v1704
      %1772 = vmax.xlane.f32.xlu0 %v1771
      %v1773 = vpop.xlane.xlu0 %1772
      %v1774 = vmax.f32 %v1705, %v1706
      %v1775 = vmax.f32 %v1774, %v1707
      %v1776 = vmax.f32 %v1775, %v1708
      %1777 = vmax.xlane.f32.xlu0 %v1776
      %v1778 = vpop.xlane.xlu0 %1777
      %v1779 = vmax.f32 %v1709, %v1710
      %v1780 = vmax.f32 %v1779, %v1711
      %v1781 = vmax.f32 %v1780, %v1712
      %1782 = vmax.xlane.f32.xlu0 %v1781
      %v1783 = vpop.xlane.xlu0 %1782
      %v1784 = vmax.f32 %v1713, %v1714
      %v1785 = vmax.f32 %v1784, %v1715
      %v1786 = vmax.f32 %v1785, %v1716
      %1787 = vmax.xlane.f32.xlu0 %v1786
      %v1788 = vpop.xlane.xlu0 %1787
      %v1789 = vmax.f32 %v1717, %v1718
      %v1790 = vmax.f32 %v1789, %v1719
      %v1791 = vmax.f32 %v1790, %v1720
      %1792 = vmax.xlane.f32.xlu0 %v1791
      %v1793 = vpop.xlane.xlu0 %1792
      %v1794 = vmax.f32 %v1721, %v1722
      %v1795 = vmax.f32 %v1794, %v1723
      %v1796 = vmax.f32 %v1795, %v1724
      %1797 = vmax.xlane.f32.xlu0 %v1796
      %v1798 = vpop.xlane.xlu0 %1797
      %v1799 = vmax.f32 %v1725, %v1726
      %v1800 = vmax.f32 %v1799, %v1727
      %v1801 = vmax.f32 %v1800, %v1728
      %1802 = vmax.xlane.f32.xlu0 %v1801
      %v1803 = vpop.xlane.xlu0 %1802
      %v1804 = vmax.f32 %v1729, %v1730
      %v1805 = vmax.f32 %v1804, %v1731
      %v1806 = vmax.f32 %v1805, %v1732
      %1807 = vmax.xlane.f32.xlu0 %v1806
      %v1808 = vpop.xlane.xlu0 %1807
      %v1809 = vmax.f32 %v1733, %v1734
      %v1810 = vmax.f32 %v1809, %v1735
      %v1811 = vmax.f32 %v1810, %v1736
      %1812 = vmax.xlane.f32.xlu0 %v1811
      %v1813 = vpop.xlane.xlu0 %1812
      %v1814 = vmax.f32 %v1737, %v1738
      %v1815 = vmax.f32 %v1814, %v1739
      %v1816 = vmax.f32 %v1815, %v1740
      %1817 = vmax.xlane.f32.xlu0 %v1816
      %v1818 = vpop.xlane.xlu0 %1817
      %v1819 = vmax.f32 %v1741, %v1742
      %v1820 = vmax.f32 %v1819, %v1743
      %v1821 = vmax.f32 %v1820, %v1744
      %1822 = vmax.xlane.f32.xlu0 %v1821
      %v1823 = vpop.xlane.xlu0 %1822
      %v1824 = vmax.f32 %v1745, %v1746
      %v1825 = vmax.f32 %v1824, %v1747
      %v1826 = vmax.f32 %v1825, %v1748
      %1827 = vmax.xlane.f32.xlu0 %v1826
      %v1828 = vpop.xlane.xlu0 %1827
      %v1829 = vsub.f32 %v1685, %v1753
      %v1830 = vsub.f32 %v1686, %v1753
      %v1831 = vsub.f32 %v1687, %v1753
      %v1832 = vsub.f32 %v1688, %v1753
      %v1833 = vsub.f32 %v1689, %v1758
      %v1834 = vsub.f32 %v1690, %v1758
      %v1835 = vsub.f32 %v1691, %v1758
      %v1836 = vsub.f32 %v1692, %v1758
      %v1837 = vsub.f32 %v1693, %v1763
      %v1838 = vsub.f32 %v1694, %v1763
      %v1839 = vsub.f32 %v1695, %v1763
      %v1840 = vsub.f32 %v1696, %v1763
      %v1841 = vsub.f32 %v1697, %v1768
      %v1842 = vsub.f32 %v1698, %v1768
      %v1843 = vsub.f32 %v1699, %v1768
      %v1844 = vsub.f32 %v1700, %v1768
      %v1845 = vsub.f32 %v1701, %v1773
      %v1846 = vsub.f32 %v1702, %v1773
      %v1847 = vsub.f32 %v1703, %v1773
      %v1848 = vsub.f32 %v1704, %v1773
      %v1849 = vsub.f32 %v1705, %v1778
      %v1850 = vsub.f32 %v1706, %v1778
      %v1851 = vsub.f32 %v1707, %v1778
      %v1852 = vsub.f32 %v1708, %v1778
      %v1853 = vsub.f32 %v1709, %v1783
      %v1854 = vsub.f32 %v1710, %v1783
      %v1855 = vsub.f32 %v1711, %v1783
      %v1856 = vsub.f32 %v1712, %v1783
      %v1857 = vsub.f32 %v1713, %v1788
      %v1858 = vsub.f32 %v1714, %v1788
      %v1859 = vsub.f32 %v1715, %v1788
      %v1860 = vsub.f32 %v1716, %v1788
      %v1861 = vsub.f32 %v1717, %v1793
      %v1862 = vsub.f32 %v1718, %v1793
      %v1863 = vsub.f32 %v1719, %v1793
      %v1864 = vsub.f32 %v1720, %v1793
      %v1865 = vsub.f32 %v1721, %v1798
      %v1866 = vsub.f32 %v1722, %v1798
      %v1867 = vsub.f32 %v1723, %v1798
      %v1868 = vsub.f32 %v1724, %v1798
      %v1869 = vsub.f32 %v1725, %v1803
      %v1870 = vsub.f32 %v1726, %v1803
      %v1871 = vsub.f32 %v1727, %v1803
      %v1872 = vsub.f32 %v1728, %v1803
      %v1873 = vsub.f32 %v1729, %v1808
      %v1874 = vsub.f32 %v1730, %v1808
      %v1875 = vsub.f32 %v1731, %v1808
      %v1876 = vsub.f32 %v1732, %v1808
      %v1877 = vsub.f32 %v1733, %v1813
      %v1878 = vsub.f32 %v1734, %v1813
      %v1879 = vsub.f32 %v1735, %v1813
      %v1880 = vsub.f32 %v1736, %v1813
      %v1881 = vsub.f32 %v1737, %v1818
      %v1882 = vsub.f32 %v1738, %v1818
      %v1883 = vsub.f32 %v1739, %v1818
      %v1884 = vsub.f32 %v1740, %v1818
      %v1885 = vsub.f32 %v1741, %v1823
      %v1886 = vsub.f32 %v1742, %v1823
      %v1887 = vsub.f32 %v1743, %v1823
      %v1888 = vsub.f32 %v1744, %v1823
      %v1889 = vsub.f32 %v1745, %v1828
      %v1890 = vsub.f32 %v1746, %v1828
      %v1891 = vsub.f32 %v1747, %v1828
      %v1892 = vsub.f32 %v1748, %v1828
      %v1893 = vmul.f32 %v1829, 1.442695
      %v1894 = vpow.pop %v1893
      %v1895 = vmul.f32 %v1830, 1.442695
      %v1896 = vpow.pop %v1895
      %v1897 = vmul.f32 %v1831, 1.442695
      %v1898 = vpow.pop %v1897
      %v1899 = vmul.f32 %v1832, 1.442695
      %v1900 = vpow.pop %v1899
      %v1901 = vmul.f32 %v1833, 1.442695
      %v1902 = vpow.pop %v1901
      %v1903 = vmul.f32 %v1834, 1.442695
      %v1904 = vpow.pop %v1903
      %v1905 = vmul.f32 %v1835, 1.442695
      %v1906 = vpow.pop %v1905
      %v1907 = vmul.f32 %v1836, 1.442695
      %v1908 = vpow.pop %v1907
      %v1909 = vmul.f32 %v1837, 1.442695
      %v1910 = vpow.pop %v1909
      %v1911 = vmul.f32 %v1838, 1.442695
      %v1912 = vpow.pop %v1911
      %v1913 = vmul.f32 %v1839, 1.442695
      %v1914 = vpow.pop %v1913
      %v1915 = vmul.f32 %v1840, 1.442695
      %v1916 = vpow.pop %v1915
      %v1917 = vmul.f32 %v1841, 1.442695
      %v1918 = vpow.pop %v1917
      %v1919 = vmul.f32 %v1842, 1.442695
      %v1920 = vpow.pop %v1919
      %v1921 = vmul.f32 %v1843, 1.442695
      %v1922 = vpow.pop %v1921
      %v1923 = vmul.f32 %v1844, 1.442695
      %v1924 = vpow.pop %v1923
      %v1925 = vmul.f32 %v1845, 1.442695
      %v1926 = vpow.pop %v1925
      %v1927 = vmul.f32 %v1846, 1.442695
      %v1928 = vpow.pop %v1927
      %v1929 = vmul.f32 %v1847, 1.442695
      %v1930 = vpow.pop %v1929
      %v1931 = vmul.f32 %v1848, 1.442695
      %v1932 = vpow.pop %v1931
      %v1933 = vmul.f32 %v1849, 1.442695
      %v1934 = vpow.pop %v1933
      %v1935 = vmul.f32 %v1850, 1.442695
      %v1936 = vpow.pop %v1935
      %v1937 = vmul.f32 %v1851, 1.442695
      %v1938 = vpow.pop %v1937
      %v1939 = vmul.f32 %v1852, 1.442695
      %v1940 = vpow.pop %v1939
      %v1941 = vmul.f32 %v1853, 1.442695
      %v1942 = vpow.pop %v1941
      %v1943 = vmul.f32 %v1854, 1.442695
      %v1944 = vpow.pop %v1943
      %v1945 = vmul.f32 %v1855, 1.442695
      %v1946 = vpow.pop %v1945
      %v1947 = vmul.f32 %v1856, 1.442695
      %v1948 = vpow.pop %v1947
      %v1949 = vmul.f32 %v1857, 1.442695
      %v1950 = vpow.pop %v1949
      %v1951 = vmul.f32 %v1858, 1.442695
      %v1952 = vpow.pop %v1951
      %v1953 = vmul.f32 %v1859, 1.442695
      %v1954 = vpow.pop %v1953
      %v1955 = vmul.f32 %v1860, 1.442695
      %v1956 = vpow.pop %v1955
      %v1957 = vmul.f32 %v1861, 1.442695
      %v1958 = vpow.pop %v1957
      %v1959 = vmul.f32 %v1862, 1.442695
      %v1960 = vpow.pop %v1959
      %v1961 = vmul.f32 %v1863, 1.442695
      %v1962 = vpow.pop %v1961
      %v1963 = vmul.f32 %v1864, 1.442695
      %v1964 = vpow.pop %v1963
      %v1965 = vmul.f32 %v1865, 1.442695
      %v1966 = vpow.pop %v1965
      %v1967 = vmul.f32 %v1866, 1.442695
      %v1968 = vpow.pop %v1967
      %v1969 = vmul.f32 %v1867, 1.442695
      %v1970 = vpow.pop %v1969
      %v1971 = vmul.f32 %v1868, 1.442695
      %v1972 = vpow.pop %v1971
      %v1973 = vmul.f32 %v1869, 1.442695
      %v1974 = vpow.pop %v1973
      %v1975 = vmul.f32 %v1870, 1.442695
      %v1976 = vpow.pop %v1975
      %v1977 = vmul.f32 %v1871, 1.442695
      %v1978 = vpow.pop %v1977
      %v1979 = vmul.f32 %v1872, 1.442695
      %v1980 = vpow.pop %v1979
      %v1981 = vmul.f32 %v1873, 1.442695
      %v1982 = vpow.pop %v1981
      %v1983 = vmul.f32 %v1874, 1.442695
      %v1984 = vpow.pop %v1983
      %v1985 = vmul.f32 %v1875, 1.442695
      %v1986 = vpow.pop %v1985
      %v1987 = vmul.f32 %v1876, 1.442695
      %v1988 = vpow.pop %v1987
      %v1989 = vmul.f32 %v1877, 1.442695
      %v1990 = vpow.pop %v1989
      %v1991 = vmul.f32 %v1878, 1.442695
      %v1992 = vpow.pop %v1991
      %v1993 = vmul.f32 %v1879, 1.442695
      %v1994 = vpow.pop %v1993
      %v1995 = vmul.f32 %v1880, 1.442695
      %v1996 = vpow.pop %v1995
      %v1997 = vmul.f32 %v1881, 1.442695
      %v1998 = vpow.pop %v1997
      %v1999 = vmul.f32 %v1882, 1.442695
      %v2000 = vpow.pop %v1999
      %v2001 = vmul.f32 %v1883, 1.442695
      %v2002 = vpow.pop %v2001
      %v2003 = vmul.f32 %v1884, 1.442695
      %v2004 = vpow.pop %v2003
      %v2005 = vmul.f32 %v1885, 1.442695
      %v2006 = vpow.pop %v2005
      %v2007 = vmul.f32 %v1886, 1.442695
      %v2008 = vpow.pop %v2007
      %v2009 = vmul.f32 %v1887, 1.442695
      %v2010 = vpow.pop %v2009
      %v2011 = vmul.f32 %v1888, 1.442695
      %v2012 = vpow.pop %v2011
      %v2013 = vmul.f32 %v1889, 1.442695
      %v2014 = vpow.pop %v2013
      %v2015 = vmul.f32 %v1890, 1.442695
      %v2016 = vpow.pop %v2015
      %v2017 = vmul.f32 %v1891, 1.442695
      %v2018 = vpow.pop %v2017
      %v2019 = vmul.f32 %v1892, 1.442695
      %v2020 = vpow.pop %v2019
      %v2021 = vpack.c.bf16 %v1902, %v1894
      %v2022 = vpack.c.bf16 %v1904, %v1896
      %v2023 = vpack.c.bf16 %v1906, %v1898
      %v2024 = vpack.c.bf16 %v1908, %v1900
      %v2025 = vpack.c.bf16 %v1918, %v1910
      %v2026 = vpack.c.bf16 %v1920, %v1912
      %v2027 = vpack.c.bf16 %v1922, %v1914
      %v2028 = vpack.c.bf16 %v1924, %v1916
      %v2029 = vpack.c.bf16 %v1934, %v1926
      %v2030 = vpack.c.bf16 %v1936, %v1928
      %v2031 = vpack.c.bf16 %v1938, %v1930
      %v2032 = vpack.c.bf16 %v1940, %v1932
      %v2033 = vpack.c.bf16 %v1950, %v1942
      %v2034 = vpack.c.bf16 %v1952, %v1944
      %v2035 = vpack.c.bf16 %v1954, %v1946
      %v2036 = vpack.c.bf16 %v1956, %v1948
      %v2037 = vpack.c.bf16 %v1966, %v1958
      %v2038 = vpack.c.bf16 %v1968, %v1960
      %v2039 = vpack.c.bf16 %v1970, %v1962
      %v2040 = vpack.c.bf16 %v1972, %v1964
      %v2041 = vpack.c.bf16 %v1982, %v1974
      %v2042 = vpack.c.bf16 %v1984, %v1976
      %v2043 = vpack.c.bf16 %v1986, %v1978
      %v2044 = vpack.c.bf16 %v1988, %v1980
      %v2045 = vpack.c.bf16 %v1998, %v1990
      %v2046 = vpack.c.bf16 %v2000, %v1992
      %v2047 = vpack.c.bf16 %v2002, %v1994
      %v2048 = vpack.c.bf16 %v2004, %v1996
      %v2049 = vpack.c.bf16 %v2014, %v2006
      %v2050 = vpack.c.bf16 %v2016, %v2008
      %v2051 = vpack.c.bf16 %v2018, %v2010
      %v2052 = vpack.c.bf16 %v2020, %v2012
      %2053 = vmatpush.bf16.msra.mxu0 %v541
      %2054 = vmatpush.bf16.msra.mxu0 %v538
      %2055 = vmatpush.bf16.msra.mxu0 %v535
      %2056 = vmatpush.bf16.msra.mxu0 %v532
      %2057 = vmatpush.bf16.msra.mxu0 %v529
      %2058 = vmatpush.bf16.msra.mxu0 %v526
      %2059 = vmatpush.bf16.msra.mxu0 %v523
      %2060 = vmatpush.bf16.msra.mxu0 %v520
      %2061 = vmatmul.bf16.gmra.mxu0 %v2021
      %v2062 = vpop.f32.mrf.mxu0
      %v2063 = vadd.f32 0.0, %v2062
      %v2064 = vpop.f32.mrf.mxu0
      %v2065 = vadd.f32 0.0, %v2064
      %2066 = vmatmul.bf16.gmra.mxu0 %v2025
      %v2067 = vpop.f32.mrf.mxu0
      %v2068 = vadd.f32 0.0, %v2067
      %v2069 = vpop.f32.mrf.mxu0
      %v2070 = vadd.f32 0.0, %v2069
      %2071 = vmatmul.bf16.gmra.mxu0 %v2029
      %v2072 = vpop.f32.mrf.mxu0
      %v2073 = vadd.f32 0.0, %v2072
      %v2074 = vpop.f32.mrf.mxu0
      %v2075 = vadd.f32 0.0, %v2074
      %2076 = vmatmul.bf16.gmra.mxu0 %v2033
      %v2077 = vpop.f32.mrf.mxu0
      %v2078 = vadd.f32 0.0, %v2077
      %v2079 = vpop.f32.mrf.mxu0
      %v2080 = vadd.f32 0.0, %v2079
      %2081 = vmatmul.bf16.gmra.mxu0 %v2037
      %v2082 = vpop.f32.mrf.mxu0
      %v2083 = vadd.f32 0.0, %v2082
      %v2084 = vpop.f32.mrf.mxu0
      %v2085 = vadd.f32 0.0, %v2084
      %2086 = vmatmul.bf16.gmra.mxu0 %v2041
      %v2087 = vpop.f32.mrf.mxu0
      %v2088 = vadd.f32 0.0, %v2087
      %v2089 = vpop.f32.mrf.mxu0
      %v2090 = vadd.f32 0.0, %v2089
      %2091 = vmatmul.bf16.gmra.mxu0 %v2045
      %v2092 = vpop.f32.mrf.mxu0
      %v2093 = vadd.f32 0.0, %v2092
      %v2094 = vpop.f32.mrf.mxu0
      %v2095 = vadd.f32 0.0, %v2094
      %2096 = vmatmul.bf16.gmra.mxu0 %v2049
      %v2097 = vpop.f32.mrf.mxu0
      %v2098 = vadd.f32 0.0, %v2097
      %v2099 = vpop.f32.mrf.mxu0
      %v2100 = vadd.f32 0.0, %v2099
      %2101 = vdwg.mxu0
      %2102 = vmatpush.bf16.msra.mxu0 %v701
      %2103 = vmatpush.bf16.msra.mxu0 %v698
      %2104 = vmatpush.bf16.msra.mxu0 %v695
      %2105 = vmatpush.bf16.msra.mxu0 %v692
      %2106 = vmatpush.bf16.msra.mxu0 %v689
      %2107 = vmatpush.bf16.msra.mxu0 %v686
      %2108 = vmatpush.bf16.msra.mxu0 %v683
      %2109 = vmatpush.bf16.msra.mxu0 %v680
      %2110 = vmatmul.bf16.gmra.mxu0 %v2022
      %v2111 = vpop.f32.mrf.mxu0
      %v2112 = vadd.f32 %v2063, %v2111
      %v2113 = vpop.f32.mrf.mxu0
      %v2114 = vadd.f32 %v2065, %v2113
      %2115 = vmatmul.bf16.gmra.mxu0 %v2026
      %v2116 = vpop.f32.mrf.mxu0
      %v2117 = vadd.f32 %v2068, %v2116
      %v2118 = vpop.f32.mrf.mxu0
      %v2119 = vadd.f32 %v2070, %v2118
      %2120 = vmatmul.bf16.gmra.mxu0 %v2030
      %v2121 = vpop.f32.mrf.mxu0
      %v2122 = vadd.f32 %v2073, %v2121
      %v2123 = vpop.f32.mrf.mxu0
      %v2124 = vadd.f32 %v2075, %v2123
      %2125 = vmatmul.bf16.gmra.mxu0 %v2034
      %v2126 = vpop.f32.mrf.mxu0
      %v2127 = vadd.f32 %v2078, %v2126
      %v2128 = vpop.f32.mrf.mxu0
      %v2129 = vadd.f32 %v2080, %v2128
      %2130 = vmatmul.bf16.gmra.mxu0 %v2038
      %v2131 = vpop.f32.mrf.mxu0
      %v2132 = vadd.f32 %v2083, %v2131
      %v2133 = vpop.f32.mrf.mxu0
      %v2134 = vadd.f32 %v2085, %v2133
      %2135 = vmatmul.bf16.gmra.mxu0 %v2042
      %v2136 = vpop.f32.mrf.mxu0
      %v2137 = vadd.f32 %v2088, %v2136
      %v2138 = vpop.f32.mrf.mxu0
      %v2139 = vadd.f32 %v2090, %v2138
      %2140 = vmatmul.bf16.gmra.mxu0 %v2046
      %v2141 = vpop.f32.mrf.mxu0
      %v2142 = vadd.f32 %v2093, %v2141
      %v2143 = vpop.f32.mrf.mxu0
      %v2144 = vadd.f32 %v2095, %v2143
      %2145 = vmatmul.bf16.gmra.mxu0 %v2050
      %v2146 = vpop.f32.mrf.mxu0
      %v2147 = vadd.f32 %v2098, %v2146
      %v2148 = vpop.f32.mrf.mxu0
      %v2149 = vadd.f32 %v2100, %v2148
      %2150 = vdwg.mxu0
      %2151 = vmatpush.bf16.msra.mxu0 %v858
      %2152 = vmatpush.bf16.msra.mxu0 %v855
      %2153 = vmatpush.bf16.msra.mxu0 %v852
      %2154 = vmatpush.bf16.msra.mxu0 %v849
      %2155 = vmatpush.bf16.msra.mxu0 %v846
      %2156 = vmatpush.bf16.msra.mxu0 %v843
      %2157 = vmatpush.bf16.msra.mxu0 %v840
      %2158 = vmatpush.bf16.msra.mxu0 %v837
      %2159 = vmatmul.bf16.gmra.mxu0 %v2023
      %v2160 = vpop.f32.mrf.mxu0
      %v2161 = vadd.f32 %v2112, %v2160
      %v2162 = vpop.f32.mrf.mxu0
      %v2163 = vadd.f32 %v2114, %v2162
      %2164 = vmatmul.bf16.gmra.mxu0 %v2027
      %v2165 = vpop.f32.mrf.mxu0
      %v2166 = vadd.f32 %v2117, %v2165
      %v2167 = vpop.f32.mrf.mxu0
      %v2168 = vadd.f32 %v2119, %v2167
      %2169 = vmatmul.bf16.gmra.mxu0 %v2031
      %v2170 = vpop.f32.mrf.mxu0
      %v2171 = vadd.f32 %v2122, %v2170
      %v2172 = vpop.f32.mrf.mxu0
      %v2173 = vadd.f32 %v2124, %v2172
      %2174 = vmatmul.bf16.gmra.mxu0 %v2035
      %v2175 = vpop.f32.mrf.mxu0
      %v2176 = vadd.f32 %v2127, %v2175
      %v2177 = vpop.f32.mrf.mxu0
      %v2178 = vadd.f32 %v2129, %v2177
      %2179 = vmatmul.bf16.gmra.mxu0 %v2039
      %v2180 = vpop.f32.mrf.mxu0
      %v2181 = vadd.f32 %v2132, %v2180
      %v2182 = vpop.f32.mrf.mxu0
      %v2183 = vadd.f32 %v2134, %v2182
      %2184 = vmatmul.bf16.gmra.mxu0 %v2043
      %v2185 = vpop.f32.mrf.mxu0
      %v2186 = vadd.f32 %v2137, %v2185
      %v2187 = vpop.f32.mrf.mxu0
      %v2188 = vadd.f32 %v2139, %v2187
      %2189 = vmatmul.bf16.gmra.mxu0 %v2047
      %v2190 = vpop.f32.mrf.mxu0
      %v2191 = vadd.f32 %v2142, %v2190
      %v2192 = vpop.f32.mrf.mxu0
      %v2193 = vadd.f32 %v2144, %v2192
      %2194 = vmatmul.bf16.gmra.mxu0 %v2051
      %v2195 = vpop.f32.mrf.mxu0
      %v2196 = vadd.f32 %v2147, %v2195
      %v2197 = vpop.f32.mrf.mxu0
      %v2198 = vadd.f32 %v2149, %v2197
      %2199 = vdwg.mxu0
      %2200 = vmatpush.bf16.msra.mxu0 %v1015
      %2201 = vmatpush.bf16.msra.mxu0 %v1012
      %2202 = vmatpush.bf16.msra.mxu0 %v1009
      %2203 = vmatpush.bf16.msra.mxu0 %v1006
      %2204 = vmatpush.bf16.msra.mxu0 %v1003
      %2205 = vmatpush.bf16.msra.mxu0 %v1000
      %2206 = vmatpush.bf16.msra.mxu0 %v997
      %2207 = vmatpush.bf16.msra.mxu0 %v994
      %2208 = vmatmul.bf16.gmra.mxu0 %v2024
      %v2209 = vpop.f32.mrf.mxu0
      %v2210 = vadd.f32 %v2161, %v2209
      %v2211 = vpop.f32.mrf.mxu0
      %v2212 = vadd.f32 %v2163, %v2211
      %2213 = vmatmul.bf16.gmra.mxu0 %v2028
      %v2214 = vpop.f32.mrf.mxu0
      %v2215 = vadd.f32 %v2166, %v2214
      %v2216 = vpop.f32.mrf.mxu0
      %v2217 = vadd.f32 %v2168, %v2216
      %2218 = vmatmul.bf16.gmra.mxu0 %v2032
      %v2219 = vpop.f32.mrf.mxu0
      %v2220 = vadd.f32 %v2171, %v2219
      %v2221 = vpop.f32.mrf.mxu0
      %v2222 = vadd.f32 %v2173, %v2221
      %2223 = vmatmul.bf16.gmra.mxu0 %v2036
      %v2224 = vpop.f32.mrf.mxu0
      %v2225 = vadd.f32 %v2176, %v2224
      %v2226 = vpop.f32.mrf.mxu0
      %v2227 = vadd.f32 %v2178, %v2226
      %2228 = vmatmul.bf16.gmra.mxu0 %v2040
      %v2229 = vpop.f32.mrf.mxu0
      %v2230 = vadd.f32 %v2181, %v2229
      %v2231 = vpop.f32.mrf.mxu0
      %v2232 = vadd.f32 %v2183, %v2231
      %2233 = vmatmul.bf16.gmra.mxu0 %v2044
      %v2234 = vpop.f32.mrf.mxu0
      %v2235 = vadd.f32 %v2186, %v2234
      %v2236 = vpop.f32.mrf.mxu0
      %v2237 = vadd.f32 %v2188, %v2236
      %2238 = vmatmul.bf16.gmra.mxu0 %v2048
      %v2239 = vpop.f32.mrf.mxu0
      %v2240 = vadd.f32 %v2191, %v2239
      %v2241 = vpop.f32.mrf.mxu0
      %v2242 = vadd.f32 %v2193, %v2241
      %2243 = vmatmul.bf16.gmra.mxu0 %v2052
      %v2244 = vpop.f32.mrf.mxu0
      %v2245 = vadd.f32 %v2196, %v2244
      %v2246 = vpop.f32.mrf.mxu0
      %v2247 = vadd.f32 %v2198, %v2246
      %2248 = vdwg.mxu0
      %v2249 = vmax.f32 %v2210, 1e-30
      %v2250 = vmax.f32 %v2212, 1e-30
      %v2251 = vmax.f32 %v2215, 1e-30
      %v2252 = vmax.f32 %v2217, 1e-30
      %v2253 = vmax.f32 %v2220, 1e-30
      %v2254 = vmax.f32 %v2222, 1e-30
      %v2255 = vmax.f32 %v2225, 1e-30
      %v2256 = vmax.f32 %v2227, 1e-30
      %v2257 = vmax.f32 %v2230, 1e-30
      %v2258 = vmax.f32 %v2232, 1e-30
      %v2259 = vmax.f32 %v2235, 1e-30
      %v2260 = vmax.f32 %v2237, 1e-30
      %v2261 = vmax.f32 %v2240, 1e-30
      %v2262 = vmax.f32 %v2242, 1e-30
      %v2263 = vmax.f32 %v2245, 1e-30
      %v2264 = vmax.f32 %v2247, 1e-30
      %v2265 = vrcp.pop %v2249
      %v2266 = vrcp.pop %v2250
      %v2267 = vrcp.pop %v2251
      %v2268 = vrcp.pop %v2252
      %v2269 = vrcp.pop %v2253
      %v2270 = vrcp.pop %v2254
      %v2271 = vrcp.pop %v2255
      %v2272 = vrcp.pop %v2256
      %v2273 = vrcp.pop %v2257
      %v2274 = vrcp.pop %v2258
      %v2275 = vrcp.pop %v2259
      %v2276 = vrcp.pop %v2260
      %v2277 = vrcp.pop %v2261
      %v2278 = vrcp.pop %v2262
      %v2279 = vrcp.pop %v2263
      %v2280 = vrcp.pop %v2264
      %2297 = vrot.lane.b32.xlu0 %v2265, 96
      %v2298 = vpop.permute.xlu0 %2297
      %2299 = vrot.lane.b32.xlu0 %v2266, 96
      %v2300 = vpop.permute.xlu0 %2299
      %2301 = vrot.lane.b32.xlu0 %v2267, 96
      %v2302 = vpop.permute.xlu0 %2301
      %2303 = vrot.lane.b32.xlu0 %v2268, 96
      %v2304 = vpop.permute.xlu0 %2303
      %2305 = vrot.lane.b32.xlu0 %v2269, 96
      %v2306 = vpop.permute.xlu0 %2305
      %2307 = vrot.lane.b32.xlu0 %v2270, 96
      %v2308 = vpop.permute.xlu0 %2307
      %2309 = vrot.lane.b32.xlu0 %v2271, 96
      %v2310 = vpop.permute.xlu0 %2309
      %2311 = vrot.lane.b32.xlu0 %v2272, 96
      %v2312 = vpop.permute.xlu0 %2311
      %2313 = vrot.lane.b32.xlu0 %v2273, 96
      %v2314 = vpop.permute.xlu0 %2313
      %2315 = vrot.lane.b32.xlu0 %v2274, 96
      %v2316 = vpop.permute.xlu0 %2315
      %2317 = vrot.lane.b32.xlu0 %v2275, 96
      %v2318 = vpop.permute.xlu0 %2317
      %2319 = vrot.lane.b32.xlu0 %v2276, 96
      %v2320 = vpop.permute.xlu0 %2319
      %2321 = vrot.lane.b32.xlu0 %v2277, 96
      %v2322 = vpop.permute.xlu0 %2321
      %2323 = vrot.lane.b32.xlu0 %v2278, 96
      %v2324 = vpop.permute.xlu0 %2323
      %2325 = vrot.lane.b32.xlu0 %v2279, 96
      %v2326 = vpop.permute.xlu0 %2325
      %2327 = vrot.lane.b32.xlu0 %v2280, 96
      %v2328 = vpop.permute.xlu0 %2327
      %v2345 = vmul.f32 %v2210, %v2298
      %v2346 = vmul.f32 %v2212, %v2300
      %v2347 = vmul.f32 %v2215, %v2302
      %v2348 = vmul.f32 %v2217, %v2304
      %v2349 = vmul.f32 %v2220, %v2306
      %v2350 = vmul.f32 %v2222, %v2308
      %v2351 = vmul.f32 %v2225, %v2310
      %v2352 = vmul.f32 %v2227, %v2312
      %v2353 = vmul.f32 %v2230, %v2314
      %v2354 = vmul.f32 %v2232, %v2316
      %v2355 = vmul.f32 %v2235, %v2318
      %v2356 = vmul.f32 %v2237, %v2320
      %v2357 = vmul.f32 %v2240, %v2322
      %v2358 = vmul.f32 %v2242, %v2324
      %v2359 = vmul.f32 %v2245, %v2326
      %v2360 = vmul.f32 %v2247, %v2328
      %v2361 = vpack.c.bf16 %v2346, %v2345
      %v2362 = vpack.c.bf16 %v2348, %v2347
      %v2363 = vpack.c.bf16 %v2350, %v2349
      %v2364 = vpack.c.bf16 %v2352, %v2351
      %v2365 = vpack.c.bf16 %v2354, %v2353
      %v2366 = vpack.c.bf16 %v2356, %v2355
      %v2367 = vpack.c.bf16 %v2358, %v2357
      %v2368 = vpack.c.bf16 %v2360, %v2359
      %v2369 = vperm.slane %v248, 0
      %2370 = vrot.lane.b32.xlu0 %v265, 32
      %v2371 = vpop.permute.xlu0 %2370
      %2372 = vrot.lane.b32.xlu0 %v266, 32
      %v2373 = vpop.permute.xlu0 %2372
      %v2377 = vsel %vm269, %v2361, 0
      %v2380 = vsel %vm269, %v2362, 0
      %v2383 = vsel %vm269, %v2363, 0
      %v2386 = vsel %vm269, %v2364, 0
      %v2389 = vsel %vm269, %v2365, 0
      %v2392 = vsel %vm269, %v2366, 0
      %v2395 = vsel %vm269, %v2367, 0
      %v2398 = vsel %vm269, %v2368, 0
      %2400 = vmatpush.bf16.msra.mxu0 0
      %2401 = vmatpush.bf16.msra.mxu0 0
      %2402 = vmatpush.bf16.msra.mxu0 0
      %2403 = vmatpush.bf16.msra.mxu0 0
      %2404 = vmatpush.bf16.msra.mxu0 0
      %2405 = vmatpush.bf16.msra.mxu0 0
      %2406 = vmatpush.bf16.msra.mxu0 %v2373
      %2407 = vmatpush.bf16.msra.mxu0 %v2371
      %2408 = vmatmul.bf16.gmra.mxu0 %v2377
      %v2409 = vpop.f32.mrf.mxu0
      %v2410 = vadd.f32 %v2369, %v2409
      %v2411 = vpop.f32.mrf.mxu0
      %v2412 = vadd.f32 %v2369, %v2411
      %2413 = vmatmul.bf16.gmra.mxu0 %v2380
      %v2414 = vpop.f32.mrf.mxu0
      %v2415 = vadd.f32 %v2369, %v2414
      %v2416 = vpop.f32.mrf.mxu0
      %v2417 = vadd.f32 %v2369, %v2416
      %2418 = vmatmul.bf16.gmra.mxu0 %v2383
      %v2419 = vpop.f32.mrf.mxu0
      %v2420 = vadd.f32 %v2369, %v2419
      %v2421 = vpop.f32.mrf.mxu0
      %v2422 = vadd.f32 %v2369, %v2421
      %2423 = vmatmul.bf16.gmra.mxu0 %v2386
      %v2424 = vpop.f32.mrf.mxu0
      %v2425 = vadd.f32 %v2369, %v2424
      %v2426 = vpop.f32.mrf.mxu0
      %v2427 = vadd.f32 %v2369, %v2426
      %2428 = vmatmul.bf16.gmra.mxu0 %v2389
      %v2429 = vpop.f32.mrf.mxu0
      %v2430 = vadd.f32 %v2369, %v2429
      %v2431 = vpop.f32.mrf.mxu0
      %v2432 = vadd.f32 %v2369, %v2431
      %2433 = vmatmul.bf16.gmra.mxu0 %v2392
      %v2434 = vpop.f32.mrf.mxu0
      %v2435 = vadd.f32 %v2369, %v2434
      %v2436 = vpop.f32.mrf.mxu0
      %v2437 = vadd.f32 %v2369, %v2436
      %2438 = vmatmul.bf16.gmra.mxu0 %v2395
      %v2439 = vpop.f32.mrf.mxu0
      %v2440 = vadd.f32 %v2369, %v2439
      %v2441 = vpop.f32.mrf.mxu0
      %v2442 = vadd.f32 %v2369, %v2441
      %2443 = vmatmul.bf16.gmra.mxu0 %v2398
      %v2444 = vpop.f32.mrf.mxu0
      %v2445 = vadd.f32 %v2369, %v2444
      %v2446 = vpop.f32.mrf.mxu0
      %v2447 = vadd.f32 %v2369, %v2446
      %2448 = vdwg.mxu0
      %v2449 = vadd.f32 %v202, %v2410
      %v2450 = vadd.f32 %v203, %v2412
      %v2451 = vadd.f32 %v204, %v2415
      %v2452 = vadd.f32 %v205, %v2417
      %v2453 = vadd.f32 %v206, %v2420
      %v2454 = vadd.f32 %v207, %v2422
      %v2455 = vadd.f32 %v208, %v2425
      %v2456 = vadd.f32 %v209, %v2427
      %v2457 = vadd.f32 %v210, %v2430
      %v2458 = vadd.f32 %v211, %v2432
      %v2459 = vadd.f32 %v212, %v2435
      %v2460 = vadd.f32 %v213, %v2437
      %v2461 = vadd.f32 %v214, %v2440
      %v2462 = vadd.f32 %v215, %v2442
      %v2463 = vadd.f32 %v216, %v2445
      %v2464 = vadd.f32 %v217, %v2447
      %v2465 = vsel %vm269, %v2449, 0.0
      %2466 = vadd.xlane.f32.xlu0 %v2465
      %v2467 = vpop.xlane.xlu0 %2466
      %v2468 = vsel %vm269, %v2450, 0.0
      %2469 = vadd.xlane.f32.xlu0 %v2468
      %v2470 = vpop.xlane.xlu0 %2469
      %v2471 = vsel %vm269, %v2451, 0.0
      %2472 = vadd.xlane.f32.xlu0 %v2471
      %v2473 = vpop.xlane.xlu0 %2472
      %v2474 = vsel %vm269, %v2452, 0.0
      %2475 = vadd.xlane.f32.xlu0 %v2474
      %v2476 = vpop.xlane.xlu0 %2475
      %v2477 = vsel %vm269, %v2453, 0.0
      %2478 = vadd.xlane.f32.xlu0 %v2477
      %v2479 = vpop.xlane.xlu0 %2478
      %v2480 = vsel %vm269, %v2454, 0.0
      %2481 = vadd.xlane.f32.xlu0 %v2480
      %v2482 = vpop.xlane.xlu0 %2481
      %v2483 = vsel %vm269, %v2455, 0.0
      %2484 = vadd.xlane.f32.xlu0 %v2483
      %v2485 = vpop.xlane.xlu0 %2484
      %v2486 = vsel %vm269, %v2456, 0.0
      %2487 = vadd.xlane.f32.xlu0 %v2486
      %v2488 = vpop.xlane.xlu0 %2487
      %v2489 = vsel %vm269, %v2457, 0.0
      %2490 = vadd.xlane.f32.xlu0 %v2489
      %v2491 = vpop.xlane.xlu0 %2490
      %v2492 = vsel %vm269, %v2458, 0.0
      %2493 = vadd.xlane.f32.xlu0 %v2492
      %v2494 = vpop.xlane.xlu0 %2493
      %v2495 = vsel %vm269, %v2459, 0.0
      %2496 = vadd.xlane.f32.xlu0 %v2495
      %v2497 = vpop.xlane.xlu0 %2496
      %v2498 = vsel %vm269, %v2460, 0.0
      %2499 = vadd.xlane.f32.xlu0 %v2498
      %v2500 = vpop.xlane.xlu0 %2499
      %v2501 = vsel %vm269, %v2461, 0.0
      %2502 = vadd.xlane.f32.xlu0 %v2501
      %v2503 = vpop.xlane.xlu0 %2502
      %v2504 = vsel %vm269, %v2462, 0.0
      %2505 = vadd.xlane.f32.xlu0 %v2504
      %v2506 = vpop.xlane.xlu0 %2505
      %v2507 = vsel %vm269, %v2463, 0.0
      %2508 = vadd.xlane.f32.xlu0 %v2507
      %v2509 = vpop.xlane.xlu0 %2508
      %v2510 = vsel %vm269, %v2464, 0.0
      %2511 = vadd.xlane.f32.xlu0 %v2510
      %v2512 = vpop.xlane.xlu0 %2511
      %v2513 = vrcp.pop 32.0
      %v2514 = vmul.f32 32.0, %v2513
      %v2515 = vsub.f32 1.0, %v2514
      %v2516 = vmul.f32 %v2513, %v2515
      %v2517 = vadd.f32 %v2513, %v2516
      %vm2518 = vweird.f32 %v2513
      %v2519 = vsel %vm2518, %v2513, %v2517
      %v2520 = vmul.f32 %v2467, %v2519
      %v2521 = vmul.f32 %v2470, %v2519
      %v2522 = vmul.f32 %v2473, %v2519
      %v2523 = vmul.f32 %v2476, %v2519
      %v2524 = vmul.f32 %v2479, %v2519
      %v2525 = vmul.f32 %v2482, %v2519
      %v2526 = vmul.f32 %v2485, %v2519
      %v2527 = vmul.f32 %v2488, %v2519
      %v2528 = vmul.f32 %v2491, %v2519
      %v2529 = vmul.f32 %v2494, %v2519
      %v2530 = vmul.f32 %v2497, %v2519
      %v2531 = vmul.f32 %v2500, %v2519
      %v2532 = vmul.f32 %v2503, %v2519
      %v2533 = vmul.f32 %v2506, %v2519
      %v2534 = vmul.f32 %v2509, %v2519
      %v2535 = vmul.f32 %v2512, %v2519
      %v2536 = vsub.f32 %v2449, %v2520
      %v2537 = vsub.f32 %v2450, %v2521
      %v2538 = vsub.f32 %v2451, %v2522
      %v2539 = vsub.f32 %v2452, %v2523
      %v2540 = vsub.f32 %v2453, %v2524
      %v2541 = vsub.f32 %v2454, %v2525
      %v2542 = vsub.f32 %v2455, %v2526
      %v2543 = vsub.f32 %v2456, %v2527
      %v2544 = vsub.f32 %v2457, %v2528
      %v2545 = vsub.f32 %v2458, %v2529
      %v2546 = vsub.f32 %v2459, %v2530
      %v2547 = vsub.f32 %v2460, %v2531
      %v2548 = vsub.f32 %v2461, %v2532
      %v2549 = vsub.f32 %v2462, %v2533
      %v2550 = vsub.f32 %v2463, %v2534
      %v2551 = vsub.f32 %v2464, %v2535
      %v2552 = vmul.f32 %v2536, %v2536
      %v2553 = vmul.f32 %v2537, %v2537
      %v2554 = vmul.f32 %v2538, %v2538
      %v2555 = vmul.f32 %v2539, %v2539
      %v2556 = vmul.f32 %v2540, %v2540
      %v2557 = vmul.f32 %v2541, %v2541
      %v2558 = vmul.f32 %v2542, %v2542
      %v2559 = vmul.f32 %v2543, %v2543
      %v2560 = vmul.f32 %v2544, %v2544
      %v2561 = vmul.f32 %v2545, %v2545
      %v2562 = vmul.f32 %v2546, %v2546
      %v2563 = vmul.f32 %v2547, %v2547
      %v2564 = vmul.f32 %v2548, %v2548
      %v2565 = vmul.f32 %v2549, %v2549
      %v2566 = vmul.f32 %v2550, %v2550
      %v2567 = vmul.f32 %v2551, %v2551
      %v2568 = vsel %vm269, %v2552, 0.0
      %2569 = vadd.xlane.f32.xlu0 %v2568
      %v2570 = vpop.xlane.xlu0 %2569
      %v2571 = vsel %vm269, %v2553, 0.0
      %2572 = vadd.xlane.f32.xlu0 %v2571
      %v2573 = vpop.xlane.xlu0 %2572
      %v2574 = vsel %vm269, %v2554, 0.0
      %2575 = vadd.xlane.f32.xlu0 %v2574
      %v2576 = vpop.xlane.xlu0 %2575
      %v2577 = vsel %vm269, %v2555, 0.0
      %2578 = vadd.xlane.f32.xlu0 %v2577
      %v2579 = vpop.xlane.xlu0 %2578
      %v2580 = vsel %vm269, %v2556, 0.0
      %2581 = vadd.xlane.f32.xlu0 %v2580
      %v2582 = vpop.xlane.xlu0 %2581
      %v2583 = vsel %vm269, %v2557, 0.0
      %2584 = vadd.xlane.f32.xlu0 %v2583
      %v2585 = vpop.xlane.xlu0 %2584
      %v2586 = vsel %vm269, %v2558, 0.0
      %2587 = vadd.xlane.f32.xlu0 %v2586
      %v2588 = vpop.xlane.xlu0 %2587
      %v2589 = vsel %vm269, %v2559, 0.0
      %2590 = vadd.xlane.f32.xlu0 %v2589
      %v2591 = vpop.xlane.xlu0 %2590
      %v2592 = vsel %vm269, %v2560, 0.0
      %2593 = vadd.xlane.f32.xlu0 %v2592
      %v2594 = vpop.xlane.xlu0 %2593
      %v2595 = vsel %vm269, %v2561, 0.0
      %2596 = vadd.xlane.f32.xlu0 %v2595
      %v2597 = vpop.xlane.xlu0 %2596
      %v2598 = vsel %vm269, %v2562, 0.0
      %2599 = vadd.xlane.f32.xlu0 %v2598
      %v2600 = vpop.xlane.xlu0 %2599
      %v2601 = vsel %vm269, %v2563, 0.0
      %2602 = vadd.xlane.f32.xlu0 %v2601
      %v2603 = vpop.xlane.xlu0 %2602
      %v2604 = vsel %vm269, %v2564, 0.0
      %2605 = vadd.xlane.f32.xlu0 %v2604
      %v2606 = vpop.xlane.xlu0 %2605
      %v2607 = vsel %vm269, %v2565, 0.0
      %2608 = vadd.xlane.f32.xlu0 %v2607
      %v2609 = vpop.xlane.xlu0 %2608
      %v2610 = vsel %vm269, %v2566, 0.0
      %2611 = vadd.xlane.f32.xlu0 %v2610
      %v2612 = vpop.xlane.xlu0 %2611
      %v2613 = vsel %vm269, %v2567, 0.0
      %2614 = vadd.xlane.f32.xlu0 %v2613
      %v2615 = vpop.xlane.xlu0 %2614
      %v2616 = vmul.f32 %v2570, %v2519
      %v2617 = vmul.f32 %v2573, %v2519
      %v2618 = vmul.f32 %v2576, %v2519
      %v2619 = vmul.f32 %v2579, %v2519
      %v2620 = vmul.f32 %v2582, %v2519
      %v2621 = vmul.f32 %v2585, %v2519
      %v2622 = vmul.f32 %v2588, %v2519
      %v2623 = vmul.f32 %v2591, %v2519
      %v2624 = vmul.f32 %v2594, %v2519
      %v2625 = vmul.f32 %v2597, %v2519
      %v2626 = vmul.f32 %v2600, %v2519
      %v2627 = vmul.f32 %v2603, %v2519
      %v2628 = vmul.f32 %v2606, %v2519
      %v2629 = vmul.f32 %v2609, %v2519
      %v2630 = vmul.f32 %v2612, %v2519
      %v2631 = vmul.f32 %v2615, %v2519
      %v2632 = vadd.f32 %v2616, 1e-05
      %v2633 = vadd.f32 %v2617, 1e-05
      %v2634 = vadd.f32 %v2618, 1e-05
      %v2635 = vadd.f32 %v2619, 1e-05
      %v2636 = vadd.f32 %v2620, 1e-05
      %v2637 = vadd.f32 %v2621, 1e-05
      %v2638 = vadd.f32 %v2622, 1e-05
      %v2639 = vadd.f32 %v2623, 1e-05
      %v2640 = vadd.f32 %v2624, 1e-05
      %v2641 = vadd.f32 %v2625, 1e-05
      %v2642 = vadd.f32 %v2626, 1e-05
      %v2643 = vadd.f32 %v2627, 1e-05
      %v2644 = vadd.f32 %v2628, 1e-05
      %v2645 = vadd.f32 %v2629, 1e-05
      %v2646 = vadd.f32 %v2630, 1e-05
      %v2647 = vadd.f32 %v2631, 1e-05
      %v2648 = vrsqrt.pop %v2632
      %v2649 = vmul.f32 %v2648, %v2632
      %v2650 = vmul.f32 %v2649, %v2648
      %v2651 = vmul.f32 0.5, %v2650
      %v2652 = vsub.f32 1.5, %v2651
      %v2653 = vmul.f32 %v2648, %v2652
      %vm2654 = vweird.f32 %v2632
      %vm2655 = vweird.f32 %v2648
      %vm2656 = vmor %vm2654, %vm2655
      %v2657 = vsel %vm2656, %v2648, %v2653
      %v2658 = vrsqrt.pop %v2633
      %v2659 = vmul.f32 %v2658, %v2633
      %v2660 = vmul.f32 %v2659, %v2658
      %v2661 = vmul.f32 0.5, %v2660
      %v2662 = vsub.f32 1.5, %v2661
      %v2663 = vmul.f32 %v2658, %v2662
      %vm2664 = vweird.f32 %v2633
      %vm2665 = vweird.f32 %v2658
      %vm2666 = vmor %vm2664, %vm2665
      %v2667 = vsel %vm2666, %v2658, %v2663
      %v2668 = vrsqrt.pop %v2634
      %v2669 = vmul.f32 %v2668, %v2634
      %v2670 = vmul.f32 %v2669, %v2668
      %v2671 = vmul.f32 0.5, %v2670
      %v2672 = vsub.f32 1.5, %v2671
      %v2673 = vmul.f32 %v2668, %v2672
      %vm2674 = vweird.f32 %v2634
      %vm2675 = vweird.f32 %v2668
      %vm2676 = vmor %vm2674, %vm2675
      %v2677 = vsel %vm2676, %v2668, %v2673
      %v2678 = vrsqrt.pop %v2635
      %v2679 = vmul.f32 %v2678, %v2635
      %v2680 = vmul.f32 %v2679, %v2678
      %v2681 = vmul.f32 0.5, %v2680
      %v2682 = vsub.f32 1.5, %v2681
      %v2683 = vmul.f32 %v2678, %v2682
      %vm2684 = vweird.f32 %v2635
      %vm2685 = vweird.f32 %v2678
      %vm2686 = vmor %vm2684, %vm2685
      %v2687 = vsel %vm2686, %v2678, %v2683
      %v2688 = vrsqrt.pop %v2636
      %v2689 = vmul.f32 %v2688, %v2636
      %v2690 = vmul.f32 %v2689, %v2688
      %v2691 = vmul.f32 0.5, %v2690
      %v2692 = vsub.f32 1.5, %v2691
      %v2693 = vmul.f32 %v2688, %v2692
      %vm2694 = vweird.f32 %v2636
      %vm2695 = vweird.f32 %v2688
      %vm2696 = vmor %vm2694, %vm2695
      %v2697 = vsel %vm2696, %v2688, %v2693
      %v2698 = vrsqrt.pop %v2637
      %v2699 = vmul.f32 %v2698, %v2637
      %v2700 = vmul.f32 %v2699, %v2698
      %v2701 = vmul.f32 0.5, %v2700
      %v2702 = vsub.f32 1.5, %v2701
      %v2703 = vmul.f32 %v2698, %v2702
      %vm2704 = vweird.f32 %v2637
      %vm2705 = vweird.f32 %v2698
      %vm2706 = vmor %vm2704, %vm2705
      %v2707 = vsel %vm2706, %v2698, %v2703
      %v2708 = vrsqrt.pop %v2638
      %v2709 = vmul.f32 %v2708, %v2638
      %v2710 = vmul.f32 %v2709, %v2708
      %v2711 = vmul.f32 0.5, %v2710
      %v2712 = vsub.f32 1.5, %v2711
      %v2713 = vmul.f32 %v2708, %v2712
      %vm2714 = vweird.f32 %v2638
      %vm2715 = vweird.f32 %v2708
      %vm2716 = vmor %vm2714, %vm2715
      %v2717 = vsel %vm2716, %v2708, %v2713
      %v2718 = vrsqrt.pop %v2639
      %v2719 = vmul.f32 %v2718, %v2639
      %v2720 = vmul.f32 %v2719, %v2718
      %v2721 = vmul.f32 0.5, %v2720
      %v2722 = vsub.f32 1.5, %v2721
      %v2723 = vmul.f32 %v2718, %v2722
      %vm2724 = vweird.f32 %v2639
      %vm2725 = vweird.f32 %v2718
      %vm2726 = vmor %vm2724, %vm2725
      %v2727 = vsel %vm2726, %v2718, %v2723
      %v2728 = vrsqrt.pop %v2640
      %v2729 = vmul.f32 %v2728, %v2640
      %v2730 = vmul.f32 %v2729, %v2728
      %v2731 = vmul.f32 0.5, %v2730
      %v2732 = vsub.f32 1.5, %v2731
      %v2733 = vmul.f32 %v2728, %v2732
      %vm2734 = vweird.f32 %v2640
      %vm2735 = vweird.f32 %v2728
      %vm2736 = vmor %vm2734, %vm2735
      %v2737 = vsel %vm2736, %v2728, %v2733
      %v2738 = vrsqrt.pop %v2641
      %v2739 = vmul.f32 %v2738, %v2641
      %v2740 = vmul.f32 %v2739, %v2738
      %v2741 = vmul.f32 0.5, %v2740
      %v2742 = vsub.f32 1.5, %v2741
      %v2743 = vmul.f32 %v2738, %v2742
      %vm2744 = vweird.f32 %v2641
      %vm2745 = vweird.f32 %v2738
      %vm2746 = vmor %vm2744, %vm2745
      %v2747 = vsel %vm2746, %v2738, %v2743
      %v2748 = vrsqrt.pop %v2642
      %v2749 = vmul.f32 %v2748, %v2642
      %v2750 = vmul.f32 %v2749, %v2748
      %v2751 = vmul.f32 0.5, %v2750
      %v2752 = vsub.f32 1.5, %v2751
      %v2753 = vmul.f32 %v2748, %v2752
      %vm2754 = vweird.f32 %v2642
      %vm2755 = vweird.f32 %v2748
      %vm2756 = vmor %vm2754, %vm2755
      %v2757 = vsel %vm2756, %v2748, %v2753
      %v2758 = vrsqrt.pop %v2643
      %v2759 = vmul.f32 %v2758, %v2643
      %v2760 = vmul.f32 %v2759, %v2758
      %v2761 = vmul.f32 0.5, %v2760
      %v2762 = vsub.f32 1.5, %v2761
      %v2763 = vmul.f32 %v2758, %v2762
      %vm2764 = vweird.f32 %v2643
      %vm2765 = vweird.f32 %v2758
      %vm2766 = vmor %vm2764, %vm2765
      %v2767 = vsel %vm2766, %v2758, %v2763
      %v2768 = vrsqrt.pop %v2644
      %v2769 = vmul.f32 %v2768, %v2644
      %v2770 = vmul.f32 %v2769, %v2768
      %v2771 = vmul.f32 0.5, %v2770
      %v2772 = vsub.f32 1.5, %v2771
      %v2773 = vmul.f32 %v2768, %v2772
      %vm2774 = vweird.f32 %v2644
      %vm2775 = vweird.f32 %v2768
      %vm2776 = vmor %vm2774, %vm2775
      %v2777 = vsel %vm2776, %v2768, %v2773
      %v2778 = vrsqrt.pop %v2645
      %v2779 = vmul.f32 %v2778, %v2645
      %v2780 = vmul.f32 %v2779, %v2778
      %v2781 = vmul.f32 0.5, %v2780
      %v2782 = vsub.f32 1.5, %v2781
      %v2783 = vmul.f32 %v2778, %v2782
      %vm2784 = vweird.f32 %v2645
      %vm2785 = vweird.f32 %v2778
      %vm2786 = vmor %vm2784, %vm2785
      %v2787 = vsel %vm2786, %v2778, %v2783
      %v2788 = vrsqrt.pop %v2646
      %v2789 = vmul.f32 %v2788, %v2646
      %v2790 = vmul.f32 %v2789, %v2788
      %v2791 = vmul.f32 0.5, %v2790
      %v2792 = vsub.f32 1.5, %v2791
      %v2793 = vmul.f32 %v2788, %v2792
      %vm2794 = vweird.f32 %v2646
      %vm2795 = vweird.f32 %v2788
      %vm2796 = vmor %vm2794, %vm2795
      %v2797 = vsel %vm2796, %v2788, %v2793
      %v2798 = vrsqrt.pop %v2647
      %v2799 = vmul.f32 %v2798, %v2647
      %v2800 = vmul.f32 %v2799, %v2798
      %v2801 = vmul.f32 0.5, %v2800
      %v2802 = vsub.f32 1.5, %v2801
      %v2803 = vmul.f32 %v2798, %v2802
      %vm2804 = vweird.f32 %v2647
      %vm2805 = vweird.f32 %v2798
      %vm2806 = vmor %vm2804, %vm2805
      %v2807 = vsel %vm2806, %v2798, %v2803
      %v2808 = vmul.f32 %v2536, %v2657
      %v2809 = vmul.f32 %v2537, %v2667
      %v2810 = vmul.f32 %v2538, %v2677
      %v2811 = vmul.f32 %v2539, %v2687
      %v2812 = vmul.f32 %v2540, %v2697
      %v2813 = vmul.f32 %v2541, %v2707
      %v2814 = vmul.f32 %v2542, %v2717
      %v2815 = vmul.f32 %v2543, %v2727
      %v2816 = vmul.f32 %v2544, %v2737
      %v2817 = vmul.f32 %v2545, %v2747
      %v2818 = vmul.f32 %v2546, %v2757
      %v2819 = vmul.f32 %v2547, %v2767
      %v2820 = vmul.f32 %v2548, %v2777
      %v2821 = vmul.f32 %v2549, %v2787
      %v2822 = vmul.f32 %v2550, %v2797
      %v2823 = vmul.f32 %v2551, %v2807
      %v2824 = vperm.slane %v251, 0
      %v2825 = vmul.f32 %v2808, %v2824
      %v2826 = vmul.f32 %v2809, %v2824
      %v2827 = vmul.f32 %v2810, %v2824
      %v2828 = vmul.f32 %v2811, %v2824
      %v2829 = vmul.f32 %v2812, %v2824
      %v2830 = vmul.f32 %v2813, %v2824
      %v2831 = vmul.f32 %v2814, %v2824
      %v2832 = vmul.f32 %v2815, %v2824
      %v2833 = vmul.f32 %v2816, %v2824
      %v2834 = vmul.f32 %v2817, %v2824
      %v2835 = vmul.f32 %v2818, %v2824
      %v2836 = vmul.f32 %v2819, %v2824
      %v2837 = vmul.f32 %v2820, %v2824
      %v2838 = vmul.f32 %v2821, %v2824
      %v2839 = vmul.f32 %v2822, %v2824
      %v2840 = vmul.f32 %v2823, %v2824
      %v2841 = vperm.slane %v252, 0
      %v2842 = vadd.f32 %v2825, %v2841
      %v2843 = vadd.f32 %v2826, %v2841
      %v2844 = vadd.f32 %v2827, %v2841
      %v2845 = vadd.f32 %v2828, %v2841
      %v2846 = vadd.f32 %v2829, %v2841
      %v2847 = vadd.f32 %v2830, %v2841
      %v2848 = vadd.f32 %v2831, %v2841
      %v2849 = vadd.f32 %v2832, %v2841
      %v2850 = vadd.f32 %v2833, %v2841
      %v2851 = vadd.f32 %v2834, %v2841
      %v2852 = vadd.f32 %v2835, %v2841
      %v2853 = vadd.f32 %v2836, %v2841
      %v2854 = vadd.f32 %v2837, %v2841
      %v2855 = vadd.f32 %v2838, %v2841
      %v2856 = vadd.f32 %v2839, %v2841
      %v2857 = vadd.f32 %v2840, %v2841
      %v2858 = vpack.c.bf16 %v2843, %v2842
      %v2859 = vpack.c.bf16 %v2845, %v2844
      %v2860 = vpack.c.bf16 %v2847, %v2846
      %v2861 = vpack.c.bf16 %v2849, %v2848
      %v2862 = vpack.c.bf16 %v2851, %v2850
      %v2863 = vpack.c.bf16 %v2853, %v2852
      %v2864 = vpack.c.bf16 %v2855, %v2854
      %v2865 = vpack.c.bf16 %v2857, %v2856
      %v2866 = vperm.slane %v249, 0
      %v2871 = vunpack.c.l.b16 %v230
      %v2872 = vunpack.c.l.b16 %v231
      %v2873 = vunpack.c.l.b16 %v232
      %v2874 = vunpack.c.l.b16 %v233
      %v2875 = vpack.c.b16 %v2872, %v2871
      %v2876 = vpack.c.b16 %v2874, %v2873
      %v2880 = vsel %vm269, %v2858, 0
      %v2883 = vsel %vm269, %v2859, 0
      %v2886 = vsel %vm269, %v2860, 0
      %v2889 = vsel %vm269, %v2861, 0
      %v2892 = vsel %vm269, %v2862, 0
      %v2895 = vsel %vm269, %v2863, 0
      %v2898 = vsel %vm269, %v2864, 0
      %v2901 = vsel %vm269, %v2865, 0
      %2903 = vmatpush.bf16.msra.mxu0 0
      %2904 = vmatpush.bf16.msra.mxu0 0
      %2905 = vmatpush.bf16.msra.mxu0 0
      %2906 = vmatpush.bf16.msra.mxu0 0
      %2907 = vmatpush.bf16.msra.mxu0 0
      %2908 = vmatpush.bf16.msra.mxu0 0
      %2909 = vmatpush.bf16.msra.mxu0 %v2876
      %2910 = vmatpush.bf16.msra.mxu0 %v2875
      %2911 = vmatmul.bf16.gmra.mxu0 %v2880
      %v2912 = vpop.f32.mrf.mxu0
      %v2913 = vadd.f32 %v2866, %v2912
      %v2914 = vpop.f32.mrf.mxu0
      %v2915 = vadd.f32 %v2866, %v2914
      %2916 = vmatmul.bf16.gmra.mxu0 %v2883
      %v2917 = vpop.f32.mrf.mxu0
      %v2918 = vadd.f32 %v2866, %v2917
      %v2919 = vpop.f32.mrf.mxu0
      %v2920 = vadd.f32 %v2866, %v2919
      %2921 = vmatmul.bf16.gmra.mxu0 %v2886
      %v2922 = vpop.f32.mrf.mxu0
      %v2923 = vadd.f32 %v2866, %v2922
      %v2924 = vpop.f32.mrf.mxu0
      %v2925 = vadd.f32 %v2866, %v2924
      %2926 = vmatmul.bf16.gmra.mxu0 %v2889
      %v2927 = vpop.f32.mrf.mxu0
      %v2928 = vadd.f32 %v2866, %v2927
      %v2929 = vpop.f32.mrf.mxu0
      %v2930 = vadd.f32 %v2866, %v2929
      %2931 = vmatmul.bf16.gmra.mxu0 %v2892
      %v2932 = vpop.f32.mrf.mxu0
      %v2933 = vadd.f32 %v2866, %v2932
      %v2934 = vpop.f32.mrf.mxu0
      %v2935 = vadd.f32 %v2866, %v2934
      %2936 = vmatmul.bf16.gmra.mxu0 %v2895
      %v2937 = vpop.f32.mrf.mxu0
      %v2938 = vadd.f32 %v2866, %v2937
      %v2939 = vpop.f32.mrf.mxu0
      %v2940 = vadd.f32 %v2866, %v2939
      %2941 = vmatmul.bf16.gmra.mxu0 %v2898
      %v2942 = vpop.f32.mrf.mxu0
      %v2943 = vadd.f32 %v2866, %v2942
      %v2944 = vpop.f32.mrf.mxu0
      %v2945 = vadd.f32 %v2866, %v2944
      %2946 = vmatmul.bf16.gmra.mxu0 %v2901
      %v2947 = vpop.f32.mrf.mxu0
      %v2948 = vadd.f32 %v2866, %v2947
      %v2949 = vpop.f32.mrf.mxu0
      %v2950 = vadd.f32 %v2866, %v2949
      %2951 = vdwg.mxu0
      %v2952 = vmax.f32 %v2913, 0.0
      %v2953 = vmax.f32 %v2915, 0.0
      %v2954 = vmax.f32 %v2918, 0.0
      %v2955 = vmax.f32 %v2920, 0.0
      %v2956 = vmax.f32 %v2923, 0.0
      %v2957 = vmax.f32 %v2925, 0.0
      %v2958 = vmax.f32 %v2928, 0.0
      %v2959 = vmax.f32 %v2930, 0.0
      %v2960 = vmax.f32 %v2933, 0.0
      %v2961 = vmax.f32 %v2935, 0.0
      %v2962 = vmax.f32 %v2938, 0.0
      %v2963 = vmax.f32 %v2940, 0.0
      %v2964 = vmax.f32 %v2943, 0.0
      %v2965 = vmax.f32 %v2945, 0.0
      %v2966 = vmax.f32 %v2948, 0.0
      %v2967 = vmax.f32 %v2950, 0.0
      %v2968 = vpack.c.bf16 %v2953, %v2952
      %v2969 = vpack.c.bf16 %v2955, %v2954
      %v2970 = vpack.c.bf16 %v2957, %v2956
      %v2971 = vpack.c.bf16 %v2959, %v2958
      %v2972 = vpack.c.bf16 %v2961, %v2960
      %v2973 = vpack.c.bf16 %v2963, %v2962
      %v2974 = vpack.c.bf16 %v2965, %v2964
      %v2975 = vpack.c.bf16 %v2967, %v2966
      %v2976 = vperm.slane %v250, 0
      %v2985 = vunpack.c.l.b16 %v234
      %v2986 = vunpack.c.l.b16 %v235
      %v2987 = vunpack.c.l.b16 %v236
      %v2988 = vunpack.c.l.b16 %v237
      %v2989 = vunpack.c.l.b16 %v238
      %v2990 = vunpack.c.l.b16 %v239
      %v2991 = vunpack.c.l.b16 %v240
      %v2992 = vunpack.c.l.b16 %v241
      %v2993 = vpack.c.b16 %v2986, %v2985
      %v2994 = vpack.c.b16 %v2988, %v2987
      %v2995 = vpack.c.b16 %v2990, %v2989
      %v2996 = vpack.c.b16 %v2992, %v2991
      %vm3001 = vcmask 523264
      %v3003 = vsel %vm3001, %v2968, 0
      %v3006 = vsel %vm3001, %v2969, 0
      %v3009 = vsel %vm3001, %v2970, 0
      %v3012 = vsel %vm3001, %v2971, 0
      %v3015 = vsel %vm3001, %v2972, 0
      %v3018 = vsel %vm3001, %v2973, 0
      %v3021 = vsel %vm3001, %v2974, 0
      %v3024 = vsel %vm3001, %v2975, 0
      %3026 = vmatpush.bf16.msra.mxu0 0
      %3027 = vmatpush.bf16.msra.mxu0 0
      %3028 = vmatpush.bf16.msra.mxu0 0
      %3029 = vmatpush.bf16.msra.mxu0 0
      %3030 = vmatpush.bf16.msra.mxu0 %v2996
      %3031 = vmatpush.bf16.msra.mxu0 %v2995
      %3032 = vmatpush.bf16.msra.mxu0 %v2994
      %3033 = vmatpush.bf16.msra.mxu0 %v2993
      %3034 = vmatmul.bf16.gmra.mxu0 %v3003
      %v3035 = vpop.f32.mrf.mxu0
      %v3036 = vadd.f32 %v2976, %v3035
      %v3037 = vpop.f32.mrf.mxu0
      %v3038 = vadd.f32 %v2976, %v3037
      %3039 = vmatmul.bf16.gmra.mxu0 %v3006
      %v3040 = vpop.f32.mrf.mxu0
      %v3041 = vadd.f32 %v2976, %v3040
      %v3042 = vpop.f32.mrf.mxu0
      %v3043 = vadd.f32 %v2976, %v3042
      %3044 = vmatmul.bf16.gmra.mxu0 %v3009
      %v3045 = vpop.f32.mrf.mxu0
      %v3046 = vadd.f32 %v2976, %v3045
      %v3047 = vpop.f32.mrf.mxu0
      %v3048 = vadd.f32 %v2976, %v3047
      %3049 = vmatmul.bf16.gmra.mxu0 %v3012
      %v3050 = vpop.f32.mrf.mxu0
      %v3051 = vadd.f32 %v2976, %v3050
      %v3052 = vpop.f32.mrf.mxu0
      %v3053 = vadd.f32 %v2976, %v3052
      %3054 = vmatmul.bf16.gmra.mxu0 %v3015
      %v3055 = vpop.f32.mrf.mxu0
      %v3056 = vadd.f32 %v2976, %v3055
      %v3057 = vpop.f32.mrf.mxu0
      %v3058 = vadd.f32 %v2976, %v3057
      %3059 = vmatmul.bf16.gmra.mxu0 %v3018
      %v3060 = vpop.f32.mrf.mxu0
      %v3061 = vadd.f32 %v2976, %v3060
      %v3062 = vpop.f32.mrf.mxu0
      %v3063 = vadd.f32 %v2976, %v3062
      %3064 = vmatmul.bf16.gmra.mxu0 %v3021
      %v3065 = vpop.f32.mrf.mxu0
      %v3066 = vadd.f32 %v2976, %v3065
      %v3067 = vpop.f32.mrf.mxu0
      %v3068 = vadd.f32 %v2976, %v3067
      %3069 = vmatmul.bf16.gmra.mxu0 %v3024
      %v3070 = vpop.f32.mrf.mxu0
      %v3071 = vadd.f32 %v2976, %v3070
      %v3072 = vpop.f32.mrf.mxu0
      %v3073 = vadd.f32 %v2976, %v3072
      %3074 = vdwg.mxu0
      %v3075 = vadd.f32 %v2842, %v3036
      %v3076 = vadd.f32 %v2843, %v3038
      %v3077 = vadd.f32 %v2844, %v3041
      %v3078 = vadd.f32 %v2845, %v3043
      %v3079 = vadd.f32 %v2846, %v3046
      %v3080 = vadd.f32 %v2847, %v3048
      %v3081 = vadd.f32 %v2848, %v3051
      %v3082 = vadd.f32 %v2849, %v3053
      %v3083 = vadd.f32 %v2850, %v3056
      %v3084 = vadd.f32 %v2851, %v3058
      %v3085 = vadd.f32 %v2852, %v3061
      %v3086 = vadd.f32 %v2853, %v3063
      %v3087 = vadd.f32 %v2854, %v3066
      %v3088 = vadd.f32 %v2855, %v3068
      %v3089 = vadd.f32 %v2856, %v3071
      %v3090 = vadd.f32 %v2857, %v3073
      %v3091 = vsel %vm269, %v3075, 0.0
      %3092 = vadd.xlane.f32.xlu0 %v3091
      %v3093 = vpop.xlane.xlu0 %3092
      %v3094 = vsel %vm269, %v3076, 0.0
      %3095 = vadd.xlane.f32.xlu0 %v3094
      %v3096 = vpop.xlane.xlu0 %3095
      %v3097 = vsel %vm269, %v3077, 0.0
      %3098 = vadd.xlane.f32.xlu0 %v3097
      %v3099 = vpop.xlane.xlu0 %3098
      %v3100 = vsel %vm269, %v3078, 0.0
      %3101 = vadd.xlane.f32.xlu0 %v3100
      %v3102 = vpop.xlane.xlu0 %3101
      %v3103 = vsel %vm269, %v3079, 0.0
      %3104 = vadd.xlane.f32.xlu0 %v3103
      %v3105 = vpop.xlane.xlu0 %3104
      %v3106 = vsel %vm269, %v3080, 0.0
      %3107 = vadd.xlane.f32.xlu0 %v3106
      %v3108 = vpop.xlane.xlu0 %3107
      %v3109 = vsel %vm269, %v3081, 0.0
      %3110 = vadd.xlane.f32.xlu0 %v3109
      %v3111 = vpop.xlane.xlu0 %3110
      %v3112 = vsel %vm269, %v3082, 0.0
      %3113 = vadd.xlane.f32.xlu0 %v3112
      %v3114 = vpop.xlane.xlu0 %3113
      %v3115 = vsel %vm269, %v3083, 0.0
      %3116 = vadd.xlane.f32.xlu0 %v3115
      %v3117 = vpop.xlane.xlu0 %3116
      %v3118 = vsel %vm269, %v3084, 0.0
      %3119 = vadd.xlane.f32.xlu0 %v3118
      %v3120 = vpop.xlane.xlu0 %3119
      %v3121 = vsel %vm269, %v3085, 0.0
      %3122 = vadd.xlane.f32.xlu0 %v3121
      %v3123 = vpop.xlane.xlu0 %3122
      %v3124 = vsel %vm269, %v3086, 0.0
      %3125 = vadd.xlane.f32.xlu0 %v3124
      %v3126 = vpop.xlane.xlu0 %3125
      %v3127 = vsel %vm269, %v3087, 0.0
      %3128 = vadd.xlane.f32.xlu0 %v3127
      %v3129 = vpop.xlane.xlu0 %3128
      %v3130 = vsel %vm269, %v3088, 0.0
      %3131 = vadd.xlane.f32.xlu0 %v3130
      %v3132 = vpop.xlane.xlu0 %3131
      %v3133 = vsel %vm269, %v3089, 0.0
      %3134 = vadd.xlane.f32.xlu0 %v3133
      %v3135 = vpop.xlane.xlu0 %3134
      %v3136 = vsel %vm269, %v3090, 0.0
      %3137 = vadd.xlane.f32.xlu0 %v3136
      %v3138 = vpop.xlane.xlu0 %3137
      %v3139 = vmul.f32 %v3093, %v2519
      %v3140 = vmul.f32 %v3096, %v2519
      %v3141 = vmul.f32 %v3099, %v2519
      %v3142 = vmul.f32 %v3102, %v2519
      %v3143 = vmul.f32 %v3105, %v2519
      %v3144 = vmul.f32 %v3108, %v2519
      %v3145 = vmul.f32 %v3111, %v2519
      %v3146 = vmul.f32 %v3114, %v2519
      %v3147 = vmul.f32 %v3117, %v2519
      %v3148 = vmul.f32 %v3120, %v2519
      %v3149 = vmul.f32 %v3123, %v2519
      %v3150 = vmul.f32 %v3126, %v2519
      %v3151 = vmul.f32 %v3129, %v2519
      %v3152 = vmul.f32 %v3132, %v2519
      %v3153 = vmul.f32 %v3135, %v2519
      %v3154 = vmul.f32 %v3138, %v2519
      %v3155 = vsub.f32 %v3075, %v3139
      %v3156 = vsub.f32 %v3076, %v3140
      %v3157 = vsub.f32 %v3077, %v3141
      %v3158 = vsub.f32 %v3078, %v3142
      %v3159 = vsub.f32 %v3079, %v3143
      %v3160 = vsub.f32 %v3080, %v3144
      %v3161 = vsub.f32 %v3081, %v3145
      %v3162 = vsub.f32 %v3082, %v3146
      %v3163 = vsub.f32 %v3083, %v3147
      %v3164 = vsub.f32 %v3084, %v3148
      %v3165 = vsub.f32 %v3085, %v3149
      %v3166 = vsub.f32 %v3086, %v3150
      %v3167 = vsub.f32 %v3087, %v3151
      %v3168 = vsub.f32 %v3088, %v3152
      %v3169 = vsub.f32 %v3089, %v3153
      %v3170 = vsub.f32 %v3090, %v3154
      %v3171 = vmul.f32 %v3155, %v3155
      %v3172 = vmul.f32 %v3156, %v3156
      %v3173 = vmul.f32 %v3157, %v3157
      %v3174 = vmul.f32 %v3158, %v3158
      %v3175 = vmul.f32 %v3159, %v3159
      %v3176 = vmul.f32 %v3160, %v3160
      %v3177 = vmul.f32 %v3161, %v3161
      %v3178 = vmul.f32 %v3162, %v3162
      %v3179 = vmul.f32 %v3163, %v3163
      %v3180 = vmul.f32 %v3164, %v3164
      %v3181 = vmul.f32 %v3165, %v3165
      %v3182 = vmul.f32 %v3166, %v3166
      %v3183 = vmul.f32 %v3167, %v3167
      %v3184 = vmul.f32 %v3168, %v3168
      %v3185 = vmul.f32 %v3169, %v3169
      %v3186 = vmul.f32 %v3170, %v3170
      %v3187 = vsel %vm269, %v3171, 0.0
      %3188 = vadd.xlane.f32.xlu0 %v3187
      %v3189 = vpop.xlane.xlu0 %3188
      %v3190 = vsel %vm269, %v3172, 0.0
      %3191 = vadd.xlane.f32.xlu0 %v3190
      %v3192 = vpop.xlane.xlu0 %3191
      %v3193 = vsel %vm269, %v3173, 0.0
      %3194 = vadd.xlane.f32.xlu0 %v3193
      %v3195 = vpop.xlane.xlu0 %3194
      %v3196 = vsel %vm269, %v3174, 0.0
      %3197 = vadd.xlane.f32.xlu0 %v3196
      %v3198 = vpop.xlane.xlu0 %3197
      %v3199 = vsel %vm269, %v3175, 0.0
      %3200 = vadd.xlane.f32.xlu0 %v3199
      %v3201 = vpop.xlane.xlu0 %3200
      %v3202 = vsel %vm269, %v3176, 0.0
      %3203 = vadd.xlane.f32.xlu0 %v3202
      %v3204 = vpop.xlane.xlu0 %3203
      %v3205 = vsel %vm269, %v3177, 0.0
      %3206 = vadd.xlane.f32.xlu0 %v3205
      %v3207 = vpop.xlane.xlu0 %3206
      %v3208 = vsel %vm269, %v3178, 0.0
      %3209 = vadd.xlane.f32.xlu0 %v3208
      %v3210 = vpop.xlane.xlu0 %3209
      %v3211 = vsel %vm269, %v3179, 0.0
      %3212 = vadd.xlane.f32.xlu0 %v3211
      %v3213 = vpop.xlane.xlu0 %3212
      %v3214 = vsel %vm269, %v3180, 0.0
      %3215 = vadd.xlane.f32.xlu0 %v3214
      %v3216 = vpop.xlane.xlu0 %3215
      %v3217 = vsel %vm269, %v3181, 0.0
      %3218 = vadd.xlane.f32.xlu0 %v3217
      %v3219 = vpop.xlane.xlu0 %3218
      %v3220 = vsel %vm269, %v3182, 0.0
      %3221 = vadd.xlane.f32.xlu0 %v3220
      %v3222 = vpop.xlane.xlu0 %3221
      %v3223 = vsel %vm269, %v3183, 0.0
      %3224 = vadd.xlane.f32.xlu0 %v3223
      %v3225 = vpop.xlane.xlu0 %3224
      %v3226 = vsel %vm269, %v3184, 0.0
      %3227 = vadd.xlane.f32.xlu0 %v3226
      %v3228 = vpop.xlane.xlu0 %3227
      %v3229 = vsel %vm269, %v3185, 0.0
      %3230 = vadd.xlane.f32.xlu0 %v3229
      %v3231 = vpop.xlane.xlu0 %3230
      %v3232 = vsel %vm269, %v3186, 0.0
      %3233 = vadd.xlane.f32.xlu0 %v3232
      %v3234 = vpop.xlane.xlu0 %3233
      %v3235 = vmul.f32 %v3189, %v2519
      %v3236 = vmul.f32 %v3192, %v2519
      %v3237 = vmul.f32 %v3195, %v2519
      %v3238 = vmul.f32 %v3198, %v2519
      %v3239 = vmul.f32 %v3201, %v2519
      %v3240 = vmul.f32 %v3204, %v2519
      %v3241 = vmul.f32 %v3207, %v2519
      %v3242 = vmul.f32 %v3210, %v2519
      %v3243 = vmul.f32 %v3213, %v2519
      %v3244 = vmul.f32 %v3216, %v2519
      %v3245 = vmul.f32 %v3219, %v2519
      %v3246 = vmul.f32 %v3222, %v2519
      %v3247 = vmul.f32 %v3225, %v2519
      %v3248 = vmul.f32 %v3228, %v2519
      %v3249 = vmul.f32 %v3231, %v2519
      %v3250 = vmul.f32 %v3234, %v2519
      %v3251 = vadd.f32 %v3235, 1e-05
      %v3252 = vadd.f32 %v3236, 1e-05
      %v3253 = vadd.f32 %v3237, 1e-05
      %v3254 = vadd.f32 %v3238, 1e-05
      %v3255 = vadd.f32 %v3239, 1e-05
      %v3256 = vadd.f32 %v3240, 1e-05
      %v3257 = vadd.f32 %v3241, 1e-05
      %v3258 = vadd.f32 %v3242, 1e-05
      %v3259 = vadd.f32 %v3243, 1e-05
      %v3260 = vadd.f32 %v3244, 1e-05
      %v3261 = vadd.f32 %v3245, 1e-05
      %v3262 = vadd.f32 %v3246, 1e-05
      %v3263 = vadd.f32 %v3247, 1e-05
      %v3264 = vadd.f32 %v3248, 1e-05
      %v3265 = vadd.f32 %v3249, 1e-05
      %v3266 = vadd.f32 %v3250, 1e-05
      %v3267 = vrsqrt.pop %v3251
      %v3268 = vmul.f32 %v3267, %v3251
      %v3269 = vmul.f32 %v3268, %v3267
      %v3270 = vmul.f32 0.5, %v3269
      %v3271 = vsub.f32 1.5, %v3270
      %v3272 = vmul.f32 %v3267, %v3271
      %vm3273 = vweird.f32 %v3251
      %vm3274 = vweird.f32 %v3267
      %vm3275 = vmor %vm3273, %vm3274
      %v3276 = vsel %vm3275, %v3267, %v3272
      %v3277 = vrsqrt.pop %v3252
      %v3278 = vmul.f32 %v3277, %v3252
      %v3279 = vmul.f32 %v3278, %v3277
      %v3280 = vmul.f32 0.5, %v3279
      %v3281 = vsub.f32 1.5, %v3280
      %v3282 = vmul.f32 %v3277, %v3281
      %vm3283 = vweird.f32 %v3252
      %vm3284 = vweird.f32 %v3277
      %vm3285 = vmor %vm3283, %vm3284
      %v3286 = vsel %vm3285, %v3277, %v3282
      %v3287 = vrsqrt.pop %v3253
      %v3288 = vmul.f32 %v3287, %v3253
      %v3289 = vmul.f32 %v3288, %v3287
      %v3290 = vmul.f32 0.5, %v3289
      %v3291 = vsub.f32 1.5, %v3290
      %v3292 = vmul.f32 %v3287, %v3291
      %vm3293 = vweird.f32 %v3253
      %vm3294 = vweird.f32 %v3287
      %vm3295 = vmor %vm3293, %vm3294
      %v3296 = vsel %vm3295, %v3287, %v3292
      %v3297 = vrsqrt.pop %v3254
      %v3298 = vmul.f32 %v3297, %v3254
      %v3299 = vmul.f32 %v3298, %v3297
      %v3300 = vmul.f32 0.5, %v3299
      %v3301 = vsub.f32 1.5, %v3300
      %v3302 = vmul.f32 %v3297, %v3301
      %vm3303 = vweird.f32 %v3254
      %vm3304 = vweird.f32 %v3297
      %vm3305 = vmor %vm3303, %vm3304
      %v3306 = vsel %vm3305, %v3297, %v3302
      %v3307 = vrsqrt.pop %v3255
      %v3308 = vmul.f32 %v3307, %v3255
      %v3309 = vmul.f32 %v3308, %v3307
      %v3310 = vmul.f32 0.5, %v3309
      %v3311 = vsub.f32 1.5, %v3310
      %v3312 = vmul.f32 %v3307, %v3311
      %vm3313 = vweird.f32 %v3255
      %vm3314 = vweird.f32 %v3307
      %vm3315 = vmor %vm3313, %vm3314
      %v3316 = vsel %vm3315, %v3307, %v3312
      %v3317 = vrsqrt.pop %v3256
      %v3318 = vmul.f32 %v3317, %v3256
      %v3319 = vmul.f32 %v3318, %v3317
      %v3320 = vmul.f32 0.5, %v3319
      %v3321 = vsub.f32 1.5, %v3320
      %v3322 = vmul.f32 %v3317, %v3321
      %vm3323 = vweird.f32 %v3256
      %vm3324 = vweird.f32 %v3317
      %vm3325 = vmor %vm3323, %vm3324
      %v3326 = vsel %vm3325, %v3317, %v3322
      %v3327 = vrsqrt.pop %v3257
      %v3328 = vmul.f32 %v3327, %v3257
      %v3329 = vmul.f32 %v3328, %v3327
      %v3330 = vmul.f32 0.5, %v3329
      %v3331 = vsub.f32 1.5, %v3330
      %v3332 = vmul.f32 %v3327, %v3331
      %vm3333 = vweird.f32 %v3257
      %vm3334 = vweird.f32 %v3327
      %vm3335 = vmor %vm3333, %vm3334
      %v3336 = vsel %vm3335, %v3327, %v3332
      %v3337 = vrsqrt.pop %v3258
      %v3338 = vmul.f32 %v3337, %v3258
      %v3339 = vmul.f32 %v3338, %v3337
      %v3340 = vmul.f32 0.5, %v3339
      %v3341 = vsub.f32 1.5, %v3340
      %v3342 = vmul.f32 %v3337, %v3341
      %vm3343 = vweird.f32 %v3258
      %vm3344 = vweird.f32 %v3337
      %vm3345 = vmor %vm3343, %vm3344
      %v3346 = vsel %vm3345, %v3337, %v3342
      %v3347 = vrsqrt.pop %v3259
      %v3348 = vmul.f32 %v3347, %v3259
      %v3349 = vmul.f32 %v3348, %v3347
      %v3350 = vmul.f32 0.5, %v3349
      %v3351 = vsub.f32 1.5, %v3350
      %v3352 = vmul.f32 %v3347, %v3351
      %vm3353 = vweird.f32 %v3259
      %vm3354 = vweird.f32 %v3347
      %vm3355 = vmor %vm3353, %vm3354
      %v3356 = vsel %vm3355, %v3347, %v3352
      %v3357 = vrsqrt.pop %v3260
      %v3358 = vmul.f32 %v3357, %v3260
      %v3359 = vmul.f32 %v3358, %v3357
      %v3360 = vmul.f32 0.5, %v3359
      %v3361 = vsub.f32 1.5, %v3360
      %v3362 = vmul.f32 %v3357, %v3361
      %vm3363 = vweird.f32 %v3260
      %vm3364 = vweird.f32 %v3357
      %vm3365 = vmor %vm3363, %vm3364
      %v3366 = vsel %vm3365, %v3357, %v3362
      %v3367 = vrsqrt.pop %v3261
      %v3368 = vmul.f32 %v3367, %v3261
      %v3369 = vmul.f32 %v3368, %v3367
      %v3370 = vmul.f32 0.5, %v3369
      %v3371 = vsub.f32 1.5, %v3370
      %v3372 = vmul.f32 %v3367, %v3371
      %vm3373 = vweird.f32 %v3261
      %vm3374 = vweird.f32 %v3367
      %vm3375 = vmor %vm3373, %vm3374
      %v3376 = vsel %vm3375, %v3367, %v3372
      %v3377 = vrsqrt.pop %v3262
      %v3378 = vmul.f32 %v3377, %v3262
      %v3379 = vmul.f32 %v3378, %v3377
      %v3380 = vmul.f32 0.5, %v3379
      %v3381 = vsub.f32 1.5, %v3380
      %v3382 = vmul.f32 %v3377, %v3381
      %vm3383 = vweird.f32 %v3262
      %vm3384 = vweird.f32 %v3377
      %vm3385 = vmor %vm3383, %vm3384
      %v3386 = vsel %vm3385, %v3377, %v3382
      %v3387 = vrsqrt.pop %v3263
      %v3388 = vmul.f32 %v3387, %v3263
      %v3389 = vmul.f32 %v3388, %v3387
      %v3390 = vmul.f32 0.5, %v3389
      %v3391 = vsub.f32 1.5, %v3390
      %v3392 = vmul.f32 %v3387, %v3391
      %vm3393 = vweird.f32 %v3263
      %vm3394 = vweird.f32 %v3387
      %vm3395 = vmor %vm3393, %vm3394
      %v3396 = vsel %vm3395, %v3387, %v3392
      %v3397 = vrsqrt.pop %v3264
      %v3398 = vmul.f32 %v3397, %v3264
      %v3399 = vmul.f32 %v3398, %v3397
      %v3400 = vmul.f32 0.5, %v3399
      %v3401 = vsub.f32 1.5, %v3400
      %v3402 = vmul.f32 %v3397, %v3401
      %vm3403 = vweird.f32 %v3264
      %vm3404 = vweird.f32 %v3397
      %vm3405 = vmor %vm3403, %vm3404
      %v3406 = vsel %vm3405, %v3397, %v3402
      %v3407 = vrsqrt.pop %v3265
      %v3408 = vmul.f32 %v3407, %v3265
      %v3409 = vmul.f32 %v3408, %v3407
      %v3410 = vmul.f32 0.5, %v3409
      %v3411 = vsub.f32 1.5, %v3410
      %v3412 = vmul.f32 %v3407, %v3411
      %vm3413 = vweird.f32 %v3265
      %vm3414 = vweird.f32 %v3407
      %vm3415 = vmor %vm3413, %vm3414
      %v3416 = vsel %vm3415, %v3407, %v3412
      %v3417 = vrsqrt.pop %v3266
      %v3418 = vmul.f32 %v3417, %v3266
      %v3419 = vmul.f32 %v3418, %v3417
      %v3420 = vmul.f32 0.5, %v3419
      %v3421 = vsub.f32 1.5, %v3420
      %v3422 = vmul.f32 %v3417, %v3421
      %vm3423 = vweird.f32 %v3266
      %vm3424 = vweird.f32 %v3417
      %vm3425 = vmor %vm3423, %vm3424
      %v3426 = vsel %vm3425, %v3417, %v3422
      %v3427 = vmul.f32 %v3155, %v3276
      %v3428 = vmul.f32 %v3156, %v3286
      %v3429 = vmul.f32 %v3157, %v3296
      %v3430 = vmul.f32 %v3158, %v3306
      %v3431 = vmul.f32 %v3159, %v3316
      %v3432 = vmul.f32 %v3160, %v3326
      %v3433 = vmul.f32 %v3161, %v3336
      %v3434 = vmul.f32 %v3162, %v3346
      %v3435 = vmul.f32 %v3163, %v3356
      %v3436 = vmul.f32 %v3164, %v3366
      %v3437 = vmul.f32 %v3165, %v3376
      %v3438 = vmul.f32 %v3166, %v3386
      %v3439 = vmul.f32 %v3167, %v3396
      %v3440 = vmul.f32 %v3168, %v3406
      %v3441 = vmul.f32 %v3169, %v3416
      %v3442 = vmul.f32 %v3170, %v3426
      %v3443 = vperm.slane %v253, 0
      %v3444 = vmul.f32 %v3427, %v3443
      %v3445 = vmul.f32 %v3428, %v3443
      %v3446 = vmul.f32 %v3429, %v3443
      %v3447 = vmul.f32 %v3430, %v3443
      %v3448 = vmul.f32 %v3431, %v3443
      %v3449 = vmul.f32 %v3432, %v3443
      %v3450 = vmul.f32 %v3433, %v3443
      %v3451 = vmul.f32 %v3434, %v3443
      %v3452 = vmul.f32 %v3435, %v3443
      %v3453 = vmul.f32 %v3436, %v3443
      %v3454 = vmul.f32 %v3437, %v3443
      %v3455 = vmul.f32 %v3438, %v3443
      %v3456 = vmul.f32 %v3439, %v3443
      %v3457 = vmul.f32 %v3440, %v3443
      %v3458 = vmul.f32 %v3441, %v3443
      %v3459 = vmul.f32 %v3442, %v3443
      %v3460 = vperm.slane %v254, 0
      %v3461 = vadd.f32 %v3444, %v3460
      %v3462 = vadd.f32 %v3445, %v3460
      %v3463 = vadd.f32 %v3446, %v3460
      %v3464 = vadd.f32 %v3447, %v3460
      %v3465 = vadd.f32 %v3448, %v3460
      %v3466 = vadd.f32 %v3449, %v3460
      %v3467 = vadd.f32 %v3450, %v3460
      %v3468 = vadd.f32 %v3451, %v3460
      %v3469 = vadd.f32 %v3452, %v3460
      %v3470 = vadd.f32 %v3453, %v3460
      %v3471 = vadd.f32 %v3454, %v3460
      %v3472 = vadd.f32 %v3455, %v3460
      %v3473 = vadd.f32 %v3456, %v3460
      %v3474 = vadd.f32 %v3457, %v3460
      %v3475 = vadd.f32 %v3458, %v3460
      %v3476 = vadd.f32 %v3459, %v3460
      %v3477 = vpack.c.bf16 %v3462, %v3461
      %v3478 = vpack.c.bf16 %v3464, %v3463
      %v3479 = vpack.c.bf16 %v3466, %v3465
      %v3480 = vpack.c.bf16 %v3468, %v3467
      %v3481 = vpack.c.bf16 %v3470, %v3469
      %v3482 = vpack.c.bf16 %v3472, %v3471
      %v3483 = vpack.c.bf16 %v3474, %v3473
      %v3484 = vpack.c.bf16 %v3476, %v3475
      %v3485 = vperm.slane %v255, 0
      %v3490 = vunpack.c.l.b16 %v242
      %v3491 = vunpack.c.l.b16 %v243
      %v3492 = vunpack.c.l.b16 %v244
      %v3493 = vunpack.c.l.b16 %v245
      %v3494 = vpack.c.b16 %v3491, %v3490
      %v3495 = vpack.c.b16 %v3493, %v3492
      %v3499 = vsel %vm269, %v3477, 0
      %v3502 = vsel %vm269, %v3478, 0
      %v3505 = vsel %vm269, %v3479, 0
      %v3508 = vsel %vm269, %v3480, 0
      %v3511 = vsel %vm269, %v3481, 0
      %v3514 = vsel %vm269, %v3482, 0
      %v3517 = vsel %vm269, %v3483, 0
      %v3520 = vsel %vm269, %v3484, 0
      %3522 = vmatpush.bf16.msra.mxu0 0
      %3523 = vmatpush.bf16.msra.mxu0 0
      %3524 = vmatpush.bf16.msra.mxu0 0
      %3525 = vmatpush.bf16.msra.mxu0 0
      %3526 = vmatpush.bf16.msra.mxu0 0
      %3527 = vmatpush.bf16.msra.mxu0 0
      %3528 = vmatpush.bf16.msra.mxu0 %v3495
      %3529 = vmatpush.bf16.msra.mxu0 %v3494
      %3530 = vmatmul.bf16.gmra.mxu0 %v3499
      %v3531 = vpop.f32.mrf.mxu0
      %v3532 = vadd.f32 %v3485, %v3531
      %v3533 = vpop.f32.mrf.mxu0
      %v3534 = vadd.f32 %v3485, %v3533
      %3535 = vmatmul.bf16.gmra.mxu0 %v3502
      %v3536 = vpop.f32.mrf.mxu0
      %v3537 = vadd.f32 %v3485, %v3536
      %v3538 = vpop.f32.mrf.mxu0
      %v3539 = vadd.f32 %v3485, %v3538
      %3540 = vmatmul.bf16.gmra.mxu0 %v3505
      %v3541 = vpop.f32.mrf.mxu0
      %v3542 = vadd.f32 %v3485, %v3541
      %v3543 = vpop.f32.mrf.mxu0
      %v3544 = vadd.f32 %v3485, %v3543
      %3545 = vmatmul.bf16.gmra.mxu0 %v3508
      %v3546 = vpop.f32.mrf.mxu0
      %v3547 = vadd.f32 %v3485, %v3546
      %v3548 = vpop.f32.mrf.mxu0
      %v3549 = vadd.f32 %v3485, %v3548
      %3550 = vmatmul.bf16.gmra.mxu0 %v3511
      %v3551 = vpop.f32.mrf.mxu0
      %v3552 = vadd.f32 %v3485, %v3551
      %v3553 = vpop.f32.mrf.mxu0
      %v3554 = vadd.f32 %v3485, %v3553
      %3555 = vmatmul.bf16.gmra.mxu0 %v3514
      %v3556 = vpop.f32.mrf.mxu0
      %v3557 = vadd.f32 %v3485, %v3556
      %v3558 = vpop.f32.mrf.mxu0
      %v3559 = vadd.f32 %v3485, %v3558
      %3560 = vmatmul.bf16.gmra.mxu0 %v3517
      %v3561 = vpop.f32.mrf.mxu0
      %v3562 = vadd.f32 %v3485, %v3561
      %v3563 = vpop.f32.mrf.mxu0
      %v3564 = vadd.f32 %v3485, %v3563
      %3565 = vmatmul.bf16.gmra.mxu0 %v3520
      %v3566 = vpop.f32.mrf.mxu0
      %v3567 = vadd.f32 %v3485, %v3566
      %v3568 = vpop.f32.mrf.mxu0
      %v3569 = vadd.f32 %v3485, %v3568
      %3570 = vdwg.mxu0
      %3571 = vst [vmem:[%s199] sm:$0xff] %v3532
      %3572 = vst [vmem:[%s199 + $0x8] sm:$0xff] %v3534
      %3573 = vst [vmem:[%s199 + $0x10] sm:$0xff] %v3537
      %3574 = vst [vmem:[%s199 + $0x18] sm:$0xff] %v3539
      %3575 = vst [vmem:[%s199 + $0x20] sm:$0xff] %v3542
      %3576 = vst [vmem:[%s199 + $0x28] sm:$0xff] %v3544
      %3577 = vst [vmem:[%s199 + $0x30] sm:$0xff] %v3547
      %3578 = vst [vmem:[%s199 + $0x38] sm:$0xff] %v3549
      %3579 = vst [vmem:[%s199 + $0x40] sm:$0xff] %v3552
      %3580 = vst [vmem:[%s199 + $0x48] sm:$0xff] %v3554
      %3581 = vst [vmem:[%s199 + $0x50] sm:$0xff] %v3557
      %3582 = vst [vmem:[%s199 + $0x58] sm:$0xff] %v3559
      %3583 = vst [vmem:[%s199 + $0x60] sm:$0xff] %v3562
      %3584 = vst [vmem:[%s199 + $0x68] sm:$0xff] %v3564
      %3585 = vst [vmem:[%s199 + $0x70] sm:$0xff] %v3567
      %3586 = vst [vmem:[%s199 + $0x78] sm:$0xff] %v3569
      %s3587 = smul.u32 16, %s15
      %p3588 = scmp.lt.s32.totalorder %s3587, 31
      %s3589 = scalar_select %p3588, %s3587, 31
      %s3590 = smul.addr %s3589, 8
      %s3591 = scalar_lea.vmem %s4, %s3590
      // Predicated region
      $region37: #{efr_tx_forward.1} parent=35 // pred_check
        %p3592 = pneg %p122
      $region38: #{efr_tx_forward.1} parent=35 // pred_check_branch
        %3594 = sbr.rel (%p3592) target = $region40
      $region39: #{efr_tx_forward.1} parent=35 // pred_region
        %s3595 = smul.u32 16, %s15
      $region40: #{efr_tx_forward.1} parent=35 // pred_fallthru
        _
    $region36: #{efr_tx_forward.1} parent=5 // pred_fallthru
      _
    %p3596 = scmp.le.s32.totalorder 2, %s10
    // Predicated region
    $region41: #{efr_tx_forward.1} parent=5 // pred_check
      %p3597 = pneg %p3596
    $region42: #{efr_tx_forward.1} parent=5 // pred_check_branch
      %3599 = sbr.rel (%p3597) target = $region44
    $region43: #{efr_tx_forward.1} parent=5 // pred_region
      %s3600 = ssub.s32 %s10, 2
      // Predicated region
      $region45: #{efr_tx_forward.1} parent=43 // pred_check
        %p3601 = pneg %p128
      $region46: #{efr_tx_forward.1} parent=43 // pred_check_branch
        %3603 = sbr.rel (%p3601) target = $region48
      $region47: #{efr_tx_forward.1} parent=43 // pred_region
        %s3604 = smul.u32 16, %s16
        %p3605 = scmp.lt.s32.totalorder %s3604, 31
        %s3606 = scalar_select %p3605, %s3604, 31
        %s3607 = smul.addr %s3606, 8
        %s3608 = scalar_lea.vmem %s4, %s3607
      $region48: #{efr_tx_forward.1} parent=43 // pred_fallthru
        _
    $region44: #{efr_tx_forward.1} parent=5 // pred_fallthru
      _
  $region6: #{efr_tx_forward.1} parent=0 // loop_footer
    %s14 = sadd.s32 1, %s10
  $region7: #{efr_tx_forward.1} parent=0 // loop_footer_branch
    %9 = sbr.rel target = $region3
  $region8: #{efr_tx_forward.1} parent=0 // loop_exit
    _

</llo_original>
